<compile_context>
chip_gen: v7x
topology: tpu7x:2x2x1
jax: 0.10.0
libtpu: 0.0.40
codegen_flags: <defaults>
</compile_context>

<pallas_src>
import functools
import math

import jax
import jax.numpy as jnp
from jax.experimental import pallas as pl
from jax.experimental.pallas import tpu as pltpu


# ----------------------------------------------------------------------------
# Pallas kernel: fused stride-1 "valid" conv over the whole (padded) batch
# ----------------------------------------------------------------------------
def _fused_conv_kernel(x_ref, w_ref, b_ref, o_ref, cols_ref, *, kh, kw, oh, ow,
                       relu):
    # x_ref   : (N, oh+kh-1, ow+kw-1, C)  bf16   padded batch
    # w_ref   : (K, 128)                  bf16   one 128-lane tile of im2col weights
    # b_ref   : (1, 128)                  f32
    # o_ref   : (N*oh*ow, 128)            bf16   lane-dense output tile
    # cols_ref: (N, oh, ow, K)            bf16   in-VMEM im2col scratch
    n = x_ref.shape[0]
    c = x_ref.shape[3]
    k = kh * kw * c
    # One slab copy per tap (kh*kw stores total) -- no per-row copies.
    t = 0
    for i in range(kh):
        for j in range(kw):
            cols_ref[:, :, :, t * c:(t + 1) * c] = x_ref[:, i:i + oh, j:j + ow, :]
            t += 1
    cols = cols_ref[...].reshape(n * oh * ow, k)
    acc = jnp.dot(cols, w_ref[...], preferred_element_type=jnp.float32)
    acc = acc + b_ref[...]
    if relu:
        acc = jnp.maximum(acc, 0.0)
    o_ref[...] = acc.astype(o_ref.dtype)


def fused_conv(x, w_p, b_p, *, kh, kw, oh, ow, relu):
    """out[n,a,b,co] = sum_{i,j,c} w_p[(i*kw+j)*C + c, co] * x[n, a+i, b+j, c]
    (+ bias, optional ReLU), returned as (N, oh, ow, npad) bf16.

    x: (N, oh+kh-1, ow+kw-1, C); w_p: (kh*kw*C, npad) bf16 with npad % 128 == 0;
    b_p: (1, npad) f32.
    """
    N, Hp, Wp, C = x.shape
    K, npad = w_p.shape
    assert K == kh * kw * C and Hp == oh + kh - 1 and Wp == ow + kw - 1
    assert npad % 128 == 0
    M = N * oh * ow
    nct = npad // 128
    out = pl.pallas_call(
        functools.partial(_fused_conv_kernel, kh=kh, kw=kw, oh=oh, ow=ow,
                          relu=relu),
        out_shape=jax.ShapeDtypeStruct((M, npad), jnp.bfloat16),
        grid=(nct,),
        in_specs=[
            pl.BlockSpec((N, Hp, Wp, C), lambda j: (0, 0, 0, 0)),
            pl.BlockSpec((K, 128), lambda j: (0, j)),
            pl.BlockSpec((1, 128), lambda j: (0, j)),
        ],
        out_specs=pl.BlockSpec((M, 128), lambda j: (0, j)),
        scratch_shapes=[pltpu.VMEM((N, oh, ow, K), jnp.bfloat16)],
        compiler_params=pltpu.CompilerParams(
            dimension_semantics=("parallel",),
            vmem_limit_bytes=64 * 1024 * 1024),
    )(x.astype(jnp.bfloat16), w_p, b_p)
    return out.reshape(N, oh, ow, npad)


# ----------------------------------------------------------------------------
# Plain-JAX glue: padding / layout shuffles (pure data movement)
# ----------------------------------------------------------------------------
def tf_same_pad(x, k, s):
    """Conv2dSamePad: TF-style SAME zero padding (NHWC) for a k x k stride-s conv."""
    _, H, W, _ = x.shape
    oh, ow = math.ceil(H / s), math.ceil(W / s)
    ph = max((oh - 1) * s + k - H, 0)
    pw = max((ow - 1) * s + k - W, 0)
    return jnp.pad(x, ((0, 0), (ph // 2, ph - ph // 2),
                       (pw // 2, pw - pw // 2), (0, 0)))


def space_to_depth2(x, hc, wc):
    """Zero-pad x (N,H,W,C) to (N,2hc,2wc,C), rearrange to (N,hc,wc,4C).
    Channel layout: (p*2+q)*C + c with (p,q) the row/col parity."""
    N, H, W, C = x.shape
    x = jnp.pad(x, ((0, 0), (0, 2 * hc - H), (0, 2 * wc - W), (0, 0)))
    x = x.reshape(N, hc, 2, wc, 2, C).transpose(0, 1, 3, 2, 4, 5)
    return x.reshape(N, hc, wc, 4 * C)


def _decoder_geometry(k):
    """Per-phase input-offset range for the 4-phase deconv decomposition."""
    ct = (k - 2) // 2
    dvals = [(p + ct + t - (k - 1)) // 2
             for p in range(2) for t in range(k)
             if (p + ct + t - (k - 1)) % 2 == 0]
    d_lo, d_hi = min(dvals), max(dvals)
    return d_lo, d_hi, d_hi - d_lo + 1


# ----------------------------------------------------------------------------
# One-time weight packing (done at init time, OUTSIDE the jitted forward)
# ----------------------------------------------------------------------------
def _pad_to_lanes(w_mat, b_vec):
    K, ncols = w_mat.shape
    npad = ((ncols + 127) // 128) * 128
    w_p = jnp.pad(w_mat, ((0, 0), (0, npad - ncols))).astype(jnp.bfloat16)
    b_p = jnp.pad(b_vec, (0, npad - ncols)).astype(jnp.float32).reshape(1, npad)
    return w_p, b_p, ncols


def pack_encoder_weights(w_pt, b, k):
    """Conv2d(k, stride=2) weights -> stride-1 conv over space-to-depth input."""
    Cout, Cin = w_pt.shape[0], w_pt.shape[1]
    kk = (k + 1) // 2
    w_hwio = jnp.transpose(w_pt, (2, 3, 1, 0))                    # (k,k,Cin,Cout)
    w2 = jnp.zeros((kk, kk, 2, 2, Cin, Cout), jnp.float32)
    for u in range(kk):
        for v in range(kk):
            for p in range(2):
                for q in range(2):
                    if 2 * u + p < k and 2 * v + q < k:
                        w2 = w2.at[u, v, p, q].set(w_hwio[2 * u + p, 2 * v + q])
    w_mat = w2.reshape(kk * kk * 4 * Cin, Cout)
    return _pad_to_lanes(w_mat, b)


def pack_decoder_weights(w_pt, b, k):
    """ConvTranspose2d(k, stride=2)+SamePad -> stride-1 conv producing 4 phases."""
    Cin, Cout = w_pt.shape[0], w_pt.shape[1]
    w_hwio = jnp.transpose(w_pt, (2, 3, 0, 1))[::-1, ::-1, :, :]  # flipped (k,k,Cin,Cout)
    ct = (k - 2) // 2
    d_lo, _, kk = _decoder_geometry(k)
    w2 = jnp.zeros((kk, kk, Cin, 2, 2, Cout), jnp.float32)
    for u in range(kk):
        for v in range(kk):
            for p in range(2):
                for q in range(2):
                    th = 2 * (u + d_lo) + (k - 1) - ct - p
                    tw = 2 * (v + d_lo) + (k - 1) - ct - q
                    if 0 <= th < k and 0 <= tw < k:
                        w2 = w2.at[u, v, :, p, q, :].set(w_hwio[th, tw])
    w_mat = w2.reshape(kk * kk * Cin, 4 * Cout)
    return _pad_to_lanes(w_mat, jnp.tile(b, 4))


def pack_params(params, channels, kernels):
    packed = {"enc": [], "dec": []}
    for i in range(1, len(channels)):
        w, b = params["enc"][i - 1]
        packed["enc"].append(pack_encoder_weights(w, b, kernels[i - 1]))
    rk = list(reversed(kernels))
    for i in range(len(channels) - 1):
        w, b = params["dec"][i]
        packed["dec"].append(pack_decoder_weights(w, b, rk[i]))
    return packed


# ----------------------------------------------------------------------------
# Layers (data path only; weights are pre-packed)
# ----------------------------------------------------------------------------
def encoder_layer(x, w_p, b_p, ncols, k):
    """Conv2dSamePad(k,2) + Conv2d(k, stride=2) + ReLU.  x: NHWC bf16."""
    N, H, W, _ = x.shape
    oh, ow = math.ceil(H / 2), math.ceil(W / 2)
    kk = (k + 1) // 2
    xp = tf_same_pad(x, k, 2)
    xs = space_to_depth2(xp, oh + kk - 1, ow + kk - 1)
    y = fused_conv(xs, w_p, b_p, kh=kk, kw=kk, oh=oh, ow=ow, relu=True)
    return y[..., :ncols]


def decoder_layer(x, w_p, b_p, ncols, k):
    """ConvTranspose2d(k, stride=2) + ConvTranspose2dSamePad(k,2) + ReLU.
    Output (N, 2H, 2W, Cout) via 4-phase sub-pixel decomposition."""
    N, H, W, _ = x.shape
    cout = ncols // 4
    d_lo, d_hi, kk = _decoder_geometry(k)
    xp = jnp.pad(x, ((0, 0), (-d_lo, d_hi), (-d_lo, d_hi), (0, 0)))
    y = fused_conv(xp, w_p, b_p, kh=kk, kw=kk, oh=H, ow=W, relu=True)
    y = y[..., :ncols]
    # depth-to-space: channel (p*2+q)*Cout + c -> spatial (2a+p, 2b+q)
    y = y.reshape(N, H, W, 2, 2, cout).transpose(0, 1, 3, 2, 4, 5)
    return y.reshape(N, 2 * H, 2 * W, cout)


# ----------------------------------------------------------------------------
# ConvAE forward (Pallas path)
# ----------------------------------------------------------------------------
def conv_ae_forward(x_nchw, packed, channels, kernels, padding):
    x = jnp.transpose(x_nchw, (0, 2, 3, 1)).astype(jnp.bfloat16)  # NCHW -> NHWC
    for i in range(1, len(channels)):
        w_p, b_p, nc = packed["enc"][i - 1]
        x = encoder_layer(x, w_p, b_p, nc, kernels[i - 1])
    rk = list(reversed(kernels))
    rp = list(reversed(padding))
    for i in range(len(channels) - 1):
        w_p, b_p, nc = packed["dec"][i]
        x = decoder_layer(x, w_p, b_p, nc, rk[i])
        p = rp[i]
        if p:
            x = jnp.pad(x, ((0, 0), (p, p), (p, p), (0, 0)), mode="reflect")
    return jnp.transpose(x, (0, 3, 1, 2)).astype(jnp.float32)     # NHWC -> NCHW


# ----------------------------------------------------------------------------
# Pure-JAX f32 reference (mirrors the PyTorch module; no Pallas)
# ----------------------------------------------------------------------------
def _ref_conv2d(x, w_hwio, b, stride, relu):
    kh, kw, cin, cout = w_hwio.shape
    N, H, W, _ = x.shape
    OH = (H - kh) // stride + 1
    OW = (W - kw) // stride + 1
    cols = []
    for i in range(kh):
        for j in range(kw):
            cols.append(x[:, i:i + stride * (OH - 1) + 1:stride,
                          j:j + stride * (OW - 1) + 1:stride, :])
    cols = jnp.stack(cols, axis=3).reshape(N * OH * OW, kh * kw * cin)
    y = cols @ w_hwio.reshape(kh * kw * cin, cout) + b
    if relu:
        y = jnp.maximum(y, 0.0)
    return y.reshape(N, OH, OW, cout)


def _ref_dilate2(x):
    N, H, W, C = x.shape
    out = jnp.zeros((N, 2 * H - 1, 2 * W - 1, C), x.dtype)
    return out.at[:, ::2, ::2, :].set(x)


def conv_ae_forward_ref(x_nchw, params, channels, kernels, padding):
    x = jnp.transpose(x_nchw, (0, 2, 3, 1)).astype(jnp.float32)
    for i in range(1, len(channels)):
        k = kernels[i - 1]
        w_pt, b = params["enc"][i - 1]
        w_hwio = jnp.transpose(w_pt, (2, 3, 1, 0))
        x = _ref_conv2d(tf_same_pad(x, k, 2), w_hwio, b, 2, True)
    rk = list(reversed(kernels))
    rp = list(reversed(padding))
    for i in range(len(channels) - 1):
        k = rk[i]
        w_pt, b = params["dec"][i]
        w_hwio = jnp.transpose(w_pt, (2, 3, 0, 1))[::-1, ::-1, :, :]
        xd = jnp.pad(_ref_dilate2(x),
                     ((0, 0), (k - 1, k - 1), (k - 1, k - 1), (0, 0)))
        y = _ref_conv2d(xd, w_hwio, b, 1, True)
        ph = pw = k - 2
        pt_, pl_ = ph // 2, pw // 2
        H, W = y.shape[1], y.shape[2]
        y = y[:, pt_:H - (ph - pt_), pl_:W - (pw - pl_), :]
        p = rp[i]
        if p:
            y = jnp.pad(y, ((0, 0), (p, p), (p, p), (0, 0)), mode="reflect")
        x = y
    return jnp.transpose(x, (0, 3, 1, 2))


# ----------------------------------------------------------------------------
# Deterministic parameter init (PyTorch layer shapes)
# ----------------------------------------------------------------------------
def init_params(key, channels, kernels):
    params = {"enc": [], "dec": []}
    for i in range(1, len(channels)):
        k = kernels[i - 1]
        key, k1, k2 = jax.random.split(key, 3)
        w = 0.1 * jax.random.normal(k1, (channels[i], channels[i - 1], k, k),
                                    jnp.float32)
        b = 0.1 * jax.random.normal(k2, (channels[i],), jnp.float32)
        params["enc"].append((w, b))
    rc = list(reversed(channels))
    rk = list(reversed(kernels))
    for i in range(len(rc) - 1):
        k = rk[i]
        key, k1, k2 = jax.random.split(key, 3)
        w = 0.1 * jax.random.normal(k1, (rc[i], rc[i + 1], k, k), jnp.float32)
        b = 0.1 * jax.random.normal(k2, (rc[i + 1],), jnp.float32)
        params["dec"].append((w, b))
    return params


# ----------------------------------------------------------------------------
if __name__ == "__main__":
    channels = [1, 4, 8]
    kernels = [3, 3]
    padding = [1, 1]

    key = jax.random.PRNGKey(0)
    key, xkey = jax.random.split(key)
    x = jax.random.normal(xkey, (2, 1, 16, 16), jnp.float32)   # NCHW like PyTorch

    params = init_params(key, channels, kernels)
    packed = pack_params(params, channels, kernels)            # once, outside jit

    fwd = jax.jit(lambda inp: conv_ae_forward(inp, packed, channels, kernels,
                                              padding))
    y = fwd(x)
    jax.block_until_ready(y)

    # Validate against a pure-JAX f32 reference of the same module.
    y_ref = jax.jit(lambda inp: conv_ae_forward_ref(inp, params, channels,
                                                    kernels, padding))(x)
    jax.block_until_ready(y_ref)

    assert y.shape == y_ref.shape == (2, channels[0], 22, 22), y.shape
    max_err = float(jnp.max(jnp.abs(y - y_ref)))
    assert bool(jnp.allclose(y, y_ref, atol=3e-2, rtol=5e-2)), max_err

    print("KERNEL_OK")
</pallas_src>

<mosaic_0001>
module attributes {stable_mosaic.version = 11 : i64} {
  func.func @_fused_conv_kernel(%arg0: i32, %arg1: memref<2x9x9x4xbf16, #tpu.memory_space<vmem>>, %arg2: memref<16x128xbf16, #tpu.memory_space<vmem>>, %arg3: memref<1x128xf32, #tpu.memory_space<vmem>>, %arg4: memref<128x128xbf16, #tpu.memory_space<vmem>>, %arg5: memref<2x8x8x16xbf16, #tpu.memory_space<vmem>>) attributes {dimension_semantics = [#tpu.dimension_semantics<parallel>], iteration_bounds = array<i64: 1>, scalar_prefetch = 0 : i64, scratch_operands = 1 : i64, tpu.core_type = #tpu.core_type<tc>, window_params = [{pipeline_mode = #tpu.pipeline_mode<synchronous>, transform_indices = @transform_0, window_bounds = array<i64: 2, 9, 9, 4>}, {transform_indices = @transform_1, window_bounds = array<i64: 16, 128>}, {transform_indices = @transform_2, window_bounds = array<i64: 1, 128>}, {transform_indices = @transform_3, window_bounds = array<i64: 128, 128>}]} {
    %c0 = arith.constant 0 : index
    %c0_0 = arith.constant 0 : index
    %c0_1 = arith.constant 0 : index
    %c0_2 = arith.constant 0 : index
    %0 = vector.load %arg1[%c0, %c0_0, %c0_1, %c0_2] : memref<2x9x9x4xbf16, #tpu.memory_space<vmem>>, vector<2x8x8x4xbf16>
    %c0_3 = arith.constant 0 : index
    %c0_4 = arith.constant 0 : index
    %c0_5 = arith.constant 0 : index
    %c0_6 = arith.constant 0 : index
    %1 = vector.load %arg5[%c0_3, %c0_4, %c0_5, %c0_6] : memref<2x8x8x16xbf16, #tpu.memory_space<vmem>>, vector<2x8x8x4xbf16>
    tpu.vector_store %arg5[%c0_3, %c0_4, %c0_5, %c0_6], %0 {strides = array<i32>} : memref<2x8x8x16xbf16, #tpu.memory_space<vmem>>, vector<2x8x8x4xbf16>,
    %c0_7 = arith.constant 0 : index
    %c0_8 = arith.constant 0 : index
    %c1 = arith.constant 1 : index
    %c0_9 = arith.constant 0 : index
    %2 = vector.load %arg1[%c0_7, %c0_8, %c1, %c0_9] : memref<2x9x9x4xbf16, #tpu.memory_space<vmem>>, vector<2x8x8x4xbf16>
    %c0_10 = arith.constant 0 : index
    %c0_11 = arith.constant 0 : index
    %c0_12 = arith.constant 0 : index
    %c4 = arith.constant 4 : index
    %3 = vector.load %arg5[%c0_10, %c0_11, %c0_12, %c4] : memref<2x8x8x16xbf16, #tpu.memory_space<vmem>>, vector<2x8x8x4xbf16>
    tpu.vector_store %arg5[%c0_10, %c0_11, %c0_12, %c4], %2 {strides = array<i32>} : memref<2x8x8x16xbf16, #tpu.memory_space<vmem>>, vector<2x8x8x4xbf16>,
    %c0_13 = arith.constant 0 : index
    %c1_14 = arith.constant 1 : index
    %c0_15 = arith.constant 0 : index
    %c0_16 = arith.constant 0 : index
    %4 = vector.load %arg1[%c0_13, %c1_14, %c0_15, %c0_16] : memref<2x9x9x4xbf16, #tpu.memory_space<vmem>>, vector<2x8x8x4xbf16>
    %c0_17 = arith.constant 0 : index
    %c0_18 = arith.constant 0 : index
    %c0_19 = arith.constant 0 : index
    %c8 = arith.constant 8 : index
    %5 = vector.load %arg5[%c0_17, %c0_18, %c0_19, %c8] : memref<2x8x8x16xbf16, #tpu.memory_space<vmem>>, vector<2x8x8x4xbf16>
    tpu.vector_store %arg5[%c0_17, %c0_18, %c0_19, %c8], %4 {strides = array<i32>} : memref<2x8x8x16xbf16, #tpu.memory_space<vmem>>, vector<2x8x8x4xbf16>,
    %c0_20 = arith.constant 0 : index
    %c1_21 = arith.constant 1 : index
    %c1_22 = arith.constant 1 : index
    %c0_23 = arith.constant 0 : index
    %6 = vector.load %arg1[%c0_20, %c1_21, %c1_22, %c0_23] : memref<2x9x9x4xbf16, #tpu.memory_space<vmem>>, vector<2x8x8x4xbf16>
    %c0_24 = arith.constant 0 : index
    %c0_25 = arith.constant 0 : index
    %c0_26 = arith.constant 0 : index
    %c12 = arith.constant 12 : index
    %7 = vector.load %arg5[%c0_24, %c0_25, %c0_26, %c12] : memref<2x8x8x16xbf16, #tpu.memory_space<vmem>>, vector<2x8x8x4xbf16>
    tpu.vector_store %arg5[%c0_24, %c0_25, %c0_26, %c12], %6 {strides = array<i32>} : memref<2x8x8x16xbf16, #tpu.memory_space<vmem>>, vector<2x8x8x4xbf16>,
    %c0_27 = arith.constant 0 : index
    %c0_28 = arith.constant 0 : index
    %c0_29 = arith.constant 0 : index
    %c0_30 = arith.constant 0 : index
    %8 = vector.load %arg5[%c0_27, %c0_28, %c0_29, %c0_30] : memref<2x8x8x16xbf16, #tpu.memory_space<vmem>>, vector<2x8x8x16xbf16>
    %9 = vector.shape_cast %8 : vector<2x8x8x16xbf16> to vector<128x16xbf16>
    %c0_31 = arith.constant 0 : index
    %c0_32 = arith.constant 0 : index
    %10 = vector.load %arg2[%c0_31, %c0_32] : memref<16x128xbf16, #tpu.memory_space<vmem>>, vector<16x128xbf16>
    %cst = arith.constant dense<0.000000e+00> : vector<128x128xf32>
    %11 = tpu.matmul %9, %10, %cst {dimension_numbers = #tpu.dot_dimension_numbers<[1], [0], [0], [1], [0, 0, 1, 1], [], []>} : vector<128x16xbf16>, vector<16x128xbf16>, vector<128x128xf32> -> vector<128x128xf32>
    %c0_33 = arith.constant 0 : index
    %c0_34 = arith.constant 0 : index
    %12 = vector.load %arg3[%c0_33, %c0_34] : memref<1x128xf32, #tpu.memory_space<vmem>>, vector<1x128xf32>
    %13 = vector.broadcast %12 : vector<1x128xf32> to vector<128x128xf32>
    %14 = arith.addf %11, %13 : vector<128x128xf32>
    %cst_35 = arith.constant 0.000000e+00 : f32
    %15 = vector.broadcast %cst_35 : f32 to vector<128x128xf32>
    %16 = arith.maximumf %14, %15 : vector<128x128xf32>
    %17 = arith.truncf %16 : vector<128x128xf32> to vector<128x128xbf16>
    %c0_36 = arith.constant 0 : index
    %c0_37 = arith.constant 0 : index
    %18 = vector.load %arg4[%c0_36, %c0_37] : memref<128x128xbf16, #tpu.memory_space<vmem>>, vector<128x128xbf16>
    tpu.vector_store %arg4[%c0_36, %c0_37], %17 {strides = array<i32>} : memref<128x128xbf16, #tpu.memory_space<vmem>>, vector<128x128xbf16>,
    return
  }
  func.func @transform_0(%arg0: i32) -> (i32, i32, i32, i32) {
    %c0_i32 = arith.constant 0 : i32
    %c0_i32_0 = arith.constant 0 : i32
    %c0_i32_1 = arith.constant 0 : i32
    %c0_i32_2 = arith.constant 0 : i32
    %c0_i32_3 = arith.constant 0 : i32
    return %c0_i32, %c0_i32_0, %c0_i32_1, %c0_i32_2 : i32, i32, i32, i32
  }
  func.func @transform_1(%arg0: i32) -> (i32, i32) {
    %c0_i32 = arith.constant 0 : i32
    %c0_i32_0 = arith.constant 0 : i32
    return %c0_i32, %arg0 : i32, i32
  }
  func.func @transform_2(%arg0: i32) -> (i32, i32) {
    %c0_i32 = arith.constant 0 : i32
    %c0_i32_0 = arith.constant 0 : i32
    return %c0_i32, %arg0 : i32, i32
  }
  func.func @transform_3(%arg0: i32) -> (i32, i32) {
    %c0_i32 = arith.constant 0 : i32
    %c0_i32_0 = arith.constant 0 : i32
    return %c0_i32, %arg0 : i32, i32
  }
}

module attributes {stable_mosaic.version = 11 : i64} {
  func.func @_fused_conv_kernel(%arg0: i32, %arg1: memref<2x5x5x16xbf16, #tpu.memory_space<vmem>>, %arg2: memref<64x128xbf16, #tpu.memory_space<vmem>>, %arg3: memref<1x128xf32, #tpu.memory_space<vmem>>, %arg4: memref<32x128xbf16, #tpu.memory_space<vmem>>, %arg5: memref<2x4x4x64xbf16, #tpu.memory_space<vmem>>) attributes {dimension_semantics = [#tpu.dimension_semantics<parallel>], iteration_bounds = array<i64: 1>, scalar_prefetch = 0 : i64, scratch_operands = 1 : i64, tpu.core_type = #tpu.core_type<tc>, window_params = [{pipeline_mode = #tpu.pipeline_mode<synchronous>, transform_indices = @transform_0, window_bounds = array<i64: 2, 5, 5, 16>}, {transform_indices = @transform_1, window_bounds = array<i64: 64, 128>}, {transform_indices = @transform_2, window_bounds = array<i64: 1, 128>}, {transform_indices = @transform_3, window_bounds = array<i64: 32, 128>}]} {
    %c0 = arith.constant 0 : index
    %c0_0 = arith.constant 0 : index
    %c0_1 = arith.constant 0 : index
    %c0_2 = arith.constant 0 : index
    %0 = vector.load %arg1[%c0, %c0_0, %c0_1, %c0_2] : memref<2x5x5x16xbf16, #tpu.memory_space<vmem>>, vector<2x4x4x16xbf16>
    %c0_3 = arith.constant 0 : index
    %c0_4 = arith.constant 0 : index
    %c0_5 = arith.constant 0 : index
    %c0_6 = arith.constant 0 : index
    %1 = vector.load %arg5[%c0_3, %c0_4, %c0_5, %c0_6] : memref<2x4x4x64xbf16, #tpu.memory_space<vmem>>, vector<2x4x4x16xbf16>
    tpu.vector_store %arg5[%c0_3, %c0_4, %c0_5, %c0_6], %0 {strides = array<i32>} : memref<2x4x4x64xbf16, #tpu.memory_space<vmem>>, vector<2x4x4x16xbf16>,
    %c0_7 = arith.constant 0 : index
    %c0_8 = arith.constant 0 : index
    %c1 = arith.constant 1 : index
    %c0_9 = arith.constant 0 : index
    %2 = vector.load %arg1[%c0_7, %c0_8, %c1, %c0_9] : memref<2x5x5x16xbf16, #tpu.memory_space<vmem>>, vector<2x4x4x16xbf16>
    %c0_10 = arith.constant 0 : index
    %c0_11 = arith.constant 0 : index
    %c0_12 = arith.constant 0 : index
    %c16 = arith.constant 16 : index
    %3 = vector.load %arg5[%c0_10, %c0_11, %c0_12, %c16] : memref<2x4x4x64xbf16, #tpu.memory_space<vmem>>, vector<2x4x4x16xbf16>
    tpu.vector_store %arg5[%c0_10, %c0_11, %c0_12, %c16], %2 {strides = array<i32>} : memref<2x4x4x64xbf16, #tpu.memory_space<vmem>>, vector<2x4x4x16xbf16>,
    %c0_13 = arith.constant 0 : index
    %c1_14 = arith.constant 1 : index
    %c0_15 = arith.constant 0 : index
    %c0_16 = arith.constant 0 : index
    %4 = vector.load %arg1[%c0_13, %c1_14, %c0_15, %c0_16] : memref<2x5x5x16xbf16, #tpu.memory_space<vmem>>, vector<2x4x4x16xbf16>
    %c0_17 = arith.constant 0 : index
    %c0_18 = arith.constant 0 : index
    %c0_19 = arith.constant 0 : index
    %c32 = arith.constant 32 : index
    %5 = vector.load %arg5[%c0_17, %c0_18, %c0_19, %c32] : memref<2x4x4x64xbf16, #tpu.memory_space<vmem>>, vector<2x4x4x16xbf16>
    tpu.vector_store %arg5[%c0_17, %c0_18, %c0_19, %c32], %4 {strides = array<i32>} : memref<2x4x4x64xbf16, #tpu.memory_space<vmem>>, vector<2x4x4x16xbf16>,
    %c0_20 = arith.constant 0 : index
    %c1_21 = arith.constant 1 : index
    %c1_22 = arith.constant 1 : index
    %c0_23 = arith.constant 0 : index
    %6 = vector.load %arg1[%c0_20, %c1_21, %c1_22, %c0_23] : memref<2x5x5x16xbf16, #tpu.memory_space<vmem>>, vector<2x4x4x16xbf16>
    %c0_24 = arith.constant 0 : index
    %c0_25 = arith.constant 0 : index
    %c0_26 = arith.constant 0 : index
    %c48 = arith.constant 48 : index
    %7 = vector.load %arg5[%c0_24, %c0_25, %c0_26, %c48] : memref<2x4x4x64xbf16, #tpu.memory_space<vmem>>, vector<2x4x4x16xbf16>
    tpu.vector_store %arg5[%c0_24, %c0_25, %c0_26, %c48], %6 {strides = array<i32>} : memref<2x4x4x64xbf16, #tpu.memory_space<vmem>>, vector<2x4x4x16xbf16>,
    %c0_27 = arith.constant 0 : index
    %c0_28 = arith.constant 0 : index
    %c0_29 = arith.constant 0 : index
    %c0_30 = arith.constant 0 : index
    %8 = vector.load %arg5[%c0_27, %c0_28, %c0_29, %c0_30] : memref<2x4x4x64xbf16, #tpu.memory_space<vmem>>, vector<2x4x4x64xbf16>
    %9 = vector.shape_cast %8 : vector<2x4x4x64xbf16> to vector<32x64xbf16>
    %c0_31 = arith.constant 0 : index
    %c0_32 = arith.constant 0 : index
    %10 = vector.load %arg2[%c0_31, %c0_32] : memref<64x128xbf16, #tpu.memory_space<vmem>>, vector<64x128xbf16>
    %cst = arith.constant dense<0.000000e+00> : vector<32x128xf32>
    %11 = tpu.matmul %9, %10, %cst {dimension_numbers = #tpu.dot_dimension_numbers<[1], [0], [0], [1], [0, 0, 1, 1], [], []>} : vector<32x64xbf16>, vector<64x128xbf16>, vector<32x128xf32> -> vector<32x128xf32>
    %c0_33 = arith.constant 0 : index
    %c0_34 = arith.constant 0 : index
    %12 = vector.load %arg3[%c0_33, %c0_34] : memref<1x128xf32, #tpu.memory_space<vmem>>, vector<1x128xf32>
    %13 = vector.broadcast %12 : vector<1x128xf32> to vector<32x128xf32>
    %14 = arith.addf %11, %13 : vector<32x128xf32>
    %cst_35 = arith.constant 0.000000e+00 : f32
    %15 = vector.broadcast %cst_35 : f32 to vector<32x128xf32>
    %16 = arith.maximumf %14, %15 : vector<32x128xf32>
    %17 = arith.truncf %16 : vector<32x128xf32> to vector<32x128xbf16>
    %c0_36 = arith.constant 0 : index
    %c0_37 = arith.constant 0 : index
    %18 = vector.load %arg4[%c0_36, %c0_37] : memref<32x128xbf16, #tpu.memory_space<vmem>>, vector<32x128xbf16>
    tpu.vector_store %arg4[%c0_36, %c0_37], %17 {strides = array<i32>} : memref<32x128xbf16, #tpu.memory_space<vmem>>, vector<32x128xbf16>,
    return
  }
  func.func @transform_0(%arg0: i32) -> (i32, i32, i32, i32) {
    %c0_i32 = arith.constant 0 : i32
    %c0_i32_0 = arith.constant 0 : i32
    %c0_i32_1 = arith.constant 0 : i32
    %c0_i32_2 = arith.constant 0 : i32
    %c0_i32_3 = arith.constant 0 : i32
    return %c0_i32, %c0_i32_0, %c0_i32_1, %c0_i32_2 : i32, i32, i32, i32
  }
  func.func @transform_1(%arg0: i32) -> (i32, i32) {
    %c0_i32 = arith.constant 0 : i32
    %c0_i32_0 = arith.constant 0 : i32
    return %c0_i32, %arg0 : i32, i32
  }
  func.func @transform_2(%arg0: i32) -> (i32, i32) {
    %c0_i32 = arith.constant 0 : i32
    %c0_i32_0 = arith.constant 0 : i32
    return %c0_i32, %arg0 : i32, i32
  }
  func.func @transform_3(%arg0: i32) -> (i32, i32) {
    %c0_i32 = arith.constant 0 : i32
    %c0_i32_0 = arith.constant 0 : i32
    return %c0_i32, %arg0 : i32, i32
  }
}

module attributes {stable_mosaic.version = 11 : i64} {
  func.func @_fused_conv_kernel(%arg0: i32, %arg1: memref<2x5x5x8xbf16, #tpu.memory_space<vmem>>, %arg2: memref<32x128xbf16, #tpu.memory_space<vmem>>, %arg3: memref<1x128xf32, #tpu.memory_space<vmem>>, %arg4: memref<32x128xbf16, #tpu.memory_space<vmem>>, %arg5: memref<2x4x4x32xbf16, #tpu.memory_space<vmem>>) attributes {dimension_semantics = [#tpu.dimension_semantics<parallel>], iteration_bounds = array<i64: 1>, scalar_prefetch = 0 : i64, scratch_operands = 1 : i64, tpu.core_type = #tpu.core_type<tc>, window_params = [{pipeline_mode = #tpu.pipeline_mode<synchronous>, transform_indices = @transform_0, window_bounds = array<i64: 2, 5, 5, 8>}, {transform_indices = @transform_1, window_bounds = array<i64: 32, 128>}, {transform_indices = @transform_2, window_bounds = array<i64: 1, 128>}, {transform_indices = @transform_3, window_bounds = array<i64: 32, 128>}]} {
    %c0 = arith.constant 0 : index
    %c0_0 = arith.constant 0 : index
    %c0_1 = arith.constant 0 : index
    %c0_2 = arith.constant 0 : index
    %0 = vector.load %arg1[%c0, %c0_0, %c0_1, %c0_2] : memref<2x5x5x8xbf16, #tpu.memory_space<vmem>>, vector<2x4x4x8xbf16>
    %c0_3 = arith.constant 0 : index
    %c0_4 = arith.constant 0 : index
    %c0_5 = arith.constant 0 : index
    %c0_6 = arith.constant 0 : index
    %1 = vector.load %arg5[%c0_3, %c0_4, %c0_5, %c0_6] : memref<2x4x4x32xbf16, #tpu.memory_space<vmem>>, vector<2x4x4x8xbf16>
    tpu.vector_store %arg5[%c0_3, %c0_4, %c0_5, %c0_6], %0 {strides = array<i32>} : memref<2x4x4x32xbf16, #tpu.memory_space<vmem>>, vector<2x4x4x8xbf16>,
    %c0_7 = arith.constant 0 : index
    %c0_8 = arith.constant 0 : index
    %c1 = arith.constant 1 : index
    %c0_9 = arith.constant 0 : index
    %2 = vector.load %arg1[%c0_7, %c0_8, %c1, %c0_9] : memref<2x5x5x8xbf16, #tpu.memory_space<vmem>>, vector<2x4x4x8xbf16>
    %c0_10 = arith.constant 0 : index
    %c0_11 = arith.constant 0 : index
    %c0_12 = arith.constant 0 : index
    %c8 = arith.constant 8 : index
    %3 = vector.load %arg5[%c0_10, %c0_11, %c0_12, %c8] : memref<2x4x4x32xbf16, #tpu.memory_space<vmem>>, vector<2x4x4x8xbf16>
    tpu.vector_store %arg5[%c0_10, %c0_11, %c0_12, %c8], %2 {strides = array<i32>} : memref<2x4x4x32xbf16, #tpu.memory_space<vmem>>, vector<2x4x4x8xbf16>,
    %c0_13 = arith.constant 0 : index
    %c1_14 = arith.constant 1 : index
    %c0_15 = arith.constant 0 : index
    %c0_16 = arith.constant 0 : index
    %4 = vector.load %arg1[%c0_13, %c1_14, %c0_15, %c0_16] : memref<2x5x5x8xbf16, #tpu.memory_space<vmem>>, vector<2x4x4x8xbf16>
    %c0_17 = arith.constant 0 : index
    %c0_18 = arith.constant 0 : index
    %c0_19 = arith.constant 0 : index
    %c16 = arith.constant 16 : index
    %5 = vector.load %arg5[%c0_17, %c0_18, %c0_19, %c16] : memref<2x4x4x32xbf16, #tpu.memory_space<vmem>>, vector<2x4x4x8xbf16>
    tpu.vector_store %arg5[%c0_17, %c0_18, %c0_19, %c16], %4 {strides = array<i32>} : memref<2x4x4x32xbf16, #tpu.memory_space<vmem>>, vector<2x4x4x8xbf16>,
    %c0_20 = arith.constant 0 : index
    %c1_21 = arith.constant 1 : index
    %c1_22 = arith.constant 1 : index
    %c0_23 = arith.constant 0 : index
    %6 = vector.load %arg1[%c0_20, %c1_21, %c1_22, %c0_23] : memref<2x5x5x8xbf16, #tpu.memory_space<vmem>>, vector<2x4x4x8xbf16>
    %c0_24 = arith.constant 0 : index
    %c0_25 = arith.constant 0 : index
    %c0_26 = arith.constant 0 : index
    %c24 = arith.constant 24 : index
    %7 = vector.load %arg5[%c0_24, %c0_25, %c0_26, %c24] : memref<2x4x4x32xbf16, #tpu.memory_space<vmem>>, vector<2x4x4x8xbf16>
    tpu.vector_store %arg5[%c0_24, %c0_25, %c0_26, %c24], %6 {strides = array<i32>} : memref<2x4x4x32xbf16, #tpu.memory_space<vmem>>, vector<2x4x4x8xbf16>,
    %c0_27 = arith.constant 0 : index
    %c0_28 = arith.constant 0 : index
    %c0_29 = arith.constant 0 : index
    %c0_30 = arith.constant 0 : index
    %8 = vector.load %arg5[%c0_27, %c0_28, %c0_29, %c0_30] : memref<2x4x4x32xbf16, #tpu.memory_space<vmem>>, vector<2x4x4x32xbf16>
    %9 = vector.shape_cast %8 : vector<2x4x4x32xbf16> to vector<32x32xbf16>
    %c0_31 = arith.constant 0 : index
    %c0_32 = arith.constant 0 : index
    %10 = vector.load %arg2[%c0_31, %c0_32] : memref<32x128xbf16, #tpu.memory_space<vmem>>, vector<32x128xbf16>
    %cst = arith.constant dense<0.000000e+00> : vector<32x128xf32>
    %11 = tpu.matmul %9, %10, %cst {dimension_numbers = #tpu.dot_dimension_numbers<[1], [0], [0], [1], [0, 0, 1, 1], [], []>} : vector<32x32xbf16>, vector<32x128xbf16>, vector<32x128xf32> -> vector<32x128xf32>
    %c0_33 = arith.constant 0 : index
    %c0_34 = arith.constant 0 : index
    %12 = vector.load %arg3[%c0_33, %c0_34] : memref<1x128xf32, #tpu.memory_space<vmem>>, vector<1x128xf32>
    %13 = vector.broadcast %12 : vector<1x128xf32> to vector<32x128xf32>
    %14 = arith.addf %11, %13 : vector<32x128xf32>
    %cst_35 = arith.constant 0.000000e+00 : f32
    %15 = vector.broadcast %cst_35 : f32 to vector<32x128xf32>
    %16 = arith.maximumf %14, %15 : vector<32x128xf32>
    %17 = arith.truncf %16 : vector<32x128xf32> to vector<32x128xbf16>
    %c0_36 = arith.constant 0 : index
    %c0_37 = arith.constant 0 : index
    %18 = vector.load %arg4[%c0_36, %c0_37] : memref<32x128xbf16, #tpu.memory_space<vmem>>, vector<32x128xbf16>
    tpu.vector_store %arg4[%c0_36, %c0_37], %17 {strides = array<i32>} : memref<32x128xbf16, #tpu.memory_space<vmem>>, vector<32x128xbf16>,
    return
  }
  func.func @transform_0(%arg0: i32) -> (i32, i32, i32, i32) {
    %c0_i32 = arith.constant 0 : i32
    %c0_i32_0 = arith.constant 0 : i32
    %c0_i32_1 = arith.constant 0 : i32
    %c0_i32_2 = arith.constant 0 : i32
    %c0_i32_3 = arith.constant 0 : i32
    return %c0_i32, %c0_i32_0, %c0_i32_1, %c0_i32_2 : i32, i32, i32, i32
  }
  func.func @transform_1(%arg0: i32) -> (i32, i32) {
    %c0_i32 = arith.constant 0 : i32
    %c0_i32_0 = arith.constant 0 : i32
    return %c0_i32, %arg0 : i32, i32
  }
  func.func @transform_2(%arg0: i32) -> (i32, i32) {
    %c0_i32 = arith.constant 0 : i32
    %c0_i32_0 = arith.constant 0 : i32
    return %c0_i32, %arg0 : i32, i32
  }
  func.func @transform_3(%arg0: i32) -> (i32, i32) {
    %c0_i32 = arith.constant 0 : i32
    %c0_i32_0 = arith.constant 0 : i32
    return %c0_i32, %arg0 : i32, i32
  }
}

module attributes {stable_mosaic.version = 11 : i64} {
  func.func @_fused_conv_kernel(%arg0: i32, %arg1: memref<2x11x11x4xbf16, #tpu.memory_space<vmem>>, %arg2: memref<16x128xbf16, #tpu.memory_space<vmem>>, %arg3: memref<1x128xf32, #tpu.memory_space<vmem>>, %arg4: memref<200x128xbf16, #tpu.memory_space<vmem>>, %arg5: memref<2x10x10x16xbf16, #tpu.memory_space<vmem>>) attributes {dimension_semantics = [#tpu.dimension_semantics<parallel>], iteration_bounds = array<i64: 1>, scalar_prefetch = 0 : i64, scratch_operands = 1 : i64, tpu.core_type = #tpu.core_type<tc>, window_params = [{pipeline_mode = #tpu.pipeline_mode<synchronous>, transform_indices = @transform_0, window_bounds = array<i64: 2, 11, 11, 4>}, {transform_indices = @transform_1, window_bounds = array<i64: 16, 128>}, {transform_indices = @transform_2, window_bounds = array<i64: 1, 128>}, {transform_indices = @transform_3, window_bounds = array<i64: 200, 128>}]} {
    %c0 = arith.constant 0 : index
    %c0_0 = arith.constant 0 : index
    %c0_1 = arith.constant 0 : index
    %c0_2 = arith.constant 0 : index
    %0 = vector.load %arg1[%c0, %c0_0, %c0_1, %c0_2] : memref<2x11x11x4xbf16, #tpu.memory_space<vmem>>, vector<2x10x10x4xbf16>
    %c0_3 = arith.constant 0 : index
    %c0_4 = arith.constant 0 : index
    %c0_5 = arith.constant 0 : index
    %c0_6 = arith.constant 0 : index
    %1 = vector.load %arg5[%c0_3, %c0_4, %c0_5, %c0_6] : memref<2x10x10x16xbf16, #tpu.memory_space<vmem>>, vector<2x10x10x4xbf16>
    tpu.vector_store %arg5[%c0_3, %c0_4, %c0_5, %c0_6], %0 {strides = array<i32>} : memref<2x10x10x16xbf16, #tpu.memory_space<vmem>>, vector<2x10x10x4xbf16>,
    %c0_7 = arith.constant 0 : index
    %c0_8 = arith.constant 0 : index
    %c1 = arith.constant 1 : index
    %c0_9 = arith.constant 0 : index
    %2 = vector.load %arg1[%c0_7, %c0_8, %c1, %c0_9] : memref<2x11x11x4xbf16, #tpu.memory_space<vmem>>, vector<2x10x10x4xbf16>
    %c0_10 = arith.constant 0 : index
    %c0_11 = arith.constant 0 : index
    %c0_12 = arith.constant 0 : index
    %c4 = arith.constant 4 : index
    %3 = vector.load %arg5[%c0_10, %c0_11, %c0_12, %c4] : memref<2x10x10x16xbf16, #tpu.memory_space<vmem>>, vector<2x10x10x4xbf16>
    tpu.vector_store %arg5[%c0_10, %c0_11, %c0_12, %c4], %2 {strides = array<i32>} : memref<2x10x10x16xbf16, #tpu.memory_space<vmem>>, vector<2x10x10x4xbf16>,
    %c0_13 = arith.constant 0 : index
    %c1_14 = arith.constant 1 : index
    %c0_15 = arith.constant 0 : index
    %c0_16 = arith.constant 0 : index
    %4 = vector.load %arg1[%c0_13, %c1_14, %c0_15, %c0_16] : memref<2x11x11x4xbf16, #tpu.memory_space<vmem>>, vector<2x10x10x4xbf16>
    %c0_17 = arith.constant 0 : index
    %c0_18 = arith.constant 0 : index
    %c0_19 = arith.constant 0 : index
    %c8 = arith.constant 8 : index
    %5 = vector.load %arg5[%c0_17, %c0_18, %c0_19, %c8] : memref<2x10x10x16xbf16, #tpu.memory_space<vmem>>, vector<2x10x10x4xbf16>
    tpu.vector_store %arg5[%c0_17, %c0_18, %c0_19, %c8], %4 {strides = array<i32>} : memref<2x10x10x16xbf16, #tpu.memory_space<vmem>>, vector<2x10x10x4xbf16>,
    %c0_20 = arith.constant 0 : index
    %c1_21 = arith.constant 1 : index
    %c1_22 = arith.constant 1 : index
    %c0_23 = arith.constant 0 : index
    %6 = vector.load %arg1[%c0_20, %c1_21, %c1_22, %c0_23] : memref<2x11x11x4xbf16, #tpu.memory_space<vmem>>, vector<2x10x10x4xbf16>
    %c0_24 = arith.constant 0 : index
    %c0_25 = arith.constant 0 : index
    %c0_26 = arith.constant 0 : index
    %c12 = arith.constant 12 : index
    %7 = vector.load %arg5[%c0_24, %c0_25, %c0_26, %c12] : memref<2x10x10x16xbf16, #tpu.memory_space<vmem>>, vector<2x10x10x4xbf16>
    tpu.vector_store %arg5[%c0_24, %c0_25, %c0_26, %c12], %6 {strides = array<i32>} : memref<2x10x10x16xbf16, #tpu.memory_space<vmem>>, vector<2x10x10x4xbf16>,
    %c0_27 = arith.constant 0 : index
    %c0_28 = arith.constant 0 : index
    %c0_29 = arith.constant 0 : index
    %c0_30 = arith.constant 0 : index
    %8 = vector.load %arg5[%c0_27, %c0_28, %c0_29, %c0_30] : memref<2x10x10x16xbf16, #tpu.memory_space<vmem>>, vector<2x10x10x16xbf16>
    %9 = vector.shape_cast %8 : vector<2x10x10x16xbf16> to vector<200x16xbf16>
    %c0_31 = arith.constant 0 : index
    %c0_32 = arith.constant 0 : index
    %10 = vector.load %arg2[%c0_31, %c0_32] : memref<16x128xbf16, #tpu.memory_space<vmem>>, vector<16x128xbf16>
    %cst = arith.constant dense<0.000000e+00> : vector<200x128xf32>
    %11 = tpu.matmul %9, %10, %cst {dimension_numbers = #tpu.dot_dimension_numbers<[1], [0], [0], [1], [0, 0, 1, 1], [], []>} : vector<200x16xbf16>, vector<16x128xbf16>, vector<200x128xf32> -> vector<200x128xf32>
    %c0_33 = arith.constant 0 : index
    %c0_34 = arith.constant 0 : index
    %12 = vector.load %arg3[%c0_33, %c0_34] : memref<1x128xf32, #tpu.memory_space<vmem>>, vector<1x128xf32>
    %13 = vector.broadcast %12 : vector<1x128xf32> to vector<200x128xf32>
    %14 = arith.addf %11, %13 : vector<200x128xf32>
    %cst_35 = arith.constant 0.000000e+00 : f32
    %15 = vector.broadcast %cst_35 : f32 to vector<200x128xf32>
    %16 = arith.maximumf %14, %15 : vector<200x128xf32>
    %17 = arith.truncf %16 : vector<200x128xf32> to vector<200x128xbf16>
    %c0_36 = arith.constant 0 : index
    %c0_37 = arith.constant 0 : index
    %18 = vector.load %arg4[%c0_36, %c0_37] : memref<200x128xbf16, #tpu.memory_space<vmem>>, vector<200x128xbf16>
    tpu.vector_store %arg4[%c0_36, %c0_37], %17 {strides = array<i32>} : memref<200x128xbf16, #tpu.memory_space<vmem>>, vector<200x128xbf16>,
    return
  }
  func.func @transform_0(%arg0: i32) -> (i32, i32, i32, i32) {
    %c0_i32 = arith.constant 0 : i32
    %c0_i32_0 = arith.constant 0 : i32
    %c0_i32_1 = arith.constant 0 : i32
    %c0_i32_2 = arith.constant 0 : i32
    %c0_i32_3 = arith.constant 0 : i32
    return %c0_i32, %c0_i32_0, %c0_i32_1, %c0_i32_2 : i32, i32, i32, i32
  }
  func.func @transform_1(%arg0: i32) -> (i32, i32) {
    %c0_i32 = arith.constant 0 : i32
    %c0_i32_0 = arith.constant 0 : i32
    return %c0_i32, %arg0 : i32, i32
  }
  func.func @transform_2(%arg0: i32) -> (i32, i32) {
    %c0_i32 = arith.constant 0 : i32
    %c0_i32_0 = arith.constant 0 : i32
    return %c0_i32, %arg0 : i32, i32
  }
  func.func @transform_3(%arg0: i32) -> (i32, i32) {
    %c0_i32 = arith.constant 0 : i32
    %c0_i32_0 = arith.constant 0 : i32
    return %c0_i32, %arg0 : i32, i32
  }
}

</mosaic_0001>

<llo_original>
// kernel: _lambda_.5
$region0: #{_lambda_.5}
  #allocation0 [shape = 'u32[]', space=smem, size = 0x4, offset = 0x4, fixed_abs, tag = 'smem constant byte address 0x4 - core index']
  #allocation1 [shape = 'u32[144,128]{1,0:T(1,128)}', space=vmem, size = 0x12000, scoped, tag = 'internal scratch']
  #allocation2 [shape = 'bf16[2,4,4,64]{3,2,1,0:T(4,128)(2,1)}', space=vmem, size = 0x2000, scoped, tag = 'scratch operand']
  %s0 = inlined_call_operand.hbm [shape: bf16[2,5,5,16], index: 0, kind: input, shape index: {}]
  %s1 = inlined_call_operand.hbm [shape: bf16[64,128], index: 1, kind: input, shape index: {}]
  %s2 = inlined_call_operand.hbm [shape: f32[1,128], index: 2, kind: input, shape index: {}]
  %s3 = inlined_call_operand.hbm [shape: bf16[32,128], index: 3, kind: output, shape index: {}]
  %s4 = sld [smem:[#allocation0]]
  $region34: #{_lambda_.5} parent=0
    _
  %s6 = ssub.s32 1, %s4
  %s7 = scalar_select 0, %s6, %s4
  $region1: #{_lambda_.5} parent=0
    #allocation3 [shape = 'u8[20480]{0}', space=vmem, size = 0x5000, scoped, tag = 'input window, operand 0, single buffered']
    #allocation4 [shape = 's32[1]{0}', space=sflag, size = 0x4, scoped, tag = 'scoped memory for _lambda_.5']
    #allocation5 [shape = 's32[1]{0}', space=sflag, size = 0x4, scoped, tag = 'scoped memory for _lambda_.5']
    #allocation6 [shape = 'u8[16384]{0}', space=vmem, size = 0x4000, scoped, tag = 'input window, operand 1, single buffered']
    #allocation7 [shape = 's32[1]{0}', space=sflag, size = 0x4, scoped, tag = 'scoped memory for _lambda_.5']
    #allocation8 [shape = 'u8[512]{0}', space=vmem, size = 0x400, scoped, tag = 'input window, operand 2, single buffered']
    #allocation9 [shape = 'u8[8192]{0}', space=vmem, size = 0x2000, scoped, tag = 'output window, operand 0, single buffered']
    %8 = vsyncpa [#allocation4], 0
    %9 = vsyncpa [#allocation7], 0
    %10 = vsyncpa [#allocation5], 0
    // Predicated region
    $region2: #{_lambda_.5} parent=1 // pred_check
      _
    $region3: #{_lambda_.5} parent=1 // pred_check_branch
      %12 = sbr.rel (0) target = $region5
    $region4: #{_lambda_.5} parent=1 // pred_region
      %s14 = ssub.s32 640, 640
      %15 = vsyncadd [#allocation4], %s14
      %s16 = sshll.u32 [#allocation3], 4
      %s17 = int_to_ptr.vmem [resolvable:$true] %s16
      %22 = dma.hbm_to_vmem [thread:$0]  %s0, 640, %s17, [#allocation4], 64, 64, 4
    $region5: #{_lambda_.5} parent=1 // pred_fallthru
      _
    // Predicated region
    $region6: #{_lambda_.5} parent=1 // pred_check
      _
    $region7: #{_lambda_.5} parent=1 // pred_check_branch
      %24 = sbr.rel (0) target = $region9
    $region8: #{_lambda_.5} parent=1 // pred_region
      %s26 = ssub.s32 512, 512
      %27 = vsyncadd [#allocation7], %s26
      %s28 = sshll.u32 [#allocation6], 4
      %s29 = int_to_ptr.vmem [resolvable:$true] %s28
      %34 = dma.hbm_to_vmem [thread:$0]  %s1, 512, %s29, [#allocation7], 64, 64, 4
    $region9: #{_lambda_.5} parent=1 // pred_fallthru
      _
    // Predicated region
    $region10: #{_lambda_.5} parent=1 // pred_check
      _
    $region11: #{_lambda_.5} parent=1 // pred_check_branch
      %36 = sbr.rel (0) target = $region13
    $region12: #{_lambda_.5} parent=1 // pred_region
      %s38 = ssub.s32 16, 16
      %39 = vsyncadd [#allocation7], %s38
      %s41 = sshll.u32 [#allocation8], 4
      %s42 = int_to_ptr.vmem [resolvable:$true] %s41
      %44 = dma.hbm_to_vmem [thread:$0]  %s2, 16, %s42, [#allocation7]
    $region13: #{_lambda_.5} parent=1 // pred_fallthru
      _
    // Predicated region
    $region14: #{_lambda_.5} parent=1 // pred_check
      _
    $region15: #{_lambda_.5} parent=1 // pred_check_branch
      %46 = sbr.rel (0) target = $region17
    $region16: #{_lambda_.5} parent=1 // pred_region
      %47 = dma.done [#allocation4], 640
    $region17: #{_lambda_.5} parent=1 // pred_fallthru
      _
    // Predicated region
    $region18: #{_lambda_.5} parent=1 // pred_check
      _
    $region19: #{_lambda_.5} parent=1 // pred_check_branch
      %49 = sbr.rel (0) target = $region21
    $region20: #{_lambda_.5} parent=1 // pred_region
      %50 = dma.done [#allocation7], 512
    $region21: #{_lambda_.5} parent=1 // pred_fallthru
      _
    // Predicated region
    $region22: #{_lambda_.5} parent=1 // pred_check
      _
    $region23: #{_lambda_.5} parent=1 // pred_check_branch
      %52 = sbr.rel (0) target = $region25
    $region24: #{_lambda_.5} parent=1 // pred_region
      %53 = dma.done [#allocation7], 16
    $region25: #{_lambda_.5} parent=1 // pred_fallthru
      _
    %v55 = vld [vmem:[#allocation3] sm:$0x3]
    %v56 = vld [vmem:[#allocation3 + $0x4] sm:$0x3]
    %v57 = vld [vmem:[#allocation3 + $0x8] sm:$0x3]
    %v58 = vld [vmem:[#allocation3 + $0xc] sm:$0x3]
    %v59 = vld [vmem:[#allocation3 + $0x14] sm:$0x3]
    %v60 = vld [vmem:[#allocation3 + $0x18] sm:$0x3]
    %v61 = vld [vmem:[#allocation3 + $0x1c] sm:$0x3]
    %v62 = vld [vmem:[#allocation3 + $0x20] sm:$0x3]
    %vm63 = vcmask 123904
    %64 = vst.msk [vmem:[#allocation2] sm:$0x3] %vm63, %v55
    %65 = vst.msk [vmem:[#allocation2 + $0x2] sm:$0x3] %vm63, %v56
    %66 = vst.msk [vmem:[#allocation2 + $0x4] sm:$0x3] %vm63, %v57
    %67 = vst.msk [vmem:[#allocation2 + $0x6] sm:$0x3] %vm63, %v58
    %68 = vst.msk [vmem:[#allocation2 + $0x8] sm:$0x3] %vm63, %v59
    %69 = vst.msk [vmem:[#allocation2 + $0xa] sm:$0x3] %vm63, %v60
    %70 = vst.msk [vmem:[#allocation2 + $0xc] sm:$0x3] %vm63, %v61
    %71 = vst.msk [vmem:[#allocation2 + $0xe] sm:$0x3] %vm63, %v62
    %v72 = vld [vmem:[#allocation3] sm:$0x7]
    %v73 = vld [vmem:[#allocation3 + $0x4] sm:$0x7]
    %v74 = vld [vmem:[#allocation3 + $0x8] sm:$0x7]
    %v75 = vld [vmem:[#allocation3 + $0xc] sm:$0x7]
    %v76 = vld [vmem:[#allocation3 + $0x14] sm:$0x7]
    %v77 = vld [vmem:[#allocation3 + $0x18] sm:$0x7]
    %v78 = vld [vmem:[#allocation3 + $0x1c] sm:$0x7]
    %v79 = vld [vmem:[#allocation3 + $0x20] sm:$0x7]
    %v89 = vunpack.c.l.s4 1983009808
    %v90 = vunpack.c.0.s8 %v89
    %v91 = vlaneseq
    %v92 = vshrl.u32 %v91, 7
    %v93 = vsub.s32 %v90, %v92
    %v94 = vrot.slane %v72, %v93
    %v95 = vcombine.high %v94, %v94
    %v97 = vunpack.c.l.s4 1983009808
    %v98 = vunpack.c.0.s8 %v97
    %v99 = vlaneseq
    %v100 = vshrl.u32 %v99, 7
    %v101 = vsub.s32 %v98, %v100
    %v102 = vrot.slane %v73, %v101
    %v103 = vcombine.high %v102, %v102
    %v105 = vunpack.c.l.s4 1983009808
    %v106 = vunpack.c.0.s8 %v105
    %v107 = vlaneseq
    %v108 = vshrl.u32 %v107, 7
    %v109 = vsub.s32 %v106, %v108
    %v110 = vrot.slane %v74, %v109
    %v111 = vcombine.high %v110, %v110
    %v113 = vunpack.c.l.s4 1983009808
    %v114 = vunpack.c.0.s8 %v113
    %v115 = vlaneseq
    %v116 = vshrl.u32 %v115, 7
    %v117 = vsub.s32 %v114, %v116
    %v118 = vrot.slane %v75, %v117
    %v119 = vcombine.high %v118, %v118
    %v121 = vunpack.c.l.s4 1983009808
    %v122 = vunpack.c.0.s8 %v121
    %v123 = vlaneseq
    %v124 = vshrl.u32 %v123, 7
    %v125 = vsub.s32 %v122, %v124
    %v126 = vrot.slane %v76, %v125
    %v127 = vcombine.high %v126, %v126
    %v129 = vunpack.c.l.s4 1983009808
    %v130 = vunpack.c.0.s8 %v129
    %v131 = vlaneseq
    %v132 = vshrl.u32 %v131, 7
    %v133 = vsub.s32 %v130, %v132
    %v134 = vrot.slane %v77, %v133
    %v135 = vcombine.high %v134, %v134
    %v137 = vunpack.c.l.s4 1983009808
    %v138 = vunpack.c.0.s8 %v137
    %v139 = vlaneseq
    %v140 = vshrl.u32 %v139, 7
    %v141 = vsub.s32 %v138, %v140
    %v142 = vrot.slane %v78, %v141
    %v143 = vcombine.high %v142, %v142
    %v145 = vunpack.c.l.s4 1983009808
    %v146 = vunpack.c.0.s8 %v145
    %v147 = vlaneseq
    %v148 = vshrl.u32 %v147, 7
    %v149 = vsub.s32 %v146, %v148
    %v150 = vrot.slane %v79, %v149
    %v151 = vcombine.high %v150, %v150
    %vm152 = vsmask.f32 1280
    %vm153 = vsmask.f32 3336
    %vm154 = vmor %vm152, %vm153
    %vm155 = vsmask.f32 5392
    %vm156 = vmor %vm154, %vm155
    %vm157 = vsmask.f32 7448
    %vm158 = vmor %vm156, %vm157
    %v160 = vshrl.u32 %v94, 16
    %v162 = vrot.slane %v160, 6
    %v163 = vshll.u32 %v94, 16
    %v165 = vrot.slane %v163, 7
    %v166 = vor.u32 %v162, %v165
    %v167 = vrot.slane %v166, 2
    %v169 = vshll.u32 %v95, 16
    %v171 = vrot.slane %v169, 7
    %v172 = vsel %vm158, %v167, %v171
    %v174 = vshrl.u32 %v102, 16
    %v176 = vrot.slane %v174, 6
    %v177 = vshll.u32 %v102, 16
    %v179 = vrot.slane %v177, 7
    %v180 = vor.u32 %v176, %v179
    %v181 = vrot.slane %v180, 2
    %v183 = vshll.u32 %v103, 16
    %v185 = vrot.slane %v183, 7
    %v186 = vsel %vm158, %v181, %v185
    %v188 = vshrl.u32 %v110, 16
    %v190 = vrot.slane %v188, 6
    %v191 = vshll.u32 %v110, 16
    %v193 = vrot.slane %v191, 7
    %v194 = vor.u32 %v190, %v193
    %v195 = vrot.slane %v194, 2
    %v197 = vshll.u32 %v111, 16
    %v199 = vrot.slane %v197, 7
    %v200 = vsel %vm158, %v195, %v199
    %v202 = vshrl.u32 %v118, 16
    %v204 = vrot.slane %v202, 6
    %v205 = vshll.u32 %v118, 16
    %v207 = vrot.slane %v205, 7
    %v208 = vor.u32 %v204, %v207
    %v209 = vrot.slane %v208, 2
    %v211 = vshll.u32 %v119, 16
    %v213 = vrot.slane %v211, 7
    %v214 = vsel %vm158, %v209, %v213
    %v216 = vshrl.u32 %v126, 16
    %v218 = vrot.slane %v216, 6
    %v219 = vshll.u32 %v126, 16
    %v221 = vrot.slane %v219, 7
    %v222 = vor.u32 %v218, %v221
    %v223 = vrot.slane %v222, 2
    %v225 = vshll.u32 %v127, 16
    %v227 = vrot.slane %v225, 7
    %v228 = vsel %vm158, %v223, %v227
    %v230 = vshrl.u32 %v134, 16
    %v232 = vrot.slane %v230, 6
    %v233 = vshll.u32 %v134, 16
    %v235 = vrot.slane %v233, 7
    %v236 = vor.u32 %v232, %v235
    %v237 = vrot.slane %v236, 2
    %v239 = vshll.u32 %v135, 16
    %v241 = vrot.slane %v239, 7
    %v242 = vsel %vm158, %v237, %v241
    %v244 = vshrl.u32 %v142, 16
    %v246 = vrot.slane %v244, 6
    %v247 = vshll.u32 %v142, 16
    %v249 = vrot.slane %v247, 7
    %v250 = vor.u32 %v246, %v249
    %v251 = vrot.slane %v250, 2
    %v253 = vshll.u32 %v143, 16
    %v255 = vrot.slane %v253, 7
    %v256 = vsel %vm158, %v251, %v255
    %v258 = vshrl.u32 %v150, 16
    %v260 = vrot.slane %v258, 6
    %v261 = vshll.u32 %v150, 16
    %v263 = vrot.slane %v261, 7
    %v264 = vor.u32 %v260, %v263
    %v265 = vrot.slane %v264, 2
    %v267 = vshll.u32 %v151, 16
    %v269 = vrot.slane %v267, 7
    %v270 = vsel %vm158, %v265, %v269
    %271 = vrot.lane.b32.xlu0 %v172, 16
    %v272 = vpop.permute.xlu0 %271
    %273 = vrot.lane.b32.xlu0 %v186, 16
    %v274 = vpop.permute.xlu0 %273
    %275 = vrot.lane.b32.xlu0 %v200, 16
    %v276 = vpop.permute.xlu0 %275
    %277 = vrot.lane.b32.xlu0 %v214, 16
    %v278 = vpop.permute.xlu0 %277
    %279 = vrot.lane.b32.xlu0 %v228, 16
    %v280 = vpop.permute.xlu0 %279
    %281 = vrot.lane.b32.xlu0 %v242, 16
    %v282 = vpop.permute.xlu0 %281
    %283 = vrot.lane.b32.xlu0 %v256, 16
    %v284 = vpop.permute.xlu0 %283
    %285 = vrot.lane.b32.xlu0 %v270, 16
    %v286 = vpop.permute.xlu0 %285
    %vm295 = vcmask 255104
    %296 = vst.msk [vmem:[#allocation2] sm:$0x3] %vm295, %v272
    %297 = vst.msk [vmem:[#allocation2 + $0x2] sm:$0x3] %vm295, %v274
    %298 = vst.msk [vmem:[#allocation2 + $0x4] sm:$0x3] %vm295, %v276
    %299 = vst.msk [vmem:[#allocation2 + $0x6] sm:$0x3] %vm295, %v278
    %300 = vst.msk [vmem:[#allocation2 + $0x8] sm:$0x3] %vm295, %v280
    %301 = vst.msk [vmem:[#allocation2 + $0xa] sm:$0x3] %vm295, %v282
    %302 = vst.msk [vmem:[#allocation2 + $0xc] sm:$0x3] %vm295, %v284
    %303 = vst.msk [vmem:[#allocation2 + $0xe] sm:$0x3] %vm295, %v286
    %s304 = scalar_lea.vmem [#allocation3], 4
    %v305 = vld [vmem:[%s304] sm:$0x3]
    %v306 = vld [vmem:[%s304 + $0x4] sm:$0x3]
    %v307 = vld [vmem:[%s304 + $0x8] sm:$0x3]
    %v308 = vld [vmem:[%s304 + $0xc] sm:$0x3]
    %v309 = vld [vmem:[%s304 + $0x14] sm:$0x3]
    %v310 = vld [vmem:[%s304 + $0x18] sm:$0x3]
    %v311 = vld [vmem:[%s304 + $0x1c] sm:$0x3]
    %v312 = vld [vmem:[%s304 + $0x20] sm:$0x3]
    %v322 = vunpack.c.l.s4 1983009808
    %v323 = vunpack.c.0.s8 %v322
    %v324 = vlaneseq
    %v325 = vshrl.u32 %v324, 7
    %v326 = vsub.s32 %v323, %v325
    %v327 = vrot.slane %v305, %v326
    %v329 = vunpack.c.l.s4 1983009808
    %v330 = vunpack.c.0.s8 %v329
    %v331 = vlaneseq
    %v332 = vshrl.u32 %v331, 7
    %v333 = vsub.s32 %v330, %v332
    %v334 = vrot.slane %v306, %v333
    %v336 = vunpack.c.l.s4 1983009808
    %v337 = vunpack.c.0.s8 %v336
    %v338 = vlaneseq
    %v339 = vshrl.u32 %v338, 7
    %v340 = vsub.s32 %v337, %v339
    %v341 = vrot.slane %v307, %v340
    %v343 = vunpack.c.l.s4 1983009808
    %v344 = vunpack.c.0.s8 %v343
    %v345 = vlaneseq
    %v346 = vshrl.u32 %v345, 7
    %v347 = vsub.s32 %v344, %v346
    %v348 = vrot.slane %v308, %v347
    %v350 = vunpack.c.l.s4 1983009808
    %v351 = vunpack.c.0.s8 %v350
    %v352 = vlaneseq
    %v353 = vshrl.u32 %v352, 7
    %v354 = vsub.s32 %v351, %v353
    %v355 = vrot.slane %v309, %v354
    %v357 = vunpack.c.l.s4 1983009808
    %v358 = vunpack.c.0.s8 %v357
    %v359 = vlaneseq
    %v360 = vshrl.u32 %v359, 7
    %v361 = vsub.s32 %v358, %v360
    %v362 = vrot.slane %v310, %v361
    %v364 = vunpack.c.l.s4 1983009808
    %v365 = vunpack.c.0.s8 %v364
    %v366 = vlaneseq
    %v367 = vshrl.u32 %v366, 7
    %v368 = vsub.s32 %v365, %v367
    %v369 = vrot.slane %v311, %v368
    %v371 = vunpack.c.l.s4 1983009808
    %v372 = vunpack.c.0.s8 %v371
    %v373 = vlaneseq
    %v374 = vshrl.u32 %v373, 7
    %v375 = vsub.s32 %v372, %v374
    %v376 = vrot.slane %v312, %v375
    %377 = vrot.lane.b32.xlu0 %v327, 32
    %v378 = vpop.permute.xlu0 %377
    %379 = vrot.lane.b32.xlu0 %v334, 32
    %v380 = vpop.permute.xlu0 %379
    %381 = vrot.lane.b32.xlu0 %v341, 32
    %v382 = vpop.permute.xlu0 %381
    %383 = vrot.lane.b32.xlu0 %v348, 32
    %v384 = vpop.permute.xlu0 %383
    %385 = vrot.lane.b32.xlu0 %v355, 32
    %v386 = vpop.permute.xlu0 %385
    %387 = vrot.lane.b32.xlu0 %v362, 32
    %v388 = vpop.permute.xlu0 %387
    %389 = vrot.lane.b32.xlu0 %v369, 32
    %v390 = vpop.permute.xlu0 %389
    %391 = vrot.lane.b32.xlu0 %v376, 32
    %v392 = vpop.permute.xlu0 %391
    %vm401 = vcmask 386304
    %402 = vst.msk [vmem:[#allocation2] sm:$0x3] %vm401, %v378
    %403 = vst.msk [vmem:[#allocation2 + $0x2] sm:$0x3] %vm401, %v380
    %404 = vst.msk [vmem:[#allocation2 + $0x4] sm:$0x3] %vm401, %v382
    %405 = vst.msk [vmem:[#allocation2 + $0x6] sm:$0x3] %vm401, %v384
    %406 = vst.msk [vmem:[#allocation2 + $0x8] sm:$0x3] %vm401, %v386
    %407 = vst.msk [vmem:[#allocation2 + $0xa] sm:$0x3] %vm401, %v388
    %408 = vst.msk [vmem:[#allocation2 + $0xc] sm:$0x3] %vm401, %v390
    %409 = vst.msk [vmem:[#allocation2 + $0xe] sm:$0x3] %vm401, %v392
    %v410 = vld [vmem:[%s304] sm:$0x7]
    %v411 = vld [vmem:[%s304 + $0x4] sm:$0x7]
    %v412 = vld [vmem:[%s304 + $0x8] sm:$0x7]
    %v413 = vld [vmem:[%s304 + $0xc] sm:$0x7]
    %v414 = vld [vmem:[%s304 + $0x14] sm:$0x7]
    %v415 = vld [vmem:[%s304 + $0x18] sm:$0x7]
    %v416 = vld [vmem:[%s304 + $0x1c] sm:$0x7]
    %v417 = vld [vmem:[%s304 + $0x20] sm:$0x7]
    %v427 = vunpack.c.l.s4 1983009808
    %v428 = vunpack.c.0.s8 %v427
    %v429 = vlaneseq
    %v430 = vshrl.u32 %v429, 7
    %v431 = vsub.s32 %v428, %v430
    %v432 = vrot.slane %v410, %v431
    %v433 = vcombine.high %v432, %v432
    %v435 = vunpack.c.l.s4 1983009808
    %v436 = vunpack.c.0.s8 %v435
    %v437 = vlaneseq
    %v438 = vshrl.u32 %v437, 7
    %v439 = vsub.s32 %v436, %v438
    %v440 = vrot.slane %v411, %v439
    %v441 = vcombine.high %v440, %v440
    %v443 = vunpack.c.l.s4 1983009808
    %v444 = vunpack.c.0.s8 %v443
    %v445 = vlaneseq
    %v446 = vshrl.u32 %v445, 7
    %v447 = vsub.s32 %v444, %v446
    %v448 = vrot.slane %v412, %v447
    %v449 = vcombine.high %v448, %v448
    %v451 = vunpack.c.l.s4 1983009808
    %v452 = vunpack.c.0.s8 %v451
    %v453 = vlaneseq
    %v454 = vshrl.u32 %v453, 7
    %v455 = vsub.s32 %v452, %v454
    %v456 = vrot.slane %v413, %v455
    %v457 = vcombine.high %v456, %v456
    %v459 = vunpack.c.l.s4 1983009808
    %v460 = vunpack.c.0.s8 %v459
    %v461 = vlaneseq
    %v462 = vshrl.u32 %v461, 7
    %v463 = vsub.s32 %v460, %v462
    %v464 = vrot.slane %v414, %v463
    %v465 = vcombine.high %v464, %v464
    %v467 = vunpack.c.l.s4 1983009808
    %v468 = vunpack.c.0.s8 %v467
    %v469 = vlaneseq
    %v470 = vshrl.u32 %v469, 7
    %v471 = vsub.s32 %v468, %v470
    %v472 = vrot.slane %v415, %v471
    %v473 = vcombine.high %v472, %v472
    %v475 = vunpack.c.l.s4 1983009808
    %v476 = vunpack.c.0.s8 %v475
    %v477 = vlaneseq
    %v478 = vshrl.u32 %v477, 7
    %v479 = vsub.s32 %v476, %v478
    %v480 = vrot.slane %v416, %v479
    %v481 = vcombine.high %v480, %v480
    %v483 = vunpack.c.l.s4 1983009808
    %v484 = vunpack.c.0.s8 %v483
    %v485 = vlaneseq
    %v486 = vshrl.u32 %v485, 7
    %v487 = vsub.s32 %v484, %v486
    %v488 = vrot.slane %v417, %v487
    %v489 = vcombine.high %v488, %v488
    %v491 = vshrl.u32 %v432, 16
    %v493 = vrot.slane %v491, 6
    %v494 = vshll.u32 %v432, 16
    %v496 = vrot.slane %v494, 7
    %v497 = vor.u32 %v493, %v496
    %v498 = vrot.slane %v497, 2
    %v500 = vshll.u32 %v433, 16
    %v502 = vrot.slane %v500, 7
    %v503 = vsel %vm158, %v498, %v502
    %v505 = vshrl.u32 %v440, 16
    %v507 = vrot.slane %v505, 6
    %v508 = vshll.u32 %v440, 16
    %v510 = vrot.slane %v508, 7
    %v511 = vor.u32 %v507, %v510
    %v512 = vrot.slane %v511, 2
    %v514 = vshll.u32 %v441, 16
    %v516 = vrot.slane %v514, 7
    %v517 = vsel %vm158, %v512, %v516
    %v519 = vshrl.u32 %v448, 16
    %v521 = vrot.slane %v519, 6
    %v522 = vshll.u32 %v448, 16
    %v524 = vrot.slane %v522, 7
    %v525 = vor.u32 %v521, %v524
    %v526 = vrot.slane %v525, 2
    %v528 = vshll.u32 %v449, 16
    %v530 = vrot.slane %v528, 7
    %v531 = vsel %vm158, %v526, %v530
    %v533 = vshrl.u32 %v456, 16
    %v535 = vrot.slane %v533, 6
    %v536 = vshll.u32 %v456, 16
    %v538 = vrot.slane %v536, 7
    %v539 = vor.u32 %v535, %v538
    %v540 = vrot.slane %v539, 2
    %v542 = vshll.u32 %v457, 16
    %v544 = vrot.slane %v542, 7
    %v545 = vsel %vm158, %v540, %v544
    %v547 = vshrl.u32 %v464, 16
    %v549 = vrot.slane %v547, 6
    %v550 = vshll.u32 %v464, 16
    %v552 = vrot.slane %v550, 7
    %v553 = vor.u32 %v549, %v552
    %v554 = vrot.slane %v553, 2
    %v556 = vshll.u32 %v465, 16
    %v558 = vrot.slane %v556, 7
    %v559 = vsel %vm158, %v554, %v558
    %v561 = vshrl.u32 %v472, 16
    %v563 = vrot.slane %v561, 6
    %v564 = vshll.u32 %v472, 16
    %v566 = vrot.slane %v564, 7
    %v567 = vor.u32 %v563, %v566
    %v568 = vrot.slane %v567, 2
    %v570 = vshll.u32 %v473, 16
    %v572 = vrot.slane %v570, 7
    %v573 = vsel %vm158, %v568, %v572
    %v575 = vshrl.u32 %v480, 16
    %v577 = vrot.slane %v575, 6
    %v578 = vshll.u32 %v480, 16
    %v580 = vrot.slane %v578, 7
    %v581 = vor.u32 %v577, %v580
    %v582 = vrot.slane %v581, 2
    %v584 = vshll.u32 %v481, 16
    %v586 = vrot.slane %v584, 7
    %v587 = vsel %vm158, %v582, %v586
    %v589 = vshrl.u32 %v488, 16
    %v591 = vrot.slane %v589, 6
    %v592 = vshll.u32 %v488, 16
    %v594 = vrot.slane %v592, 7
    %v595 = vor.u32 %v591, %v594
    %v596 = vrot.slane %v595, 2
    %v598 = vshll.u32 %v489, 16
    %v600 = vrot.slane %v598, 7
    %v601 = vsel %vm158, %v596, %v600
    %602 = vrot.lane.b32.xlu0 %v503, 48
    %v603 = vpop.permute.xlu0 %602
    %604 = vrot.lane.b32.xlu0 %v517, 48
    %v605 = vpop.permute.xlu0 %604
    %606 = vrot.lane.b32.xlu0 %v531, 48
    %v607 = vpop.permute.xlu0 %606
    %608 = vrot.lane.b32.xlu0 %v545, 48
    %v609 = vpop.permute.xlu0 %608
    %610 = vrot.lane.b32.xlu0 %v559, 48
    %v611 = vpop.permute.xlu0 %610
    %612 = vrot.lane.b32.xlu0 %v573, 48
    %v613 = vpop.permute.xlu0 %612
    %614 = vrot.lane.b32.xlu0 %v587, 48
    %v615 = vpop.permute.xlu0 %614
    %616 = vrot.lane.b32.xlu0 %v601, 48
    %v617 = vpop.permute.xlu0 %616
    %vm626 = vcmask 517504
    %627 = vst.msk [vmem:[#allocation2] sm:$0x3] %vm626, %v603
    %628 = vst.msk [vmem:[#allocation2 + $0x2] sm:$0x3] %vm626, %v605
    %629 = vst.msk [vmem:[#allocation2 + $0x4] sm:$0x3] %vm626, %v607
    %630 = vst.msk [vmem:[#allocation2 + $0x6] sm:$0x3] %vm626, %v609
    %631 = vst.msk [vmem:[#allocation2 + $0x8] sm:$0x3] %vm626, %v611
    %632 = vst.msk [vmem:[#allocation2 + $0xa] sm:$0x3] %vm626, %v613
    %633 = vst.msk [vmem:[#allocation2 + $0xc] sm:$0x3] %vm626, %v615
    %634 = vst.msk [vmem:[#allocation2 + $0xe] sm:$0x3] %vm626, %v617
    %v635 = vld [vmem:[#allocation2] sm:$0x3]
    %v636 = vld [vmem:[#allocation2 + $0x2] sm:$0x3]
    %v637 = vld [vmem:[#allocation2 + $0x4] sm:$0x3]
    %v638 = vld [vmem:[#allocation2 + $0x6] sm:$0x3]
    %v639 = vld [vmem:[#allocation2 + $0x8] sm:$0x3]
    %v640 = vld [vmem:[#allocation2 + $0xa] sm:$0x3]
    %v641 = vld [vmem:[#allocation2 + $0xc] sm:$0x3]
    %v642 = vld [vmem:[#allocation2 + $0xe] sm:$0x3]
    %v643 = vld [vmem:[#allocation6] sm:$0xf]
    %v644 = vld [vmem:[#allocation6 + $0x4] sm:$0xf]
    %v645 = vld [vmem:[#allocation6 + $0x8] sm:$0xf]
    %v646 = vld [vmem:[#allocation6 + $0xc] sm:$0xf]
    %v647 = vld [vmem:[#allocation6 + $0x10] sm:$0xf]
    %v648 = vld [vmem:[#allocation6 + $0x14] sm:$0xf]
    %v649 = vld [vmem:[#allocation6 + $0x18] sm:$0xf]
    %v650 = vld [vmem:[#allocation6 + $0x1c] sm:$0xf]
    %v651 = vld [vmem:[#allocation8] sm:$0x1]
    %v653 = vlaneseq
    %v654 = vshrl.u32 %v653, 7
    %v655 = vsub.s32 0, %v654
    %v656 = vrot.slane %v651, %v655
    %v666 = vcombine.low %v635, %v636
    %v667 = vcombine.low %v637, %v638
    %v669 = vunpack.c.l.s4 1983009808
    %v670 = vunpack.c.0.s8 %v669
    %v671 = vlaneseq
    %v672 = vshrl.u32 %v671, 7
    %v673 = vsub.s32 %v670, %v672
    %v674 = vrot.slane %v666, %v673
    %v676 = vunpack.c.l.s4 1983009808
    %v677 = vunpack.c.0.s8 %v676
    %v678 = vlaneseq
    %v679 = vshrl.u32 %v678, 7
    %v680 = vsub.s32 %v677, %v679
    %v681 = vrot.slane %v667, %v680
    %v682 = vcombine.low %v674, %v681
    %v683 = vcombine.low %v639, %v640
    %v684 = vcombine.low %v641, %v642
    %v686 = vunpack.c.l.s4 1983009808
    %v687 = vunpack.c.0.s8 %v686
    %v688 = vlaneseq
    %v689 = vshrl.u32 %v688, 7
    %v690 = vsub.s32 %v687, %v689
    %v691 = vrot.slane %v683, %v690
    %v693 = vunpack.c.l.s4 1983009808
    %v694 = vunpack.c.0.s8 %v693
    %v695 = vlaneseq
    %v696 = vshrl.u32 %v695, 7
    %v697 = vsub.s32 %v694, %v696
    %v698 = vrot.slane %v684, %v697
    %v699 = vcombine.low %v691, %v698
    %v708 = vunpack.c.l.b16 %v643
    %v709 = vunpack.c.l.b16 %v644
    %v710 = vunpack.c.l.b16 %v645
    %v711 = vunpack.c.l.b16 %v646
    %v712 = vunpack.c.l.b16 %v647
    %v713 = vunpack.c.l.b16 %v648
    %v714 = vunpack.c.l.b16 %v649
    %v715 = vunpack.c.l.b16 %v650
    %v716 = vpack.c.b16 %v709, %v708
    %v717 = vpack.c.b16 %v711, %v710
    %v718 = vpack.c.b16 %v713, %v712
    %v719 = vpack.c.b16 %v715, %v714
    %vm724 = vcmask 523264
    %v726 = vsel %vm724, %v682, 0
    %v729 = vsel %vm724, %v699, 0
    %731 = vmatprep.subr.bf16.mxu0 0
    %732 = vmatpush1.bf16.msra.mxu0 %v716
    %733 = vmatprep.subr.bf16.mxu0 0
    %734 = vmatpush1.bf16.msra.mxu0 %v717
    %735 = vmatprep.subr.bf16.mxu0 0
    %736 = vmatpush1.bf16.msra.mxu0 %v718
    %737 = vmatprep.subr.bf16.mxu0 0
    %738 = vmatpush1.bf16.msra.mxu0 %v719
    %739 = vmatprep.subr.bf16.mxu0 0
    %740 = vmatpush1.bf16.msra.mxu0 0
    %741 = vmatprep.subr.bf16.mxu0 0
    %742 = vmatpush1.bf16.msra.mxu0 0
    %743 = vmatprep.subr.bf16.mxu0 0
    %744 = vmatpush1.bf16.msra.mxu0 0
    %745 = vmatprep.subr.bf16.mxu0 0
    %746 = vmatpush1.bf16.msra.mxu0 0
    %747 = vmatprep.subr.bf16.mxu0 0
    %748 = vmatpush1.bf16.msra.mxu0 0
    %749 = vmatprep.subr.bf16.mxu0 0
    %750 = vmatpush1.bf16.msra.mxu0 0
    %751 = vmatprep.subr.bf16.mxu0 0
    %752 = vmatpush1.bf16.msra.mxu0 0
    %753 = vmatprep.subr.bf16.mxu0 0
    %754 = vmatpush1.bf16.msra.mxu0 0
    %755 = vmatprep.subr.bf16.mxu0 0
    %756 = vmatpush1.bf16.msra.mxu0 0
    %757 = vmatprep.subr.bf16.mxu0 0
    %758 = vmatpush1.bf16.msra.mxu0 0
    %759 = vmatprep.subr.bf16.mxu0 0
    %760 = vmatpush1.bf16.msra.mxu0 0
    %761 = vmatprep.subr.bf16.mxu0 0
    %762 = vmatpush1.bf16.msra.mxu0 0
    %763 = vmatprep.mubr.bf16.mxu0 0
    %764 = vmatmul.mubr.bf16.gmra.mrb[0].mxu0 %v726
    %v765 = vpop.f32.mrb[0].mxu0
    %v766 = vadd.f32 %v656, %v765
    %v767 = vpop.f32.mrb[0].mxu0
    %v768 = vpop.f32.mrb[0].mxu0
    %v769 = vadd.f32 %v656, %v768
    %v770 = vpop.f32.mrb[0].mxu0
    %771 = vmatprep.mubr.bf16.mxu0 0
    %772 = vmatmul.mubr.bf16.gmra.mrb[0].mxu0 %v729
    %v773 = vpop.f32.mrb[0].mxu0
    %v774 = vadd.f32 %v656, %v773
    %v775 = vpop.f32.mrb[0].mxu0
    %v776 = vpop.f32.mrb[0].mxu0
    %v777 = vadd.f32 %v656, %v776
    %v778 = vpop.f32.mrb[0].mxu0
    %779 = vdwg.mxu0
    %v780 = vmax.f32 %v766, 0.0
    %v781 = vmax.f32 %v769, 0.0
    %v782 = vmax.f32 %v774, 0.0
    %v783 = vmax.f32 %v777, 0.0
    %v784 = vpack.c.bf16 %v781, %v780
    %v785 = vpack.c.bf16 %v783, %v782
    %v788 = vunpack.c.l.b16 %v784
    %v789 = vunpack.c.h.b16 %v784
    %v790 = vunpack.c.l.b16 %v785
    %v791 = vunpack.c.h.b16 %v785
    %v792 = vpack.c.b16 %v788, %v788
    %v793 = vpack.c.b16 %v789, %v789
    %v794 = vpack.c.b16 %v790, %v790
    %v795 = vpack.c.b16 %v791, %v791
    %800 = vst [vmem:[#allocation9] sm:$0xf] %v792
    %801 = vst [vmem:[#allocation9 + $0x4] sm:$0xf] %v793
    %802 = vst [vmem:[#allocation9 + $0x8] sm:$0xf] %v794
    %803 = vst [vmem:[#allocation9 + $0xc] sm:$0xf] %v795
    // Predicated region
    $region26: #{_lambda_.5} parent=1 // pred_check
      _
    $region27: #{_lambda_.5} parent=1 // pred_check_branch
      %805 = sbr.rel (0) target = $region29
    $region28: #{_lambda_.5} parent=1 // pred_region
      %s807 = ssub.s32 256, 256
      %808 = vsyncadd [#allocation5], %s807
      %s809 = sshll.u32 [#allocation9], 4
      %s810 = int_to_ptr.vmem [resolvable:$true] %s809
      %815 = dma.vmem_to_hbm [thread:$0]  %s810, 256, %s3, [#allocation5], 64, 64, 4
    $region29: #{_lambda_.5} parent=1 // pred_fallthru
      _
    // Predicated region
    $region30: #{_lambda_.5} parent=1 // pred_check
      _
    $region31: #{_lambda_.5} parent=1 // pred_check_branch
      %817 = sbr.rel (0) target = $region33
    $region32: #{_lambda_.5} parent=1 // pred_region
      %818 = dma.done [#allocation5], 256
    $region33: #{_lambda_.5} parent=1 // pred_fallthru
      _
    %819 = vsyncpa [#allocation4], 1
    %820 = vsyncpa [#allocation7], 1
    %821 = vsyncpa [#allocation5], 1

// kernel: _lambda_.4
$region0: #{_lambda_.4}
  #allocation0 [shape = 'u32[]', space=smem, size = 0x4, offset = 0x4, fixed_abs, tag = 'smem constant byte address 0x4 - core index']
  #allocation1 [shape = 'u32[144,128]{1,0:T(1,128)}', space=vmem, size = 0x12000, scoped, tag = 'internal scratch']
  #allocation2 [shape = 'bf16[2,8,8,16]{3,2,1,0:T(8,128)(2,1)}', space=vmem, size = 0x8000, scoped, tag = 'scratch operand']
  %s0 = inlined_call_operand.hbm [shape: bf16[2,9,9,4], index: 0, kind: input, shape index: {}]
  %s1 = inlined_call_operand.hbm [shape: bf16[16,128], index: 1, kind: input, shape index: {}]
  %s2 = inlined_call_operand.hbm [shape: f32[1,128], index: 2, kind: input, shape index: {}]
  %s3 = inlined_call_operand.hbm [shape: bf16[128,128], index: 3, kind: output, shape index: {}]
  %s4 = sld [smem:[#allocation0]]
  $region34: #{_lambda_.4} parent=0
    _
  %s6 = ssub.s32 1, %s4
  %s7 = scalar_select 0, %s6, %s4
  $region1: #{_lambda_.4} parent=0
    #allocation3 [shape = 'u8[73728]{0}', space=vmem, size = 0x12000, scoped, tag = 'input window, operand 0, single buffered']
    #allocation4 [shape = 's32[1]{0}', space=sflag, size = 0x4, scoped, tag = 'scoped memory for _lambda_.4']
    #allocation5 [shape = 's32[1]{0}', space=sflag, size = 0x4, scoped, tag = 'scoped memory for _lambda_.4']
    #allocation6 [shape = 'u8[4096]{0}', space=vmem, size = 0x1000, scoped, tag = 'input window, operand 1, single buffered']
    #allocation7 [shape = 's32[1]{0}', space=sflag, size = 0x4, scoped, tag = 'scoped memory for _lambda_.4']
    #allocation8 [shape = 'u8[512]{0}', space=vmem, size = 0x400, scoped, tag = 'input window, operand 2, single buffered']
    #allocation9 [shape = 'u8[32768]{0}', space=vmem, size = 0x8000, scoped, tag = 'output window, operand 0, single buffered']
    %8 = vsyncpa [#allocation4], 0
    %9 = vsyncpa [#allocation7], 0
    %10 = vsyncpa [#allocation5], 0
    // Predicated region
    $region2: #{_lambda_.4} parent=1 // pred_check
      _
    $region3: #{_lambda_.4} parent=1 // pred_check_branch
      %12 = sbr.rel (0) target = $region5
    $region4: #{_lambda_.4} parent=1 // pred_region
      %s14 = ssub.s32 2304, 2304
      %15 = vsyncadd [#allocation4], %s14
      %s16 = sshll.u32 [#allocation3], 4
      %s17 = int_to_ptr.vmem [resolvable:$true] %s16
      %22 = dma.hbm_to_vmem [thread:$0]  %s0, 2304, %s17, [#allocation4], 64, 64, 4
    $region5: #{_lambda_.4} parent=1 // pred_fallthru
      _
    // Predicated region
    $region6: #{_lambda_.4} parent=1 // pred_check
      _
    $region7: #{_lambda_.4} parent=1 // pred_check_branch
      %24 = sbr.rel (0) target = $region9
    $region8: #{_lambda_.4} parent=1 // pred_region
      %s26 = ssub.s32 128, 128
      %27 = vsyncadd [#allocation7], %s26
      %s28 = sshll.u32 [#allocation6], 4
      %s29 = int_to_ptr.vmem [resolvable:$true] %s28
      %34 = dma.hbm_to_vmem [thread:$0]  %s1, 128, %s29, [#allocation7], 64, 64, 4
    $region9: #{_lambda_.4} parent=1 // pred_fallthru
      _
    // Predicated region
    $region10: #{_lambda_.4} parent=1 // pred_check
      _
    $region11: #{_lambda_.4} parent=1 // pred_check_branch
      %36 = sbr.rel (0) target = $region13
    $region12: #{_lambda_.4} parent=1 // pred_region
      %s38 = ssub.s32 16, 16
      %39 = vsyncadd [#allocation7], %s38
      %s41 = sshll.u32 [#allocation8], 4
      %s42 = int_to_ptr.vmem [resolvable:$true] %s41
      %44 = dma.hbm_to_vmem [thread:$0]  %s2, 16, %s42, [#allocation7]
    $region13: #{_lambda_.4} parent=1 // pred_fallthru
      _
    // Predicated region
    $region14: #{_lambda_.4} parent=1 // pred_check
      _
    $region15: #{_lambda_.4} parent=1 // pred_check_branch
      %46 = sbr.rel (0) target = $region17
    $region16: #{_lambda_.4} parent=1 // pred_region
      %47 = dma.done [#allocation4], 2304
    $region17: #{_lambda_.4} parent=1 // pred_fallthru
      _
    // Predicated region
    $region18: #{_lambda_.4} parent=1 // pred_check
      _
    $region19: #{_lambda_.4} parent=1 // pred_check_branch
      %49 = sbr.rel (0) target = $region21
    $region20: #{_lambda_.4} parent=1 // pred_region
      %50 = dma.done [#allocation7], 128
    $region21: #{_lambda_.4} parent=1 // pred_fallthru
      _
    // Predicated region
    $region22: #{_lambda_.4} parent=1 // pred_check
      _
    $region23: #{_lambda_.4} parent=1 // pred_check_branch
      %52 = sbr.rel (0) target = $region25
    $region24: #{_lambda_.4} parent=1 // pred_region
      %53 = dma.done [#allocation7], 16
    $region25: #{_lambda_.4} parent=1 // pred_fallthru
      _
    %v55 = vld [vmem:[#allocation3] sm:$0xf]
    %v56 = vld [vmem:[#allocation3 + $0x8] sm:$0xf]
    %v57 = vld [vmem:[#allocation3 + $0x10] sm:$0xf]
    %v58 = vld [vmem:[#allocation3 + $0x18] sm:$0xf]
    %v59 = vld [vmem:[#allocation3 + $0x20] sm:$0xf]
    %v60 = vld [vmem:[#allocation3 + $0x28] sm:$0xf]
    %v61 = vld [vmem:[#allocation3 + $0x30] sm:$0xf]
    %v62 = vld [vmem:[#allocation3 + $0x38] sm:$0xf]
    %v63 = vld [vmem:[#allocation3 + $0x48] sm:$0xf]
    %v64 = vld [vmem:[#allocation3 + $0x50] sm:$0xf]
    %v65 = vld [vmem:[#allocation3 + $0x58] sm:$0xf]
    %v66 = vld [vmem:[#allocation3 + $0x60] sm:$0xf]
    %v67 = vld [vmem:[#allocation3 + $0x68] sm:$0xf]
    %v68 = vld [vmem:[#allocation3 + $0x70] sm:$0xf]
    %v69 = vld [vmem:[#allocation3 + $0x78] sm:$0xf]
    %v70 = vld [vmem:[#allocation3 + $0x80] sm:$0xf]
    %vm71 = vcmask 27648
    %72 = vst.msk [vmem:[#allocation2] sm:$0xf] %vm71, %v55
    %73 = vst.msk [vmem:[#allocation2 + $0x4] sm:$0xf] %vm71, %v56
    %74 = vst.msk [vmem:[#allocation2 + $0x8] sm:$0xf] %vm71, %v57
    %75 = vst.msk [vmem:[#allocation2 + $0xc] sm:$0xf] %vm71, %v58
    %76 = vst.msk [vmem:[#allocation2 + $0x10] sm:$0xf] %vm71, %v59
    %77 = vst.msk [vmem:[#allocation2 + $0x14] sm:$0xf] %vm71, %v60
    %78 = vst.msk [vmem:[#allocation2 + $0x18] sm:$0xf] %vm71, %v61
    %79 = vst.msk [vmem:[#allocation2 + $0x1c] sm:$0xf] %vm71, %v62
    %80 = vst.msk [vmem:[#allocation2 + $0x20] sm:$0xf] %vm71, %v63
    %81 = vst.msk [vmem:[#allocation2 + $0x24] sm:$0xf] %vm71, %v64
    %82 = vst.msk [vmem:[#allocation2 + $0x28] sm:$0xf] %vm71, %v65
    %83 = vst.msk [vmem:[#allocation2 + $0x2c] sm:$0xf] %vm71, %v66
    %84 = vst.msk [vmem:[#allocation2 + $0x30] sm:$0xf] %vm71, %v67
    %85 = vst.msk [vmem:[#allocation2 + $0x34] sm:$0xf] %vm71, %v68
    %86 = vst.msk [vmem:[#allocation2 + $0x38] sm:$0xf] %vm71, %v69
    %87 = vst.msk [vmem:[#allocation2 + $0x3c] sm:$0xf] %vm71, %v70
    %v88 = vld [vmem:[#allocation3] sm:$0xf]
    %v89 = vld [vmem:[#allocation3 + $0x4] sm:$0x1]
    %v90 = vld [vmem:[#allocation3 + $0x8] sm:$0xf]
    %v91 = vld [vmem:[#allocation3 + $0xc] sm:$0x1]
    %v92 = vld [vmem:[#allocation3 + $0x10] sm:$0xf]
    %v93 = vld [vmem:[#allocation3 + $0x14] sm:$0x1]
    %v94 = vld [vmem:[#allocation3 + $0x18] sm:$0xf]
    %v95 = vld [vmem:[#allocation3 + $0x1c] sm:$0x1]
    %v96 = vld [vmem:[#allocation3 + $0x20] sm:$0xf]
    %v97 = vld [vmem:[#allocation3 + $0x24] sm:$0x1]
    %v98 = vld [vmem:[#allocation3 + $0x28] sm:$0xf]
    %v99 = vld [vmem:[#allocation3 + $0x2c] sm:$0x1]
    %v100 = vld [vmem:[#allocation3 + $0x30] sm:$0xf]
    %v101 = vld [vmem:[#allocation3 + $0x34] sm:$0x1]
    %v102 = vld [vmem:[#allocation3 + $0x38] sm:$0xf]
    %v103 = vld [vmem:[#allocation3 + $0x3c] sm:$0x1]
    %v104 = vld [vmem:[#allocation3 + $0x48] sm:$0xf]
    %v105 = vld [vmem:[#allocation3 + $0x4c] sm:$0x1]
    %v106 = vld [vmem:[#allocation3 + $0x50] sm:$0xf]
    %v107 = vld [vmem:[#allocation3 + $0x54] sm:$0x1]
    %v108 = vld [vmem:[#allocation3 + $0x58] sm:$0xf]
    %v109 = vld [vmem:[#allocation3 + $0x5c] sm:$0x1]
    %v110 = vld [vmem:[#allocation3 + $0x60] sm:$0xf]
    %v111 = vld [vmem:[#allocation3 + $0x64] sm:$0x1]
    %v112 = vld [vmem:[#allocation3 + $0x68] sm:$0xf]
    %v113 = vld [vmem:[#allocation3 + $0x6c] sm:$0x1]
    %v114 = vld [vmem:[#allocation3 + $0x70] sm:$0xf]
    %v115 = vld [vmem:[#allocation3 + $0x74] sm:$0x1]
    %v116 = vld [vmem:[#allocation3 + $0x78] sm:$0xf]
    %v117 = vld [vmem:[#allocation3 + $0x7c] sm:$0x1]
    %v118 = vld [vmem:[#allocation3 + $0x80] sm:$0xf]
    %v119 = vld [vmem:[#allocation3 + $0x84] sm:$0x1]
    %vm120 = vsmask.f32 3328
    %vm121 = vsmask.f32 7440
    %vm122 = vmor %vm120, %vm121
    %v124 = vshrl.u32 %v88, 16
    %v126 = vrot.slane %v124, 4
    %v127 = vshll.u32 %v88, 16
    %v129 = vrot.slane %v127, 5
    %v130 = vor.u32 %v126, %v129
    %v131 = vrot.slane %v130, 4
    %v133 = vshll.u32 %v89, 16
    %v135 = vrot.slane %v133, 5
    %v136 = vsel %vm122, %v131, %v135
    %v138 = vshrl.u32 %v90, 16
    %v140 = vrot.slane %v138, 4
    %v141 = vshll.u32 %v90, 16
    %v143 = vrot.slane %v141, 5
    %v144 = vor.u32 %v140, %v143
    %v145 = vrot.slane %v144, 4
    %v147 = vshll.u32 %v91, 16
    %v149 = vrot.slane %v147, 5
    %v150 = vsel %vm122, %v145, %v149
    %v152 = vshrl.u32 %v92, 16
    %v154 = vrot.slane %v152, 4
    %v155 = vshll.u32 %v92, 16
    %v157 = vrot.slane %v155, 5
    %v158 = vor.u32 %v154, %v157
    %v159 = vrot.slane %v158, 4
    %v161 = vshll.u32 %v93, 16
    %v163 = vrot.slane %v161, 5
    %v164 = vsel %vm122, %v159, %v163
    %v166 = vshrl.u32 %v94, 16
    %v168 = vrot.slane %v166, 4
    %v169 = vshll.u32 %v94, 16
    %v171 = vrot.slane %v169, 5
    %v172 = vor.u32 %v168, %v171
    %v173 = vrot.slane %v172, 4
    %v175 = vshll.u32 %v95, 16
    %v177 = vrot.slane %v175, 5
    %v178 = vsel %vm122, %v173, %v177
    %v180 = vshrl.u32 %v96, 16
    %v182 = vrot.slane %v180, 4
    %v183 = vshll.u32 %v96, 16
    %v185 = vrot.slane %v183, 5
    %v186 = vor.u32 %v182, %v185
    %v187 = vrot.slane %v186, 4
    %v189 = vshll.u32 %v97, 16
    %v191 = vrot.slane %v189, 5
    %v192 = vsel %vm122, %v187, %v191
    %v194 = vshrl.u32 %v98, 16
    %v196 = vrot.slane %v194, 4
    %v197 = vshll.u32 %v98, 16
    %v199 = vrot.slane %v197, 5
    %v200 = vor.u32 %v196, %v199
    %v201 = vrot.slane %v200, 4
    %v203 = vshll.u32 %v99, 16
    %v205 = vrot.slane %v203, 5
    %v206 = vsel %vm122, %v201, %v205
    %v208 = vshrl.u32 %v100, 16
    %v210 = vrot.slane %v208, 4
    %v211 = vshll.u32 %v100, 16
    %v213 = vrot.slane %v211, 5
    %v214 = vor.u32 %v210, %v213
    %v215 = vrot.slane %v214, 4
    %v217 = vshll.u32 %v101, 16
    %v219 = vrot.slane %v217, 5
    %v220 = vsel %vm122, %v215, %v219
    %v222 = vshrl.u32 %v102, 16
    %v224 = vrot.slane %v222, 4
    %v225 = vshll.u32 %v102, 16
    %v227 = vrot.slane %v225, 5
    %v228 = vor.u32 %v224, %v227
    %v229 = vrot.slane %v228, 4
    %v231 = vshll.u32 %v103, 16
    %v233 = vrot.slane %v231, 5
    %v234 = vsel %vm122, %v229, %v233
    %v236 = vshrl.u32 %v104, 16
    %v238 = vrot.slane %v236, 4
    %v239 = vshll.u32 %v104, 16
    %v241 = vrot.slane %v239, 5
    %v242 = vor.u32 %v238, %v241
    %v243 = vrot.slane %v242, 4
    %v245 = vshll.u32 %v105, 16
    %v247 = vrot.slane %v245, 5
    %v248 = vsel %vm122, %v243, %v247
    %v250 = vshrl.u32 %v106, 16
    %v252 = vrot.slane %v250, 4
    %v253 = vshll.u32 %v106, 16
    %v255 = vrot.slane %v253, 5
    %v256 = vor.u32 %v252, %v255
    %v257 = vrot.slane %v256, 4
    %v259 = vshll.u32 %v107, 16
    %v261 = vrot.slane %v259, 5
    %v262 = vsel %vm122, %v257, %v261
    %v264 = vshrl.u32 %v108, 16
    %v266 = vrot.slane %v264, 4
    %v267 = vshll.u32 %v108, 16
    %v269 = vrot.slane %v267, 5
    %v270 = vor.u32 %v266, %v269
    %v271 = vrot.slane %v270, 4
    %v273 = vshll.u32 %v109, 16
    %v275 = vrot.slane %v273, 5
    %v276 = vsel %vm122, %v271, %v275
    %v278 = vshrl.u32 %v110, 16
    %v280 = vrot.slane %v278, 4
    %v281 = vshll.u32 %v110, 16
    %v283 = vrot.slane %v281, 5
    %v284 = vor.u32 %v280, %v283
    %v285 = vrot.slane %v284, 4
    %v287 = vshll.u32 %v111, 16
    %v289 = vrot.slane %v287, 5
    %v290 = vsel %vm122, %v285, %v289
    %v292 = vshrl.u32 %v112, 16
    %v294 = vrot.slane %v292, 4
    %v295 = vshll.u32 %v112, 16
    %v297 = vrot.slane %v295, 5
    %v298 = vor.u32 %v294, %v297
    %v299 = vrot.slane %v298, 4
    %v301 = vshll.u32 %v113, 16
    %v303 = vrot.slane %v301, 5
    %v304 = vsel %vm122, %v299, %v303
    %v306 = vshrl.u32 %v114, 16
    %v308 = vrot.slane %v306, 4
    %v309 = vshll.u32 %v114, 16
    %v311 = vrot.slane %v309, 5
    %v312 = vor.u32 %v308, %v311
    %v313 = vrot.slane %v312, 4
    %v315 = vshll.u32 %v115, 16
    %v317 = vrot.slane %v315, 5
    %v318 = vsel %vm122, %v313, %v317
    %v320 = vshrl.u32 %v116, 16
    %v322 = vrot.slane %v320, 4
    %v323 = vshll.u32 %v116, 16
    %v325 = vrot.slane %v323, 5
    %v326 = vor.u32 %v322, %v325
    %v327 = vrot.slane %v326, 4
    %v329 = vshll.u32 %v117, 16
    %v331 = vrot.slane %v329, 5
    %v332 = vsel %vm122, %v327, %v331
    %v334 = vshrl.u32 %v118, 16
    %v336 = vrot.slane %v334, 4
    %v337 = vshll.u32 %v118, 16
    %v339 = vrot.slane %v337, 5
    %v340 = vor.u32 %v336, %v339
    %v341 = vrot.slane %v340, 4
    %v343 = vshll.u32 %v119, 16
    %v345 = vrot.slane %v343, 5
    %v346 = vsel %vm122, %v341, %v345
    %347 = vrot.lane.b32.xlu0 %v136, 4
    %v348 = vpop.permute.xlu0 %347
    %349 = vrot.lane.b32.xlu0 %v150, 4
    %v350 = vpop.permute.xlu0 %349
    %351 = vrot.lane.b32.xlu0 %v164, 4
    %v352 = vpop.permute.xlu0 %351
    %353 = vrot.lane.b32.xlu0 %v178, 4
    %v354 = vpop.permute.xlu0 %353
    %355 = vrot.lane.b32.xlu0 %v192, 4
    %v356 = vpop.permute.xlu0 %355
    %357 = vrot.lane.b32.xlu0 %v206, 4
    %v358 = vpop.permute.xlu0 %357
    %359 = vrot.lane.b32.xlu0 %v220, 4
    %v360 = vpop.permute.xlu0 %359
    %361 = vrot.lane.b32.xlu0 %v234, 4
    %v362 = vpop.permute.xlu0 %361
    %363 = vrot.lane.b32.xlu0 %v248, 4
    %v364 = vpop.permute.xlu0 %363
    %365 = vrot.lane.b32.xlu0 %v262, 4
    %v366 = vpop.permute.xlu0 %365
    %367 = vrot.lane.b32.xlu0 %v276, 4
    %v368 = vpop.permute.xlu0 %367
    %369 = vrot.lane.b32.xlu0 %v290, 4
    %v370 = vpop.permute.xlu0 %369
    %371 = vrot.lane.b32.xlu0 %v304, 4
    %v372 = vpop.permute.xlu0 %371
    %373 = vrot.lane.b32.xlu0 %v318, 4
    %v374 = vpop.permute.xlu0 %373
    %375 = vrot.lane.b32.xlu0 %v332, 4
    %v376 = vpop.permute.xlu0 %375
    %377 = vrot.lane.b32.xlu0 %v346, 4
    %v378 = vpop.permute.xlu0 %377
    %vm395 = vcmask 60448
    %396 = vst.msk [vmem:[#allocation2] sm:$0xf] %vm395, %v348
    %397 = vst.msk [vmem:[#allocation2 + $0x4] sm:$0xf] %vm395, %v350
    %398 = vst.msk [vmem:[#allocation2 + $0x8] sm:$0xf] %vm395, %v352
    %399 = vst.msk [vmem:[#allocation2 + $0xc] sm:$0xf] %vm395, %v354
    %400 = vst.msk [vmem:[#allocation2 + $0x10] sm:$0xf] %vm395, %v356
    %401 = vst.msk [vmem:[#allocation2 + $0x14] sm:$0xf] %vm395, %v358
    %402 = vst.msk [vmem:[#allocation2 + $0x18] sm:$0xf] %vm395, %v360
    %403 = vst.msk [vmem:[#allocation2 + $0x1c] sm:$0xf] %vm395, %v362
    %404 = vst.msk [vmem:[#allocation2 + $0x20] sm:$0xf] %vm395, %v364
    %405 = vst.msk [vmem:[#allocation2 + $0x24] sm:$0xf] %vm395, %v366
    %406 = vst.msk [vmem:[#allocation2 + $0x28] sm:$0xf] %vm395, %v368
    %407 = vst.msk [vmem:[#allocation2 + $0x2c] sm:$0xf] %vm395, %v370
    %408 = vst.msk [vmem:[#allocation2 + $0x30] sm:$0xf] %vm395, %v372
    %409 = vst.msk [vmem:[#allocation2 + $0x34] sm:$0xf] %vm395, %v374
    %410 = vst.msk [vmem:[#allocation2 + $0x38] sm:$0xf] %vm395, %v376
    %411 = vst.msk [vmem:[#allocation2 + $0x3c] sm:$0xf] %vm395, %v378
    %s412 = scalar_lea.vmem [#allocation3], 8
    %v413 = vld [vmem:[%s412] sm:$0xf]
    %v414 = vld [vmem:[%s412 + $0x8] sm:$0xf]
    %v415 = vld [vmem:[%s412 + $0x10] sm:$0xf]
    %v416 = vld [vmem:[%s412 + $0x18] sm:$0xf]
    %v417 = vld [vmem:[%s412 + $0x20] sm:$0xf]
    %v418 = vld [vmem:[%s412 + $0x28] sm:$0xf]
    %v419 = vld [vmem:[%s412 + $0x30] sm:$0xf]
    %v420 = vld [vmem:[%s412 + $0x38] sm:$0xf]
    %v421 = vld [vmem:[%s412 + $0x48] sm:$0xf]
    %v422 = vld [vmem:[%s412 + $0x50] sm:$0xf]
    %v423 = vld [vmem:[%s412 + $0x58] sm:$0xf]
    %v424 = vld [vmem:[%s412 + $0x60] sm:$0xf]
    %v425 = vld [vmem:[%s412 + $0x68] sm:$0xf]
    %v426 = vld [vmem:[%s412 + $0x70] sm:$0xf]
    %v427 = vld [vmem:[%s412 + $0x78] sm:$0xf]
    %v428 = vld [vmem:[%s412 + $0x80] sm:$0xf]
    %445 = vrot.lane.b32.xlu0 %v413, 8
    %v446 = vpop.permute.xlu0 %445
    %447 = vrot.lane.b32.xlu0 %v414, 8
    %v448 = vpop.permute.xlu0 %447
    %449 = vrot.lane.b32.xlu0 %v415, 8
    %v450 = vpop.permute.xlu0 %449
    %451 = vrot.lane.b32.xlu0 %v416, 8
    %v452 = vpop.permute.xlu0 %451
    %453 = vrot.lane.b32.xlu0 %v417, 8
    %v454 = vpop.permute.xlu0 %453
    %455 = vrot.lane.b32.xlu0 %v418, 8
    %v456 = vpop.permute.xlu0 %455
    %457 = vrot.lane.b32.xlu0 %v419, 8
    %v458 = vpop.permute.xlu0 %457
    %459 = vrot.lane.b32.xlu0 %v420, 8
    %v460 = vpop.permute.xlu0 %459
    %461 = vrot.lane.b32.xlu0 %v421, 8
    %v462 = vpop.permute.xlu0 %461
    %463 = vrot.lane.b32.xlu0 %v422, 8
    %v464 = vpop.permute.xlu0 %463
    %465 = vrot.lane.b32.xlu0 %v423, 8
    %v466 = vpop.permute.xlu0 %465
    %467 = vrot.lane.b32.xlu0 %v424, 8
    %v468 = vpop.permute.xlu0 %467
    %469 = vrot.lane.b32.xlu0 %v425, 8
    %v470 = vpop.permute.xlu0 %469
    %471 = vrot.lane.b32.xlu0 %v426, 8
    %v472 = vpop.permute.xlu0 %471
    %473 = vrot.lane.b32.xlu0 %v427, 8
    %v474 = vpop.permute.xlu0 %473
    %475 = vrot.lane.b32.xlu0 %v428, 8
    %v476 = vpop.permute.xlu0 %475
    %vm493 = vcmask 93248
    %494 = vst.msk [vmem:[#allocation2] sm:$0xf] %vm493, %v446
    %495 = vst.msk [vmem:[#allocation2 + $0x4] sm:$0xf] %vm493, %v448
    %496 = vst.msk [vmem:[#allocation2 + $0x8] sm:$0xf] %vm493, %v450
    %497 = vst.msk [vmem:[#allocation2 + $0xc] sm:$0xf] %vm493, %v452
    %498 = vst.msk [vmem:[#allocation2 + $0x10] sm:$0xf] %vm493, %v454
    %499 = vst.msk [vmem:[#allocation2 + $0x14] sm:$0xf] %vm493, %v456
    %500 = vst.msk [vmem:[#allocation2 + $0x18] sm:$0xf] %vm493, %v458
    %501 = vst.msk [vmem:[#allocation2 + $0x1c] sm:$0xf] %vm493, %v460
    %502 = vst.msk [vmem:[#allocation2 + $0x20] sm:$0xf] %vm493, %v462
    %503 = vst.msk [vmem:[#allocation2 + $0x24] sm:$0xf] %vm493, %v464
    %504 = vst.msk [vmem:[#allocation2 + $0x28] sm:$0xf] %vm493, %v466
    %505 = vst.msk [vmem:[#allocation2 + $0x2c] sm:$0xf] %vm493, %v468
    %506 = vst.msk [vmem:[#allocation2 + $0x30] sm:$0xf] %vm493, %v470
    %507 = vst.msk [vmem:[#allocation2 + $0x34] sm:$0xf] %vm493, %v472
    %508 = vst.msk [vmem:[#allocation2 + $0x38] sm:$0xf] %vm493, %v474
    %509 = vst.msk [vmem:[#allocation2 + $0x3c] sm:$0xf] %vm493, %v476
    %v510 = vld [vmem:[%s412] sm:$0xf]
    %v511 = vld [vmem:[%s412 + $0x4] sm:$0x1]
    %v512 = vld [vmem:[%s412 + $0x8] sm:$0xf]
    %v513 = vld [vmem:[%s412 + $0xc] sm:$0x1]
    %v514 = vld [vmem:[%s412 + $0x10] sm:$0xf]
    %v515 = vld [vmem:[%s412 + $0x14] sm:$0x1]
    %v516 = vld [vmem:[%s412 + $0x18] sm:$0xf]
    %v517 = vld [vmem:[%s412 + $0x1c] sm:$0x1]
    %v518 = vld [vmem:[%s412 + $0x20] sm:$0xf]
    %v519 = vld [vmem:[%s412 + $0x24] sm:$0x1]
    %v520 = vld [vmem:[%s412 + $0x28] sm:$0xf]
    %v521 = vld [vmem:[%s412 + $0x2c] sm:$0x1]
    %v522 = vld [vmem:[%s412 + $0x30] sm:$0xf]
    %v523 = vld [vmem:[%s412 + $0x34] sm:$0x1]
    %v524 = vld [vmem:[%s412 + $0x38] sm:$0xf]
    %v525 = vld [vmem:[%s412 + $0x3c] sm:$0x1]
    %v526 = vld [vmem:[%s412 + $0x48] sm:$0xf]
    %v527 = vld [vmem:[%s412 + $0x4c] sm:$0x1]
    %v528 = vld [vmem:[%s412 + $0x50] sm:$0xf]
    %v529 = vld [vmem:[%s412 + $0x54] sm:$0x1]
    %v530 = vld [vmem:[%s412 + $0x58] sm:$0xf]
    %v531 = vld [vmem:[%s412 + $0x5c] sm:$0x1]
    %v532 = vld [vmem:[%s412 + $0x60] sm:$0xf]
    %v533 = vld [vmem:[%s412 + $0x64] sm:$0x1]
    %v534 = vld [vmem:[%s412 + $0x68] sm:$0xf]
    %v535 = vld [vmem:[%s412 + $0x6c] sm:$0x1]
    %v536 = vld [vmem:[%s412 + $0x70] sm:$0xf]
    %v537 = vld [vmem:[%s412 + $0x74] sm:$0x1]
    %v538 = vld [vmem:[%s412 + $0x78] sm:$0xf]
    %v539 = vld [vmem:[%s412 + $0x7c] sm:$0x1]
    %v540 = vld [vmem:[%s412 + $0x80] sm:$0xf]
    %v541 = vld [vmem:[%s412 + $0x84] sm:$0x1]
    %v543 = vshrl.u32 %v510, 16
    %v545 = vrot.slane %v543, 4
    %v546 = vshll.u32 %v510, 16
    %v548 = vrot.slane %v546, 5
    %v549 = vor.u32 %v545, %v548
    %v550 = vrot.slane %v549, 4
    %v552 = vshll.u32 %v511, 16
    %v554 = vrot.slane %v552, 5
    %v555 = vsel %vm122, %v550, %v554
    %v557 = vshrl.u32 %v512, 16
    %v559 = vrot.slane %v557, 4
    %v560 = vshll.u32 %v512, 16
    %v562 = vrot.slane %v560, 5
    %v563 = vor.u32 %v559, %v562
    %v564 = vrot.slane %v563, 4
    %v566 = vshll.u32 %v513, 16
    %v568 = vrot.slane %v566, 5
    %v569 = vsel %vm122, %v564, %v568
    %v571 = vshrl.u32 %v514, 16
    %v573 = vrot.slane %v571, 4
    %v574 = vshll.u32 %v514, 16
    %v576 = vrot.slane %v574, 5
    %v577 = vor.u32 %v573, %v576
    %v578 = vrot.slane %v577, 4
    %v580 = vshll.u32 %v515, 16
    %v582 = vrot.slane %v580, 5
    %v583 = vsel %vm122, %v578, %v582
    %v585 = vshrl.u32 %v516, 16
    %v587 = vrot.slane %v585, 4
    %v588 = vshll.u32 %v516, 16
    %v590 = vrot.slane %v588, 5
    %v591 = vor.u32 %v587, %v590
    %v592 = vrot.slane %v591, 4
    %v594 = vshll.u32 %v517, 16
    %v596 = vrot.slane %v594, 5
    %v597 = vsel %vm122, %v592, %v596
    %v599 = vshrl.u32 %v518, 16
    %v601 = vrot.slane %v599, 4
    %v602 = vshll.u32 %v518, 16
    %v604 = vrot.slane %v602, 5
    %v605 = vor.u32 %v601, %v604
    %v606 = vrot.slane %v605, 4
    %v608 = vshll.u32 %v519, 16
    %v610 = vrot.slane %v608, 5
    %v611 = vsel %vm122, %v606, %v610
    %v613 = vshrl.u32 %v520, 16
    %v615 = vrot.slane %v613, 4
    %v616 = vshll.u32 %v520, 16
    %v618 = vrot.slane %v616, 5
    %v619 = vor.u32 %v615, %v618
    %v620 = vrot.slane %v619, 4
    %v622 = vshll.u32 %v521, 16
    %v624 = vrot.slane %v622, 5
    %v625 = vsel %vm122, %v620, %v624
    %v627 = vshrl.u32 %v522, 16
    %v629 = vrot.slane %v627, 4
    %v630 = vshll.u32 %v522, 16
    %v632 = vrot.slane %v630, 5
    %v633 = vor.u32 %v629, %v632
    %v634 = vrot.slane %v633, 4
    %v636 = vshll.u32 %v523, 16
    %v638 = vrot.slane %v636, 5
    %v639 = vsel %vm122, %v634, %v638
    %v641 = vshrl.u32 %v524, 16
    %v643 = vrot.slane %v641, 4
    %v644 = vshll.u32 %v524, 16
    %v646 = vrot.slane %v644, 5
    %v647 = vor.u32 %v643, %v646
    %v648 = vrot.slane %v647, 4
    %v650 = vshll.u32 %v525, 16
    %v652 = vrot.slane %v650, 5
    %v653 = vsel %vm122, %v648, %v652
    %v655 = vshrl.u32 %v526, 16
    %v657 = vrot.slane %v655, 4
    %v658 = vshll.u32 %v526, 16
    %v660 = vrot.slane %v658, 5
    %v661 = vor.u32 %v657, %v660
    %v662 = vrot.slane %v661, 4
    %v664 = vshll.u32 %v527, 16
    %v666 = vrot.slane %v664, 5
    %v667 = vsel %vm122, %v662, %v666
    %v669 = vshrl.u32 %v528, 16
    %v671 = vrot.slane %v669, 4
    %v672 = vshll.u32 %v528, 16
    %v674 = vrot.slane %v672, 5
    %v675 = vor.u32 %v671, %v674
    %v676 = vrot.slane %v675, 4
    %v678 = vshll.u32 %v529, 16
    %v680 = vrot.slane %v678, 5
    %v681 = vsel %vm122, %v676, %v680
    %v683 = vshrl.u32 %v530, 16
    %v685 = vrot.slane %v683, 4
    %v686 = vshll.u32 %v530, 16
    %v688 = vrot.slane %v686, 5
    %v689 = vor.u32 %v685, %v688
    %v690 = vrot.slane %v689, 4
    %v692 = vshll.u32 %v531, 16
    %v694 = vrot.slane %v692, 5
    %v695 = vsel %vm122, %v690, %v694
    %v697 = vshrl.u32 %v532, 16
    %v699 = vrot.slane %v697, 4
    %v700 = vshll.u32 %v532, 16
    %v702 = vrot.slane %v700, 5
    %v703 = vor.u32 %v699, %v702
    %v704 = vrot.slane %v703, 4
    %v706 = vshll.u32 %v533, 16
    %v708 = vrot.slane %v706, 5
    %v709 = vsel %vm122, %v704, %v708
    %v711 = vshrl.u32 %v534, 16
    %v713 = vrot.slane %v711, 4
    %v714 = vshll.u32 %v534, 16
    %v716 = vrot.slane %v714, 5
    %v717 = vor.u32 %v713, %v716
    %v718 = vrot.slane %v717, 4
    %v720 = vshll.u32 %v535, 16
    %v722 = vrot.slane %v720, 5
    %v723 = vsel %vm122, %v718, %v722
    %v725 = vshrl.u32 %v536, 16
    %v727 = vrot.slane %v725, 4
    %v728 = vshll.u32 %v536, 16
    %v730 = vrot.slane %v728, 5
    %v731 = vor.u32 %v727, %v730
    %v732 = vrot.slane %v731, 4
    %v734 = vshll.u32 %v537, 16
    %v736 = vrot.slane %v734, 5
    %v737 = vsel %vm122, %v732, %v736
    %v739 = vshrl.u32 %v538, 16
    %v741 = vrot.slane %v739, 4
    %v742 = vshll.u32 %v538, 16
    %v744 = vrot.slane %v742, 5
    %v745 = vor.u32 %v741, %v744
    %v746 = vrot.slane %v745, 4
    %v748 = vshll.u32 %v539, 16
    %v750 = vrot.slane %v748, 5
    %v751 = vsel %vm122, %v746, %v750
    %v753 = vshrl.u32 %v540, 16
    %v755 = vrot.slane %v753, 4
    %v756 = vshll.u32 %v540, 16
    %v758 = vrot.slane %v756, 5
    %v759 = vor.u32 %v755, %v758
    %v760 = vrot.slane %v759, 4
    %v762 = vshll.u32 %v541, 16
    %v764 = vrot.slane %v762, 5
    %v765 = vsel %vm122, %v760, %v764
    %766 = vrot.lane.b32.xlu0 %v555, 12
    %v767 = vpop.permute.xlu0 %766
    %768 = vrot.lane.b32.xlu0 %v569, 12
    %v769 = vpop.permute.xlu0 %768
    %770 = vrot.lane.b32.xlu0 %v583, 12
    %v771 = vpop.permute.xlu0 %770
    %772 = vrot.lane.b32.xlu0 %v597, 12
    %v773 = vpop.permute.xlu0 %772
    %774 = vrot.lane.b32.xlu0 %v611, 12
    %v775 = vpop.permute.xlu0 %774
    %776 = vrot.lane.b32.xlu0 %v625, 12
    %v777 = vpop.permute.xlu0 %776
    %778 = vrot.lane.b32.xlu0 %v639, 12
    %v779 = vpop.permute.xlu0 %778
    %780 = vrot.lane.b32.xlu0 %v653, 12
    %v781 = vpop.permute.xlu0 %780
    %782 = vrot.lane.b32.xlu0 %v667, 12
    %v783 = vpop.permute.xlu0 %782
    %784 = vrot.lane.b32.xlu0 %v681, 12
    %v785 = vpop.permute.xlu0 %784
    %786 = vrot.lane.b32.xlu0 %v695, 12
    %v787 = vpop.permute.xlu0 %786
    %788 = vrot.lane.b32.xlu0 %v709, 12
    %v789 = vpop.permute.xlu0 %788
    %790 = vrot.lane.b32.xlu0 %v723, 12
    %v791 = vpop.permute.xlu0 %790
    %792 = vrot.lane.b32.xlu0 %v737, 12
    %v793 = vpop.permute.xlu0 %792
    %794 = vrot.lane.b32.xlu0 %v751, 12
    %v795 = vpop.permute.xlu0 %794
    %796 = vrot.lane.b32.xlu0 %v765, 12
    %v797 = vpop.permute.xlu0 %796
    %vm814 = vcmask 126048
    %815 = vst.msk [vmem:[#allocation2] sm:$0xf] %vm814, %v767
    %816 = vst.msk [vmem:[#allocation2 + $0x4] sm:$0xf] %vm814, %v769
    %817 = vst.msk [vmem:[#allocation2 + $0x8] sm:$0xf] %vm814, %v771
    %818 = vst.msk [vmem:[#allocation2 + $0xc] sm:$0xf] %vm814, %v773
    %819 = vst.msk [vmem:[#allocation2 + $0x10] sm:$0xf] %vm814, %v775
    %820 = vst.msk [vmem:[#allocation2 + $0x14] sm:$0xf] %vm814, %v777
    %821 = vst.msk [vmem:[#allocation2 + $0x18] sm:$0xf] %vm814, %v779
    %822 = vst.msk [vmem:[#allocation2 + $0x1c] sm:$0xf] %vm814, %v781
    %823 = vst.msk [vmem:[#allocation2 + $0x20] sm:$0xf] %vm814, %v783
    %824 = vst.msk [vmem:[#allocation2 + $0x24] sm:$0xf] %vm814, %v785
    %825 = vst.msk [vmem:[#allocation2 + $0x28] sm:$0xf] %vm814, %v787
    %826 = vst.msk [vmem:[#allocation2 + $0x2c] sm:$0xf] %vm814, %v789
    %827 = vst.msk [vmem:[#allocation2 + $0x30] sm:$0xf] %vm814, %v791
    %828 = vst.msk [vmem:[#allocation2 + $0x34] sm:$0xf] %vm814, %v793
    %829 = vst.msk [vmem:[#allocation2 + $0x38] sm:$0xf] %vm814, %v795
    %830 = vst.msk [vmem:[#allocation2 + $0x3c] sm:$0xf] %vm814, %v797
    %v831 = vld [vmem:[#allocation2] sm:$0xf]
    %v832 = vld [vmem:[#allocation2 + $0x4] sm:$0xf]
    %v833 = vld [vmem:[#allocation2 + $0x8] sm:$0xf]
    %v834 = vld [vmem:[#allocation2 + $0xc] sm:$0xf]
    %v835 = vld [vmem:[#allocation2 + $0x10] sm:$0xf]
    %v836 = vld [vmem:[#allocation2 + $0x14] sm:$0xf]
    %v837 = vld [vmem:[#allocation2 + $0x18] sm:$0xf]
    %v838 = vld [vmem:[#allocation2 + $0x1c] sm:$0xf]
    %v839 = vld [vmem:[#allocation2 + $0x20] sm:$0xf]
    %v840 = vld [vmem:[#allocation2 + $0x24] sm:$0xf]
    %v841 = vld [vmem:[#allocation2 + $0x28] sm:$0xf]
    %v842 = vld [vmem:[#allocation2 + $0x2c] sm:$0xf]
    %v843 = vld [vmem:[#allocation2 + $0x30] sm:$0xf]
    %v844 = vld [vmem:[#allocation2 + $0x34] sm:$0xf]
    %v845 = vld [vmem:[#allocation2 + $0x38] sm:$0xf]
    %v846 = vld [vmem:[#allocation2 + $0x3c] sm:$0xf]
    %v847 = vld [vmem:[#allocation6] sm:$0xf]
    %v848 = vld [vmem:[#allocation6 + $0x4] sm:$0xf]
    %v849 = vld [vmem:[#allocation8] sm:$0x1]
    %v851 = vlaneseq
    %v852 = vshrl.u32 %v851, 7
    %v853 = vsub.s32 0, %v852
    %v854 = vrot.slane %v849, %v853
    %v872 = vunpack.c.l.b16 %v831
    %v873 = vunpack.c.l.b16 %v832
    %v874 = vunpack.c.l.b16 %v833
    %v875 = vunpack.c.l.b16 %v834
    %v876 = vunpack.c.l.b16 %v835
    %v877 = vunpack.c.l.b16 %v836
    %v878 = vunpack.c.l.b16 %v837
    %v879 = vunpack.c.l.b16 %v838
    %v880 = vunpack.c.l.b16 %v839
    %v881 = vunpack.c.l.b16 %v840
    %v882 = vunpack.c.l.b16 %v841
    %v883 = vunpack.c.l.b16 %v842
    %v884 = vunpack.c.l.b16 %v843
    %v885 = vunpack.c.l.b16 %v844
    %v886 = vunpack.c.l.b16 %v845
    %v887 = vunpack.c.l.b16 %v846
    %v888 = vpack.c.b16 %v873, %v872
    %v889 = vpack.c.b16 %v875, %v874
    %v890 = vpack.c.b16 %v877, %v876
    %v891 = vpack.c.b16 %v879, %v878
    %v892 = vpack.c.b16 %v881, %v880
    %v893 = vpack.c.b16 %v883, %v882
    %v894 = vpack.c.b16 %v885, %v884
    %v895 = vpack.c.b16 %v887, %v886
    %v898 = vunpack.c.l.b16 %v847
    %v899 = vunpack.c.l.b16 %v848
    %v900 = vpack.c.b16 %v899, %v898
    %vm902 = vcmask 130048
    %v904 = vsel %vm902, %v888, 0
    %v907 = vsel %vm902, %v889, 0
    %v910 = vsel %vm902, %v890, 0
    %v913 = vsel %vm902, %v891, 0
    %v916 = vsel %vm902, %v892, 0
    %v919 = vsel %vm902, %v893, 0
    %v922 = vsel %vm902, %v894, 0
    %v925 = vsel %vm902, %v895, 0
    %927 = vmatprep.subr.bf16.mxu0 0
    %928 = vmatpush1.bf16.msra.mxu0 %v900
    %929 = vmatprep.subr.bf16.mxu0 0
    %930 = vmatpush1.bf16.msra.mxu0 0
    %931 = vmatprep.subr.bf16.mxu0 0
    %932 = vmatpush1.bf16.msra.mxu0 0
    %933 = vmatprep.subr.bf16.mxu0 0
    %934 = vmatpush1.bf16.msra.mxu0 0
    %935 = vmatprep.subr.bf16.mxu0 0
    %936 = vmatpush1.bf16.msra.mxu0 0
    %937 = vmatprep.subr.bf16.mxu0 0
    %938 = vmatpush1.bf16.msra.mxu0 0
    %939 = vmatprep.subr.bf16.mxu0 0
    %940 = vmatpush1.bf16.msra.mxu0 0
    %941 = vmatprep.subr.bf16.mxu0 0
    %942 = vmatpush1.bf16.msra.mxu0 0
    %943 = vmatprep.subr.bf16.mxu0 0
    %944 = vmatpush1.bf16.msra.mxu0 0
    %945 = vmatprep.subr.bf16.mxu0 0
    %946 = vmatpush1.bf16.msra.mxu0 0
    %947 = vmatprep.subr.bf16.mxu0 0
    %948 = vmatpush1.bf16.msra.mxu0 0
    %949 = vmatprep.subr.bf16.mxu0 0
    %950 = vmatpush1.bf16.msra.mxu0 0
    %951 = vmatprep.subr.bf16.mxu0 0
    %952 = vmatpush1.bf16.msra.mxu0 0
    %953 = vmatprep.subr.bf16.mxu0 0
    %954 = vmatpush1.bf16.msra.mxu0 0
    %955 = vmatprep.subr.bf16.mxu0 0
    %956 = vmatpush1.bf16.msra.mxu0 0
    %957 = vmatprep.subr.bf16.mxu0 0
    %958 = vmatpush1.bf16.msra.mxu0 0
    %959 = vmatprep.mubr.bf16.mxu0 0
    %960 = vmatmul.mubr.bf16.gmra.mrb[0].mxu0 %v904
    %v961 = vpop.f32.mrb[0].mxu0
    %v962 = vadd.f32 %v854, %v961
    %v963 = vpop.f32.mrb[0].mxu0
    %v964 = vpop.f32.mrb[0].mxu0
    %v965 = vadd.f32 %v854, %v964
    %v966 = vpop.f32.mrb[0].mxu0
    %967 = vmatprep.mubr.bf16.mxu0 0
    %968 = vmatmul.mubr.bf16.gmra.mrb[0].mxu0 %v907
    %v969 = vpop.f32.mrb[0].mxu0
    %v970 = vadd.f32 %v854, %v969
    %v971 = vpop.f32.mrb[0].mxu0
    %v972 = vpop.f32.mrb[0].mxu0
    %v973 = vadd.f32 %v854, %v972
    %v974 = vpop.f32.mrb[0].mxu0
    %975 = vmatprep.mubr.bf16.mxu0 0
    %976 = vmatmul.mubr.bf16.gmra.mrb[0].mxu0 %v910
    %v977 = vpop.f32.mrb[0].mxu0
    %v978 = vadd.f32 %v854, %v977
    %v979 = vpop.f32.mrb[0].mxu0
    %v980 = vpop.f32.mrb[0].mxu0
    %v981 = vadd.f32 %v854, %v980
    %v982 = vpop.f32.mrb[0].mxu0
    %983 = vmatprep.mubr.bf16.mxu0 0
    %984 = vmatmul.mubr.bf16.gmra.mrb[0].mxu0 %v913
    %v985 = vpop.f32.mrb[0].mxu0
    %v986 = vadd.f32 %v854, %v985
    %v987 = vpop.f32.mrb[0].mxu0
    %v988 = vpop.f32.mrb[0].mxu0
    %v989 = vadd.f32 %v854, %v988
    %v990 = vpop.f32.mrb[0].mxu0
    %991 = vmatprep.mubr.bf16.mxu0 0
    %992 = vmatmul.mubr.bf16.gmra.mrb[0].mxu0 %v916
    %v993 = vpop.f32.mrb[0].mxu0
    %v994 = vadd.f32 %v854, %v993
    %v995 = vpop.f32.mrb[0].mxu0
    %v996 = vpop.f32.mrb[0].mxu0
    %v997 = vadd.f32 %v854, %v996
    %v998 = vpop.f32.mrb[0].mxu0
    %999 = vmatprep.mubr.bf16.mxu0 0
    %1000 = vmatmul.mubr.bf16.gmra.mrb[0].mxu0 %v919
    %v1001 = vpop.f32.mrb[0].mxu0
    %v1002 = vadd.f32 %v854, %v1001
    %v1003 = vpop.f32.mrb[0].mxu0
    %v1004 = vpop.f32.mrb[0].mxu0
    %v1005 = vadd.f32 %v854, %v1004
    %v1006 = vpop.f32.mrb[0].mxu0
    %1007 = vmatprep.mubr.bf16.mxu0 0
    %1008 = vmatmul.mubr.bf16.gmra.mrb[0].mxu0 %v922
    %v1009 = vpop.f32.mrb[0].mxu0
    %v1010 = vadd.f32 %v854, %v1009
    %v1011 = vpop.f32.mrb[0].mxu0
    %v1012 = vpop.f32.mrb[0].mxu0
    %v1013 = vadd.f32 %v854, %v1012
    %v1014 = vpop.f32.mrb[0].mxu0
    %1015 = vmatprep.mubr.bf16.mxu0 0
    %1016 = vmatmul.mubr.bf16.gmra.mrb[0].mxu0 %v925
    %v1017 = vpop.f32.mrb[0].mxu0
    %v1018 = vadd.f32 %v854, %v1017
    %v1019 = vpop.f32.mrb[0].mxu0
    %v1020 = vpop.f32.mrb[0].mxu0
    %v1021 = vadd.f32 %v854, %v1020
    %v1022 = vpop.f32.mrb[0].mxu0
    %1023 = vdwg.mxu0
    %v1024 = vmax.f32 %v962, 0.0
    %v1025 = vmax.f32 %v965, 0.0
    %v1026 = vmax.f32 %v970, 0.0
    %v1027 = vmax.f32 %v973, 0.0
    %v1028 = vmax.f32 %v978, 0.0
    %v1029 = vmax.f32 %v981, 0.0
    %v1030 = vmax.f32 %v986, 0.0
    %v1031 = vmax.f32 %v989, 0.0
    %v1032 = vmax.f32 %v994, 0.0
    %v1033 = vmax.f32 %v997, 0.0
    %v1034 = vmax.f32 %v1002, 0.0
    %v1035 = vmax.f32 %v1005, 0.0
    %v1036 = vmax.f32 %v1010, 0.0
    %v1037 = vmax.f32 %v1013, 0.0
    %v1038 = vmax.f32 %v1018, 0.0
    %v1039 = vmax.f32 %v1021, 0.0
    %v1040 = vpack.c.bf16 %v1025, %v1024
    %v1041 = vpack.c.bf16 %v1027, %v1026
    %v1042 = vpack.c.bf16 %v1029, %v1028
    %v1043 = vpack.c.bf16 %v1031, %v1030
    %v1044 = vpack.c.bf16 %v1033, %v1032
    %v1045 = vpack.c.bf16 %v1035, %v1034
    %v1046 = vpack.c.bf16 %v1037, %v1036
    %v1047 = vpack.c.bf16 %v1039, %v1038
    %v1056 = vunpack.c.l.b16 %v1040
    %v1057 = vunpack.c.h.b16 %v1040
    %v1058 = vunpack.c.l.b16 %v1041
    %v1059 = vunpack.c.h.b16 %v1041
    %v1060 = vunpack.c.l.b16 %v1042
    %v1061 = vunpack.c.h.b16 %v1042
    %v1062 = vunpack.c.l.b16 %v1043
    %v1063 = vunpack.c.h.b16 %v1043
    %v1064 = vunpack.c.l.b16 %v1044
    %v1065 = vunpack.c.h.b16 %v1044
    %v1066 = vunpack.c.l.b16 %v1045
    %v1067 = vunpack.c.h.b16 %v1045
    %v1068 = vunpack.c.l.b16 %v1046
    %v1069 = vunpack.c.h.b16 %v1046
    %v1070 = vunpack.c.l.b16 %v1047
    %v1071 = vunpack.c.h.b16 %v1047
    %v1072 = vpack.c.b16 %v1056, %v1056
    %v1073 = vpack.c.b16 %v1057, %v1057
    %v1074 = vpack.c.b16 %v1058, %v1058
    %v1075 = vpack.c.b16 %v1059, %v1059
    %v1076 = vpack.c.b16 %v1060, %v1060
    %v1077 = vpack.c.b16 %v1061, %v1061
    %v1078 = vpack.c.b16 %v1062, %v1062
    %v1079 = vpack.c.b16 %v1063, %v1063
    %v1080 = vpack.c.b16 %v1064, %v1064
    %v1081 = vpack.c.b16 %v1065, %v1065
    %v1082 = vpack.c.b16 %v1066, %v1066
    %v1083 = vpack.c.b16 %v1067, %v1067
    %v1084 = vpack.c.b16 %v1068, %v1068
    %v1085 = vpack.c.b16 %v1069, %v1069
    %v1086 = vpack.c.b16 %v1070, %v1070
    %v1087 = vpack.c.b16 %v1071, %v1071
    %1104 = vst [vmem:[#allocation9] sm:$0xf] %v1072
    %1105 = vst [vmem:[#allocation9 + $0x4] sm:$0xf] %v1073
    %1106 = vst [vmem:[#allocation9 + $0x8] sm:$0xf] %v1074
    %1107 = vst [vmem:[#allocation9 + $0xc] sm:$0xf] %v1075
    %1108 = vst [vmem:[#allocation9 + $0x10] sm:$0xf] %v1076
    %1109 = vst [vmem:[#allocation9 + $0x14] sm:$0xf] %v1077
    %1110 = vst [vmem:[#allocation9 + $0x18] sm:$0xf] %v1078
    %1111 = vst [vmem:[#allocation9 + $0x1c] sm:$0xf] %v1079
    %1112 = vst [vmem:[#allocation9 + $0x20] sm:$0xf] %v1080
    %1113 = vst [vmem:[#allocation9 + $0x24] sm:$0xf] %v1081
    %1114 = vst [vmem:[#allocation9 + $0x28] sm:$0xf] %v1082
    %1115 = vst [vmem:[#allocation9 + $0x2c] sm:$0xf] %v1083
    %1116 = vst [vmem:[#allocation9 + $0x30] sm:$0xf] %v1084
    %1117 = vst [vmem:[#allocation9 + $0x34] sm:$0xf] %v1085
    %1118 = vst [vmem:[#allocation9 + $0x38] sm:$0xf] %v1086
    %1119 = vst [vmem:[#allocation9 + $0x3c] sm:$0xf] %v1087
    // Predicated region
    $region26: #{_lambda_.4} parent=1 // pred_check
      _
    $region27: #{_lambda_.4} parent=1 // pred_check_branch
      %1121 = sbr.rel (0) target = $region29
    $region28: #{_lambda_.4} parent=1 // pred_region
      %s1123 = ssub.s32 1024, 1024
      %1124 = vsyncadd [#allocation5], %s1123
      %s1125 = sshll.u32 [#allocation9], 4
      %s1126 = int_to_ptr.vmem [resolvable:$true] %s1125
      %1131 = dma.vmem_to_hbm [thread:$0]  %s1126, 1024, %s3, [#allocation5], 64, 64, 4
    $region29: #{_lambda_.4} parent=1 // pred_fallthru
      _
    // Predicated region
    $region30: #{_lambda_.4} parent=1 // pred_check
      _
    $region31: #{_lambda_.4} parent=1 // pred_check_branch
      %1133 = sbr.rel (0) target = $region33
    $region32: #{_lambda_.4} parent=1 // pred_region
      %1134 = dma.done [#allocation5], 1024
    $region33: #{_lambda_.4} parent=1 // pred_fallthru
      _
    %1135 = vsyncpa [#allocation4], 1
    %1136 = vsyncpa [#allocation7], 1
    %1137 = vsyncpa [#allocation5], 1

// kernel: _lambda_.6
$region0: #{_lambda_.6}
  #allocation0 [shape = 'u32[]', space=smem, size = 0x4, offset = 0x4, fixed_abs, tag = 'smem constant byte address 0x4 - core index']
  #allocation1 [shape = 'u32[144,128]{1,0:T(1,128)}', space=vmem, size = 0x12000, scoped, tag = 'internal scratch']
  #allocation2 [shape = 'bf16[2,4,4,32]{3,2,1,0:T(4,128)(2,1)}', space=vmem, size = 0x2000, scoped, tag = 'scratch operand']
  %s0 = inlined_call_operand.hbm [shape: bf16[2,5,5,8], index: 0, kind: input, shape index: {}]
  %s1 = inlined_call_operand.hbm [shape: bf16[32,128], index: 1, kind: input, shape index: {}]
  %s2 = inlined_call_operand.hbm [shape: f32[1,128], index: 2, kind: input, shape index: {}]
  %s3 = inlined_call_operand.hbm [shape: bf16[32,128], index: 3, kind: output, shape index: {}]
  %s4 = sld [smem:[#allocation0]]
  $region34: #{_lambda_.6} parent=0
    _
  %s6 = ssub.s32 1, %s4
  %s7 = scalar_select 0, %s6, %s4
  $region1: #{_lambda_.6} parent=0
    #allocation3 [shape = 'u8[20480]{0}', space=vmem, size = 0x5000, scoped, tag = 'input window, operand 0, single buffered']
    #allocation4 [shape = 's32[1]{0}', space=sflag, size = 0x4, scoped, tag = 'scoped memory for _lambda_.6']
    #allocation5 [shape = 's32[1]{0}', space=sflag, size = 0x4, scoped, tag = 'scoped memory for _lambda_.6']
    #allocation6 [shape = 'u8[8192]{0}', space=vmem, size = 0x2000, scoped, tag = 'input window, operand 1, single buffered']
    #allocation7 [shape = 's32[1]{0}', space=sflag, size = 0x4, scoped, tag = 'scoped memory for _lambda_.6']
    #allocation8 [shape = 'u8[512]{0}', space=vmem, size = 0x400, scoped, tag = 'input window, operand 2, single buffered']
    #allocation9 [shape = 'u8[8192]{0}', space=vmem, size = 0x2000, scoped, tag = 'output window, operand 0, single buffered']
    %8 = vsyncpa [#allocation4], 0
    %9 = vsyncpa [#allocation7], 0
    %10 = vsyncpa [#allocation5], 0
    // Predicated region
    $region2: #{_lambda_.6} parent=1 // pred_check
      _
    $region3: #{_lambda_.6} parent=1 // pred_check_branch
      %12 = sbr.rel (0) target = $region5
    $region4: #{_lambda_.6} parent=1 // pred_region
      %s14 = ssub.s32 640, 640
      %15 = vsyncadd [#allocation4], %s14
      %s16 = sshll.u32 [#allocation3], 4
      %s17 = int_to_ptr.vmem [resolvable:$true] %s16
      %22 = dma.hbm_to_vmem [thread:$0]  %s0, 640, %s17, [#allocation4], 64, 64, 4
    $region5: #{_lambda_.6} parent=1 // pred_fallthru
      _
    // Predicated region
    $region6: #{_lambda_.6} parent=1 // pred_check
      _
    $region7: #{_lambda_.6} parent=1 // pred_check_branch
      %24 = sbr.rel (0) target = $region9
    $region8: #{_lambda_.6} parent=1 // pred_region
      %s26 = ssub.s32 256, 256
      %27 = vsyncadd [#allocation7], %s26
      %s28 = sshll.u32 [#allocation6], 4
      %s29 = int_to_ptr.vmem [resolvable:$true] %s28
      %34 = dma.hbm_to_vmem [thread:$0]  %s1, 256, %s29, [#allocation7], 64, 64, 4
    $region9: #{_lambda_.6} parent=1 // pred_fallthru
      _
    // Predicated region
    $region10: #{_lambda_.6} parent=1 // pred_check
      _
    $region11: #{_lambda_.6} parent=1 // pred_check_branch
      %36 = sbr.rel (0) target = $region13
    $region12: #{_lambda_.6} parent=1 // pred_region
      %s38 = ssub.s32 16, 16
      %39 = vsyncadd [#allocation7], %s38
      %s41 = sshll.u32 [#allocation8], 4
      %s42 = int_to_ptr.vmem [resolvable:$true] %s41
      %44 = dma.hbm_to_vmem [thread:$0]  %s2, 16, %s42, [#allocation7]
    $region13: #{_lambda_.6} parent=1 // pred_fallthru
      _
    // Predicated region
    $region14: #{_lambda_.6} parent=1 // pred_check
      _
    $region15: #{_lambda_.6} parent=1 // pred_check_branch
      %46 = sbr.rel (0) target = $region17
    $region16: #{_lambda_.6} parent=1 // pred_region
      %47 = dma.done [#allocation4], 640
    $region17: #{_lambda_.6} parent=1 // pred_fallthru
      _
    // Predicated region
    $region18: #{_lambda_.6} parent=1 // pred_check
      _
    $region19: #{_lambda_.6} parent=1 // pred_check_branch
      %49 = sbr.rel (0) target = $region21
    $region20: #{_lambda_.6} parent=1 // pred_region
      %50 = dma.done [#allocation7], 256
    $region21: #{_lambda_.6} parent=1 // pred_fallthru
      _
    // Predicated region
    $region22: #{_lambda_.6} parent=1 // pred_check
      _
    $region23: #{_lambda_.6} parent=1 // pred_check_branch
      %52 = sbr.rel (0) target = $region25
    $region24: #{_lambda_.6} parent=1 // pred_region
      %53 = dma.done [#allocation7], 16
    $region25: #{_lambda_.6} parent=1 // pred_fallthru
      _
    %v55 = vld [vmem:[#allocation3] sm:$0x3]
    %v56 = vld [vmem:[#allocation3 + $0x4] sm:$0x3]
    %v57 = vld [vmem:[#allocation3 + $0x8] sm:$0x3]
    %v58 = vld [vmem:[#allocation3 + $0xc] sm:$0x3]
    %v59 = vld [vmem:[#allocation3 + $0x14] sm:$0x3]
    %v60 = vld [vmem:[#allocation3 + $0x18] sm:$0x3]
    %v61 = vld [vmem:[#allocation3 + $0x1c] sm:$0x3]
    %v62 = vld [vmem:[#allocation3 + $0x20] sm:$0x3]
    %vm63 = vcmask 58368
    %64 = vst.msk [vmem:[#allocation2] sm:$0x3] %vm63, %v55
    %65 = vst.msk [vmem:[#allocation2 + $0x2] sm:$0x3] %vm63, %v56
    %66 = vst.msk [vmem:[#allocation2 + $0x4] sm:$0x3] %vm63, %v57
    %67 = vst.msk [vmem:[#allocation2 + $0x6] sm:$0x3] %vm63, %v58
    %68 = vst.msk [vmem:[#allocation2 + $0x8] sm:$0x3] %vm63, %v59
    %69 = vst.msk [vmem:[#allocation2 + $0xa] sm:$0x3] %vm63, %v60
    %70 = vst.msk [vmem:[#allocation2 + $0xc] sm:$0x3] %vm63, %v61
    %71 = vst.msk [vmem:[#allocation2 + $0xe] sm:$0x3] %vm63, %v62
    %v72 = vld [vmem:[#allocation3] sm:$0x7]
    %v73 = vld [vmem:[#allocation3 + $0x4] sm:$0x7]
    %v74 = vld [vmem:[#allocation3 + $0x8] sm:$0x7]
    %v75 = vld [vmem:[#allocation3 + $0xc] sm:$0x7]
    %v76 = vld [vmem:[#allocation3 + $0x14] sm:$0x7]
    %v77 = vld [vmem:[#allocation3 + $0x18] sm:$0x7]
    %v78 = vld [vmem:[#allocation3 + $0x1c] sm:$0x7]
    %v79 = vld [vmem:[#allocation3 + $0x20] sm:$0x7]
    %v89 = vunpack.c.l.s4 1983009808
    %v90 = vunpack.c.0.s8 %v89
    %v91 = vlaneseq
    %v92 = vshrl.u32 %v91, 7
    %v93 = vsub.s32 %v90, %v92
    %v94 = vrot.slane %v72, %v93
    %v95 = vcombine.high %v94, %v94
    %v97 = vunpack.c.l.s4 1983009808
    %v98 = vunpack.c.0.s8 %v97
    %v99 = vlaneseq
    %v100 = vshrl.u32 %v99, 7
    %v101 = vsub.s32 %v98, %v100
    %v102 = vrot.slane %v73, %v101
    %v103 = vcombine.high %v102, %v102
    %v105 = vunpack.c.l.s4 1983009808
    %v106 = vunpack.c.0.s8 %v105
    %v107 = vlaneseq
    %v108 = vshrl.u32 %v107, 7
    %v109 = vsub.s32 %v106, %v108
    %v110 = vrot.slane %v74, %v109
    %v111 = vcombine.high %v110, %v110
    %v113 = vunpack.c.l.s4 1983009808
    %v114 = vunpack.c.0.s8 %v113
    %v115 = vlaneseq
    %v116 = vshrl.u32 %v115, 7
    %v117 = vsub.s32 %v114, %v116
    %v118 = vrot.slane %v75, %v117
    %v119 = vcombine.high %v118, %v118
    %v121 = vunpack.c.l.s4 1983009808
    %v122 = vunpack.c.0.s8 %v121
    %v123 = vlaneseq
    %v124 = vshrl.u32 %v123, 7
    %v125 = vsub.s32 %v122, %v124
    %v126 = vrot.slane %v76, %v125
    %v127 = vcombine.high %v126, %v126
    %v129 = vunpack.c.l.s4 1983009808
    %v130 = vunpack.c.0.s8 %v129
    %v131 = vlaneseq
    %v132 = vshrl.u32 %v131, 7
    %v133 = vsub.s32 %v130, %v132
    %v134 = vrot.slane %v77, %v133
    %v135 = vcombine.high %v134, %v134
    %v137 = vunpack.c.l.s4 1983009808
    %v138 = vunpack.c.0.s8 %v137
    %v139 = vlaneseq
    %v140 = vshrl.u32 %v139, 7
    %v141 = vsub.s32 %v138, %v140
    %v142 = vrot.slane %v78, %v141
    %v143 = vcombine.high %v142, %v142
    %v145 = vunpack.c.l.s4 1983009808
    %v146 = vunpack.c.0.s8 %v145
    %v147 = vlaneseq
    %v148 = vshrl.u32 %v147, 7
    %v149 = vsub.s32 %v146, %v148
    %v150 = vrot.slane %v79, %v149
    %v151 = vcombine.high %v150, %v150
    %vm152 = vsmask.f32 1280
    %vm153 = vsmask.f32 3336
    %vm154 = vmor %vm152, %vm153
    %vm155 = vsmask.f32 5392
    %vm156 = vmor %vm154, %vm155
    %vm157 = vsmask.f32 7448
    %vm158 = vmor %vm156, %vm157
    %v160 = vshrl.u32 %v94, 16
    %v162 = vrot.slane %v160, 6
    %v163 = vshll.u32 %v94, 16
    %v165 = vrot.slane %v163, 7
    %v166 = vor.u32 %v162, %v165
    %v167 = vrot.slane %v166, 2
    %v169 = vshll.u32 %v95, 16
    %v171 = vrot.slane %v169, 7
    %v172 = vsel %vm158, %v167, %v171
    %v174 = vshrl.u32 %v102, 16
    %v176 = vrot.slane %v174, 6
    %v177 = vshll.u32 %v102, 16
    %v179 = vrot.slane %v177, 7
    %v180 = vor.u32 %v176, %v179
    %v181 = vrot.slane %v180, 2
    %v183 = vshll.u32 %v103, 16
    %v185 = vrot.slane %v183, 7
    %v186 = vsel %vm158, %v181, %v185
    %v188 = vshrl.u32 %v110, 16
    %v190 = vrot.slane %v188, 6
    %v191 = vshll.u32 %v110, 16
    %v193 = vrot.slane %v191, 7
    %v194 = vor.u32 %v190, %v193
    %v195 = vrot.slane %v194, 2
    %v197 = vshll.u32 %v111, 16
    %v199 = vrot.slane %v197, 7
    %v200 = vsel %vm158, %v195, %v199
    %v202 = vshrl.u32 %v118, 16
    %v204 = vrot.slane %v202, 6
    %v205 = vshll.u32 %v118, 16
    %v207 = vrot.slane %v205, 7
    %v208 = vor.u32 %v204, %v207
    %v209 = vrot.slane %v208, 2
    %v211 = vshll.u32 %v119, 16
    %v213 = vrot.slane %v211, 7
    %v214 = vsel %vm158, %v209, %v213
    %v216 = vshrl.u32 %v126, 16
    %v218 = vrot.slane %v216, 6
    %v219 = vshll.u32 %v126, 16
    %v221 = vrot.slane %v219, 7
    %v222 = vor.u32 %v218, %v221
    %v223 = vrot.slane %v222, 2
    %v225 = vshll.u32 %v127, 16
    %v227 = vrot.slane %v225, 7
    %v228 = vsel %vm158, %v223, %v227
    %v230 = vshrl.u32 %v134, 16
    %v232 = vrot.slane %v230, 6
    %v233 = vshll.u32 %v134, 16
    %v235 = vrot.slane %v233, 7
    %v236 = vor.u32 %v232, %v235
    %v237 = vrot.slane %v236, 2
    %v239 = vshll.u32 %v135, 16
    %v241 = vrot.slane %v239, 7
    %v242 = vsel %vm158, %v237, %v241
    %v244 = vshrl.u32 %v142, 16
    %v246 = vrot.slane %v244, 6
    %v247 = vshll.u32 %v142, 16
    %v249 = vrot.slane %v247, 7
    %v250 = vor.u32 %v246, %v249
    %v251 = vrot.slane %v250, 2
    %v253 = vshll.u32 %v143, 16
    %v255 = vrot.slane %v253, 7
    %v256 = vsel %vm158, %v251, %v255
    %v258 = vshrl.u32 %v150, 16
    %v260 = vrot.slane %v258, 6
    %v261 = vshll.u32 %v150, 16
    %v263 = vrot.slane %v261, 7
    %v264 = vor.u32 %v260, %v263
    %v265 = vrot.slane %v264, 2
    %v267 = vshll.u32 %v151, 16
    %v269 = vrot.slane %v267, 7
    %v270 = vsel %vm158, %v265, %v269
    %271 = vrot.lane.b32.xlu0 %v172, 8
    %v272 = vpop.permute.xlu0 %271
    %273 = vrot.lane.b32.xlu0 %v186, 8
    %v274 = vpop.permute.xlu0 %273
    %275 = vrot.lane.b32.xlu0 %v200, 8
    %v276 = vpop.permute.xlu0 %275
    %277 = vrot.lane.b32.xlu0 %v214, 8
    %v278 = vpop.permute.xlu0 %277
    %279 = vrot.lane.b32.xlu0 %v228, 8
    %v280 = vpop.permute.xlu0 %279
    %281 = vrot.lane.b32.xlu0 %v242, 8
    %v282 = vpop.permute.xlu0 %281
    %283 = vrot.lane.b32.xlu0 %v256, 8
    %v284 = vpop.permute.xlu0 %283
    %285 = vrot.lane.b32.xlu0 %v270, 8
    %v286 = vpop.permute.xlu0 %285
    %vm295 = vcmask 123968
    %296 = vst.msk [vmem:[#allocation2] sm:$0x3] %vm295, %v272
    %297 = vst.msk [vmem:[#allocation2 + $0x2] sm:$0x3] %vm295, %v274
    %298 = vst.msk [vmem:[#allocation2 + $0x4] sm:$0x3] %vm295, %v276
    %299 = vst.msk [vmem:[#allocation2 + $0x6] sm:$0x3] %vm295, %v278
    %300 = vst.msk [vmem:[#allocation2 + $0x8] sm:$0x3] %vm295, %v280
    %301 = vst.msk [vmem:[#allocation2 + $0xa] sm:$0x3] %vm295, %v282
    %302 = vst.msk [vmem:[#allocation2 + $0xc] sm:$0x3] %vm295, %v284
    %303 = vst.msk [vmem:[#allocation2 + $0xe] sm:$0x3] %vm295, %v286
    %s304 = scalar_lea.vmem [#allocation3], 4
    %v305 = vld [vmem:[%s304] sm:$0x3]
    %v306 = vld [vmem:[%s304 + $0x4] sm:$0x3]
    %v307 = vld [vmem:[%s304 + $0x8] sm:$0x3]
    %v308 = vld [vmem:[%s304 + $0xc] sm:$0x3]
    %v309 = vld [vmem:[%s304 + $0x14] sm:$0x3]
    %v310 = vld [vmem:[%s304 + $0x18] sm:$0x3]
    %v311 = vld [vmem:[%s304 + $0x1c] sm:$0x3]
    %v312 = vld [vmem:[%s304 + $0x20] sm:$0x3]
    %v322 = vunpack.c.l.s4 1983009808
    %v323 = vunpack.c.0.s8 %v322
    %v324 = vlaneseq
    %v325 = vshrl.u32 %v324, 7
    %v326 = vsub.s32 %v323, %v325
    %v327 = vrot.slane %v305, %v326
    %v329 = vunpack.c.l.s4 1983009808
    %v330 = vunpack.c.0.s8 %v329
    %v331 = vlaneseq
    %v332 = vshrl.u32 %v331, 7
    %v333 = vsub.s32 %v330, %v332
    %v334 = vrot.slane %v306, %v333
    %v336 = vunpack.c.l.s4 1983009808
    %v337 = vunpack.c.0.s8 %v336
    %v338 = vlaneseq
    %v339 = vshrl.u32 %v338, 7
    %v340 = vsub.s32 %v337, %v339
    %v341 = vrot.slane %v307, %v340
    %v343 = vunpack.c.l.s4 1983009808
    %v344 = vunpack.c.0.s8 %v343
    %v345 = vlaneseq
    %v346 = vshrl.u32 %v345, 7
    %v347 = vsub.s32 %v344, %v346
    %v348 = vrot.slane %v308, %v347
    %v350 = vunpack.c.l.s4 1983009808
    %v351 = vunpack.c.0.s8 %v350
    %v352 = vlaneseq
    %v353 = vshrl.u32 %v352, 7
    %v354 = vsub.s32 %v351, %v353
    %v355 = vrot.slane %v309, %v354
    %v357 = vunpack.c.l.s4 1983009808
    %v358 = vunpack.c.0.s8 %v357
    %v359 = vlaneseq
    %v360 = vshrl.u32 %v359, 7
    %v361 = vsub.s32 %v358, %v360
    %v362 = vrot.slane %v310, %v361
    %v364 = vunpack.c.l.s4 1983009808
    %v365 = vunpack.c.0.s8 %v364
    %v366 = vlaneseq
    %v367 = vshrl.u32 %v366, 7
    %v368 = vsub.s32 %v365, %v367
    %v369 = vrot.slane %v311, %v368
    %v371 = vunpack.c.l.s4 1983009808
    %v372 = vunpack.c.0.s8 %v371
    %v373 = vlaneseq
    %v374 = vshrl.u32 %v373, 7
    %v375 = vsub.s32 %v372, %v374
    %v376 = vrot.slane %v312, %v375
    %377 = vrot.lane.b32.xlu0 %v327, 16
    %v378 = vpop.permute.xlu0 %377
    %379 = vrot.lane.b32.xlu0 %v334, 16
    %v380 = vpop.permute.xlu0 %379
    %381 = vrot.lane.b32.xlu0 %v341, 16
    %v382 = vpop.permute.xlu0 %381
    %383 = vrot.lane.b32.xlu0 %v348, 16
    %v384 = vpop.permute.xlu0 %383
    %385 = vrot.lane.b32.xlu0 %v355, 16
    %v386 = vpop.permute.xlu0 %385
    %387 = vrot.lane.b32.xlu0 %v362, 16
    %v388 = vpop.permute.xlu0 %387
    %389 = vrot.lane.b32.xlu0 %v369, 16
    %v390 = vpop.permute.xlu0 %389
    %391 = vrot.lane.b32.xlu0 %v376, 16
    %v392 = vpop.permute.xlu0 %391
    %vm401 = vcmask 189568
    %402 = vst.msk [vmem:[#allocation2] sm:$0x3] %vm401, %v378
    %403 = vst.msk [vmem:[#allocation2 + $0x2] sm:$0x3] %vm401, %v380
    %404 = vst.msk [vmem:[#allocation2 + $0x4] sm:$0x3] %vm401, %v382
    %405 = vst.msk [vmem:[#allocation2 + $0x6] sm:$0x3] %vm401, %v384
    %406 = vst.msk [vmem:[#allocation2 + $0x8] sm:$0x3] %vm401, %v386
    %407 = vst.msk [vmem:[#allocation2 + $0xa] sm:$0x3] %vm401, %v388
    %408 = vst.msk [vmem:[#allocation2 + $0xc] sm:$0x3] %vm401, %v390
    %409 = vst.msk [vmem:[#allocation2 + $0xe] sm:$0x3] %vm401, %v392
    %v410 = vld [vmem:[%s304] sm:$0x7]
    %v411 = vld [vmem:[%s304 + $0x4] sm:$0x7]
    %v412 = vld [vmem:[%s304 + $0x8] sm:$0x7]
    %v413 = vld [vmem:[%s304 + $0xc] sm:$0x7]
    %v414 = vld [vmem:[%s304 + $0x14] sm:$0x7]
    %v415 = vld [vmem:[%s304 + $0x18] sm:$0x7]
    %v416 = vld [vmem:[%s304 + $0x1c] sm:$0x7]
    %v417 = vld [vmem:[%s304 + $0x20] sm:$0x7]
    %v427 = vunpack.c.l.s4 1983009808
    %v428 = vunpack.c.0.s8 %v427
    %v429 = vlaneseq
    %v430 = vshrl.u32 %v429, 7
    %v431 = vsub.s32 %v428, %v430
    %v432 = vrot.slane %v410, %v431
    %v433 = vcombine.high %v432, %v432
    %v435 = vunpack.c.l.s4 1983009808
    %v436 = vunpack.c.0.s8 %v435
    %v437 = vlaneseq
    %v438 = vshrl.u32 %v437, 7
    %v439 = vsub.s32 %v436, %v438
    %v440 = vrot.slane %v411, %v439
    %v441 = vcombine.high %v440, %v440
    %v443 = vunpack.c.l.s4 1983009808
    %v444 = vunpack.c.0.s8 %v443
    %v445 = vlaneseq
    %v446 = vshrl.u32 %v445, 7
    %v447 = vsub.s32 %v444, %v446
    %v448 = vrot.slane %v412, %v447
    %v449 = vcombine.high %v448, %v448
    %v451 = vunpack.c.l.s4 1983009808
    %v452 = vunpack.c.0.s8 %v451
    %v453 = vlaneseq
    %v454 = vshrl.u32 %v453, 7
    %v455 = vsub.s32 %v452, %v454
    %v456 = vrot.slane %v413, %v455
    %v457 = vcombine.high %v456, %v456
    %v459 = vunpack.c.l.s4 1983009808
    %v460 = vunpack.c.0.s8 %v459
    %v461 = vlaneseq
    %v462 = vshrl.u32 %v461, 7
    %v463 = vsub.s32 %v460, %v462
    %v464 = vrot.slane %v414, %v463
    %v465 = vcombine.high %v464, %v464
    %v467 = vunpack.c.l.s4 1983009808
    %v468 = vunpack.c.0.s8 %v467
    %v469 = vlaneseq
    %v470 = vshrl.u32 %v469, 7
    %v471 = vsub.s32 %v468, %v470
    %v472 = vrot.slane %v415, %v471
    %v473 = vcombine.high %v472, %v472
    %v475 = vunpack.c.l.s4 1983009808
    %v476 = vunpack.c.0.s8 %v475
    %v477 = vlaneseq
    %v478 = vshrl.u32 %v477, 7
    %v479 = vsub.s32 %v476, %v478
    %v480 = vrot.slane %v416, %v479
    %v481 = vcombine.high %v480, %v480
    %v483 = vunpack.c.l.s4 1983009808
    %v484 = vunpack.c.0.s8 %v483
    %v485 = vlaneseq
    %v486 = vshrl.u32 %v485, 7
    %v487 = vsub.s32 %v484, %v486
    %v488 = vrot.slane %v417, %v487
    %v489 = vcombine.high %v488, %v488
    %v491 = vshrl.u32 %v432, 16
    %v493 = vrot.slane %v491, 6
    %v494 = vshll.u32 %v432, 16
    %v496 = vrot.slane %v494, 7
    %v497 = vor.u32 %v493, %v496
    %v498 = vrot.slane %v497, 2
    %v500 = vshll.u32 %v433, 16
    %v502 = vrot.slane %v500, 7
    %v503 = vsel %vm158, %v498, %v502
    %v505 = vshrl.u32 %v440, 16
    %v507 = vrot.slane %v505, 6
    %v508 = vshll.u32 %v440, 16
    %v510 = vrot.slane %v508, 7
    %v511 = vor.u32 %v507, %v510
    %v512 = vrot.slane %v511, 2
    %v514 = vshll.u32 %v441, 16
    %v516 = vrot.slane %v514, 7
    %v517 = vsel %vm158, %v512, %v516
    %v519 = vshrl.u32 %v448, 16
    %v521 = vrot.slane %v519, 6
    %v522 = vshll.u32 %v448, 16
    %v524 = vrot.slane %v522, 7
    %v525 = vor.u32 %v521, %v524
    %v526 = vrot.slane %v525, 2
    %v528 = vshll.u32 %v449, 16
    %v530 = vrot.slane %v528, 7
    %v531 = vsel %vm158, %v526, %v530
    %v533 = vshrl.u32 %v456, 16
    %v535 = vrot.slane %v533, 6
    %v536 = vshll.u32 %v456, 16
    %v538 = vrot.slane %v536, 7
    %v539 = vor.u32 %v535, %v538
    %v540 = vrot.slane %v539, 2
    %v542 = vshll.u32 %v457, 16
    %v544 = vrot.slane %v542, 7
    %v545 = vsel %vm158, %v540, %v544
    %v547 = vshrl.u32 %v464, 16
    %v549 = vrot.slane %v547, 6
    %v550 = vshll.u32 %v464, 16
    %v552 = vrot.slane %v550, 7
    %v553 = vor.u32 %v549, %v552
    %v554 = vrot.slane %v553, 2
    %v556 = vshll.u32 %v465, 16
    %v558 = vrot.slane %v556, 7
    %v559 = vsel %vm158, %v554, %v558
    %v561 = vshrl.u32 %v472, 16
    %v563 = vrot.slane %v561, 6
    %v564 = vshll.u32 %v472, 16
    %v566 = vrot.slane %v564, 7
    %v567 = vor.u32 %v563, %v566
    %v568 = vrot.slane %v567, 2
    %v570 = vshll.u32 %v473, 16
    %v572 = vrot.slane %v570, 7
    %v573 = vsel %vm158, %v568, %v572
    %v575 = vshrl.u32 %v480, 16
    %v577 = vrot.slane %v575, 6
    %v578 = vshll.u32 %v480, 16
    %v580 = vrot.slane %v578, 7
    %v581 = vor.u32 %v577, %v580
    %v582 = vrot.slane %v581, 2
    %v584 = vshll.u32 %v481, 16
    %v586 = vrot.slane %v584, 7
    %v587 = vsel %vm158, %v582, %v586
    %v589 = vshrl.u32 %v488, 16
    %v591 = vrot.slane %v589, 6
    %v592 = vshll.u32 %v488, 16
    %v594 = vrot.slane %v592, 7
    %v595 = vor.u32 %v591, %v594
    %v596 = vrot.slane %v595, 2
    %v598 = vshll.u32 %v489, 16
    %v600 = vrot.slane %v598, 7
    %v601 = vsel %vm158, %v596, %v600
    %602 = vrot.lane.b32.xlu0 %v503, 24
    %v603 = vpop.permute.xlu0 %602
    %604 = vrot.lane.b32.xlu0 %v517, 24
    %v605 = vpop.permute.xlu0 %604
    %606 = vrot.lane.b32.xlu0 %v531, 24
    %v607 = vpop.permute.xlu0 %606
    %608 = vrot.lane.b32.xlu0 %v545, 24
    %v609 = vpop.permute.xlu0 %608
    %610 = vrot.lane.b32.xlu0 %v559, 24
    %v611 = vpop.permute.xlu0 %610
    %612 = vrot.lane.b32.xlu0 %v573, 24
    %v613 = vpop.permute.xlu0 %612
    %614 = vrot.lane.b32.xlu0 %v587, 24
    %v615 = vpop.permute.xlu0 %614
    %616 = vrot.lane.b32.xlu0 %v601, 24
    %v617 = vpop.permute.xlu0 %616
    %vm626 = vcmask 255168
    %627 = vst.msk [vmem:[#allocation2] sm:$0x3] %vm626, %v603
    %628 = vst.msk [vmem:[#allocation2 + $0x2] sm:$0x3] %vm626, %v605
    %629 = vst.msk [vmem:[#allocation2 + $0x4] sm:$0x3] %vm626, %v607
    %630 = vst.msk [vmem:[#allocation2 + $0x6] sm:$0x3] %vm626, %v609
    %631 = vst.msk [vmem:[#allocation2 + $0x8] sm:$0x3] %vm626, %v611
    %632 = vst.msk [vmem:[#allocation2 + $0xa] sm:$0x3] %vm626, %v613
    %633 = vst.msk [vmem:[#allocation2 + $0xc] sm:$0x3] %vm626, %v615
    %634 = vst.msk [vmem:[#allocation2 + $0xe] sm:$0x3] %vm626, %v617
    %v635 = vld [vmem:[#allocation2] sm:$0x3]
    %v636 = vld [vmem:[#allocation2 + $0x2] sm:$0x3]
    %v637 = vld [vmem:[#allocation2 + $0x4] sm:$0x3]
    %v638 = vld [vmem:[#allocation2 + $0x6] sm:$0x3]
    %v639 = vld [vmem:[#allocation2 + $0x8] sm:$0x3]
    %v640 = vld [vmem:[#allocation2 + $0xa] sm:$0x3]
    %v641 = vld [vmem:[#allocation2 + $0xc] sm:$0x3]
    %v642 = vld [vmem:[#allocation2 + $0xe] sm:$0x3]
    %v643 = vld [vmem:[#allocation6] sm:$0xf]
    %v644 = vld [vmem:[#allocation6 + $0x4] sm:$0xf]
    %v645 = vld [vmem:[#allocation6 + $0x8] sm:$0xf]
    %v646 = vld [vmem:[#allocation6 + $0xc] sm:$0xf]
    %v647 = vld [vmem:[#allocation8] sm:$0x1]
    %v649 = vlaneseq
    %v650 = vshrl.u32 %v649, 7
    %v651 = vsub.s32 0, %v650
    %v652 = vrot.slane %v647, %v651
    %v662 = vcombine.low %v635, %v636
    %v663 = vcombine.low %v637, %v638
    %v665 = vunpack.c.l.s4 1983009808
    %v666 = vunpack.c.0.s8 %v665
    %v667 = vlaneseq
    %v668 = vshrl.u32 %v667, 7
    %v669 = vsub.s32 %v666, %v668
    %v670 = vrot.slane %v662, %v669
    %v672 = vunpack.c.l.s4 1983009808
    %v673 = vunpack.c.0.s8 %v672
    %v674 = vlaneseq
    %v675 = vshrl.u32 %v674, 7
    %v676 = vsub.s32 %v673, %v675
    %v677 = vrot.slane %v663, %v676
    %v678 = vcombine.low %v670, %v677
    %v679 = vcombine.low %v639, %v640
    %v680 = vcombine.low %v641, %v642
    %v682 = vunpack.c.l.s4 1983009808
    %v683 = vunpack.c.0.s8 %v682
    %v684 = vlaneseq
    %v685 = vshrl.u32 %v684, 7
    %v686 = vsub.s32 %v683, %v685
    %v687 = vrot.slane %v679, %v686
    %v689 = vunpack.c.l.s4 1983009808
    %v690 = vunpack.c.0.s8 %v689
    %v691 = vlaneseq
    %v692 = vshrl.u32 %v691, 7
    %v693 = vsub.s32 %v690, %v692
    %v694 = vrot.slane %v680, %v693
    %v695 = vcombine.low %v687, %v694
    %v700 = vunpack.c.l.b16 %v643
    %v701 = vunpack.c.l.b16 %v644
    %v702 = vunpack.c.l.b16 %v645
    %v703 = vunpack.c.l.b16 %v646
    %v704 = vpack.c.b16 %v701, %v700
    %v705 = vpack.c.b16 %v703, %v702
    %vm708 = vcmask 261120
    %v710 = vsel %vm708, %v678, 0
    %v713 = vsel %vm708, %v695, 0
    %715 = vmatprep.subr.bf16.mxu0 0
    %716 = vmatpush1.bf16.msra.mxu0 %v704
    %717 = vmatprep.subr.bf16.mxu0 0
    %718 = vmatpush1.bf16.msra.mxu0 %v705
    %719 = vmatprep.subr.bf16.mxu0 0
    %720 = vmatpush1.bf16.msra.mxu0 0
    %721 = vmatprep.subr.bf16.mxu0 0
    %722 = vmatpush1.bf16.msra.mxu0 0
    %723 = vmatprep.subr.bf16.mxu0 0
    %724 = vmatpush1.bf16.msra.mxu0 0
    %725 = vmatprep.subr.bf16.mxu0 0
    %726 = vmatpush1.bf16.msra.mxu0 0
    %727 = vmatprep.subr.bf16.mxu0 0
    %728 = vmatpush1.bf16.msra.mxu0 0
    %729 = vmatprep.subr.bf16.mxu0 0
    %730 = vmatpush1.bf16.msra.mxu0 0
    %731 = vmatprep.subr.bf16.mxu0 0
    %732 = vmatpush1.bf16.msra.mxu0 0
    %733 = vmatprep.subr.bf16.mxu0 0
    %734 = vmatpush1.bf16.msra.mxu0 0
    %735 = vmatprep.subr.bf16.mxu0 0
    %736 = vmatpush1.bf16.msra.mxu0 0
    %737 = vmatprep.subr.bf16.mxu0 0
    %738 = vmatpush1.bf16.msra.mxu0 0
    %739 = vmatprep.subr.bf16.mxu0 0
    %740 = vmatpush1.bf16.msra.mxu0 0
    %741 = vmatprep.subr.bf16.mxu0 0
    %742 = vmatpush1.bf16.msra.mxu0 0
    %743 = vmatprep.subr.bf16.mxu0 0
    %744 = vmatpush1.bf16.msra.mxu0 0
    %745 = vmatprep.subr.bf16.mxu0 0
    %746 = vmatpush1.bf16.msra.mxu0 0
    %747 = vmatprep.mubr.bf16.mxu0 0
    %748 = vmatmul.mubr.bf16.gmra.mrb[0].mxu0 %v710
    %v749 = vpop.f32.mrb[0].mxu0
    %v750 = vadd.f32 %v652, %v749
    %v751 = vpop.f32.mrb[0].mxu0
    %v752 = vpop.f32.mrb[0].mxu0
    %v753 = vadd.f32 %v652, %v752
    %v754 = vpop.f32.mrb[0].mxu0
    %755 = vmatprep.mubr.bf16.mxu0 0
    %756 = vmatmul.mubr.bf16.gmra.mrb[0].mxu0 %v713
    %v757 = vpop.f32.mrb[0].mxu0
    %v758 = vadd.f32 %v652, %v757
    %v759 = vpop.f32.mrb[0].mxu0
    %v760 = vpop.f32.mrb[0].mxu0
    %v761 = vadd.f32 %v652, %v760
    %v762 = vpop.f32.mrb[0].mxu0
    %763 = vdwg.mxu0
    %v764 = vmax.f32 %v750, 0.0
    %v765 = vmax.f32 %v753, 0.0
    %v766 = vmax.f32 %v758, 0.0
    %v767 = vmax.f32 %v761, 0.0
    %v768 = vpack.c.bf16 %v765, %v764
    %v769 = vpack.c.bf16 %v767, %v766
    %v772 = vunpack.c.l.b16 %v768
    %v773 = vunpack.c.h.b16 %v768
    %v774 = vunpack.c.l.b16 %v769
    %v775 = vunpack.c.h.b16 %v769
    %v776 = vpack.c.b16 %v772, %v772
    %v777 = vpack.c.b16 %v773, %v773
    %v778 = vpack.c.b16 %v774, %v774
    %v779 = vpack.c.b16 %v775, %v775
    %784 = vst [vmem:[#allocation9] sm:$0xf] %v776
    %785 = vst [vmem:[#allocation9 + $0x4] sm:$0xf] %v777
    %786 = vst [vmem:[#allocation9 + $0x8] sm:$0xf] %v778
    %787 = vst [vmem:[#allocation9 + $0xc] sm:$0xf] %v779
    // Predicated region
    $region26: #{_lambda_.6} parent=1 // pred_check
      _
    $region27: #{_lambda_.6} parent=1 // pred_check_branch
      %789 = sbr.rel (0) target = $region29
    $region28: #{_lambda_.6} parent=1 // pred_region
      %s791 = ssub.s32 256, 256
      %792 = vsyncadd [#allocation5], %s791
      %s793 = sshll.u32 [#allocation9], 4
      %s794 = int_to_ptr.vmem [resolvable:$true] %s793
      %799 = dma.vmem_to_hbm [thread:$0]  %s794, 256, %s3, [#allocation5], 64, 64, 4
    $region29: #{_lambda_.6} parent=1 // pred_fallthru
      _
    // Predicated region
    $region30: #{_lambda_.6} parent=1 // pred_check
      _
    $region31: #{_lambda_.6} parent=1 // pred_check_branch
      %801 = sbr.rel (0) target = $region33
    $region32: #{_lambda_.6} parent=1 // pred_region
      %802 = dma.done [#allocation5], 256
    $region33: #{_lambda_.6} parent=1 // pred_fallthru
      _
    %803 = vsyncpa [#allocation4], 1
    %804 = vsyncpa [#allocation7], 1
    %805 = vsyncpa [#allocation5], 1

// kernel: _lambda_.7
$region0: #{_lambda_.7}
  #allocation0 [shape = 'u32[]', space=smem, size = 0x4, offset = 0x4, fixed_abs, tag = 'smem constant byte address 0x4 - core index']
  #allocation1 [shape = 'u32[144,128]{1,0:T(1,128)}', space=vmem, size = 0x12000, scoped, tag = 'internal scratch']
  #allocation2 [shape = 'bf16[2,10,10,16]{3,2,1,0:T(8,128)(2,1)}', space=vmem, size = 0x14000, scoped, tag = 'scratch operand']
  %s0 = inlined_call_operand.hbm [shape: bf16[2,11,11,4], index: 0, kind: input, shape index: {}]
  %s1 = inlined_call_operand.hbm [shape: bf16[16,128], index: 1, kind: input, shape index: {}]
  %s2 = inlined_call_operand.hbm [shape: f32[1,128], index: 2, kind: input, shape index: {}]
  %s3 = inlined_call_operand.hbm [shape: bf16[200,128], index: 3, kind: output, shape index: {}]
  %s4 = sld [smem:[#allocation0]]
  $region34: #{_lambda_.7} parent=0
    _
  %s6 = ssub.s32 1, %s4
  %s7 = scalar_select 0, %s6, %s4
  $region1: #{_lambda_.7} parent=0
    #allocation3 [shape = 'u8[90112]{0}', space=vmem, size = 0x16000, scoped, tag = 'input window, operand 0, single buffered']
    #allocation4 [shape = 's32[1]{0}', space=sflag, size = 0x4, scoped, tag = 'scoped memory for _lambda_.7']
    #allocation5 [shape = 's32[1]{0}', space=sflag, size = 0x4, scoped, tag = 'scoped memory for _lambda_.7']
    #allocation6 [shape = 'u8[4096]{0}', space=vmem, size = 0x1000, scoped, tag = 'input window, operand 1, single buffered']
    #allocation7 [shape = 's32[1]{0}', space=sflag, size = 0x4, scoped, tag = 'scoped memory for _lambda_.7']
    #allocation8 [shape = 'u8[512]{0}', space=vmem, size = 0x400, scoped, tag = 'input window, operand 2, single buffered']
    #allocation9 [shape = 'u8[51200]{0}', space=vmem, size = 0xc800, scoped, tag = 'output window, operand 0, single buffered']
    %8 = vsyncpa [#allocation4], 0
    %9 = vsyncpa [#allocation7], 0
    %10 = vsyncpa [#allocation5], 0
    // Predicated region
    $region2: #{_lambda_.7} parent=1 // pred_check
      _
    $region3: #{_lambda_.7} parent=1 // pred_check_branch
      %12 = sbr.rel (0) target = $region5
    $region4: #{_lambda_.7} parent=1 // pred_region
      %s14 = ssub.s32 2816, 2816
      %15 = vsyncadd [#allocation4], %s14
      %s16 = sshll.u32 [#allocation3], 4
      %s17 = int_to_ptr.vmem [resolvable:$true] %s16
      %22 = dma.hbm_to_vmem [thread:$0]  %s0, 2816, %s17, [#allocation4], 64, 64, 4
    $region5: #{_lambda_.7} parent=1 // pred_fallthru
      _
    // Predicated region
    $region6: #{_lambda_.7} parent=1 // pred_check
      _
    $region7: #{_lambda_.7} parent=1 // pred_check_branch
      %24 = sbr.rel (0) target = $region9
    $region8: #{_lambda_.7} parent=1 // pred_region
      %s26 = ssub.s32 128, 128
      %27 = vsyncadd [#allocation7], %s26
      %s28 = sshll.u32 [#allocation6], 4
      %s29 = int_to_ptr.vmem [resolvable:$true] %s28
      %34 = dma.hbm_to_vmem [thread:$0]  %s1, 128, %s29, [#allocation7], 64, 64, 4
    $region9: #{_lambda_.7} parent=1 // pred_fallthru
      _
    // Predicated region
    $region10: #{_lambda_.7} parent=1 // pred_check
      _
    $region11: #{_lambda_.7} parent=1 // pred_check_branch
      %36 = sbr.rel (0) target = $region13
    $region12: #{_lambda_.7} parent=1 // pred_region
      %s38 = ssub.s32 16, 16
      %39 = vsyncadd [#allocation7], %s38
      %s41 = sshll.u32 [#allocation8], 4
      %s42 = int_to_ptr.vmem [resolvable:$true] %s41
      %44 = dma.hbm_to_vmem [thread:$0]  %s2, 16, %s42, [#allocation7]
    $region13: #{_lambda_.7} parent=1 // pred_fallthru
      _
    // Predicated region
    $region14: #{_lambda_.7} parent=1 // pred_check
      _
    $region15: #{_lambda_.7} parent=1 // pred_check_branch
      %46 = sbr.rel (0) target = $region17
    $region16: #{_lambda_.7} parent=1 // pred_region
      %47 = dma.done [#allocation4], 2816
    $region17: #{_lambda_.7} parent=1 // pred_fallthru
      _
    // Predicated region
    $region18: #{_lambda_.7} parent=1 // pred_check
      _
    $region19: #{_lambda_.7} parent=1 // pred_check_branch
      %49 = sbr.rel (0) target = $region21
    $region20: #{_lambda_.7} parent=1 // pred_region
      %50 = dma.done [#allocation7], 128
    $region21: #{_lambda_.7} parent=1 // pred_fallthru
      _
    // Predicated region
    $region22: #{_lambda_.7} parent=1 // pred_check
      _
    $region23: #{_lambda_.7} parent=1 // pred_check_branch
      %52 = sbr.rel (0) target = $region25
    $region24: #{_lambda_.7} parent=1 // pred_region
      %53 = dma.done [#allocation7], 16
    $region25: #{_lambda_.7} parent=1 // pred_fallthru
      _
    %v55 = vld [vmem:[#allocation3] sm:$0xf]
    %v56 = vld [vmem:[#allocation3 + $0x4] sm:$0x1]
    %v57 = vld [vmem:[#allocation3 + $0x8] sm:$0xf]
    %v58 = vld [vmem:[#allocation3 + $0xc] sm:$0x1]
    %v59 = vld [vmem:[#allocation3 + $0x10] sm:$0xf]
    %v60 = vld [vmem:[#allocation3 + $0x14] sm:$0x1]
    %v61 = vld [vmem:[#allocation3 + $0x18] sm:$0xf]
    %v62 = vld [vmem:[#allocation3 + $0x1c] sm:$0x1]
    %v63 = vld [vmem:[#allocation3 + $0x20] sm:$0xf]
    %v64 = vld [vmem:[#allocation3 + $0x24] sm:$0x1]
    %v65 = vld [vmem:[#allocation3 + $0x28] sm:$0xf]
    %v66 = vld [vmem:[#allocation3 + $0x2c] sm:$0x1]
    %v67 = vld [vmem:[#allocation3 + $0x30] sm:$0xf]
    %v68 = vld [vmem:[#allocation3 + $0x34] sm:$0x1]
    %v69 = vld [vmem:[#allocation3 + $0x38] sm:$0xf]
    %v70 = vld [vmem:[#allocation3 + $0x3c] sm:$0x1]
    %v71 = vld [vmem:[#allocation3 + $0x40] sm:$0xf]
    %v72 = vld [vmem:[#allocation3 + $0x44] sm:$0x1]
    %v73 = vld [vmem:[#allocation3 + $0x48] sm:$0xf]
    %v74 = vld [vmem:[#allocation3 + $0x4c] sm:$0x1]
    %v75 = vld [vmem:[#allocation3 + $0x58] sm:$0xf]
    %v76 = vld [vmem:[#allocation3 + $0x5c] sm:$0x1]
    %v77 = vld [vmem:[#allocation3 + $0x60] sm:$0xf]
    %v78 = vld [vmem:[#allocation3 + $0x64] sm:$0x1]
    %v79 = vld [vmem:[#allocation3 + $0x68] sm:$0xf]
    %v80 = vld [vmem:[#allocation3 + $0x6c] sm:$0x1]
    %v81 = vld [vmem:[#allocation3 + $0x70] sm:$0xf]
    %v82 = vld [vmem:[#allocation3 + $0x74] sm:$0x1]
    %v83 = vld [vmem:[#allocation3 + $0x78] sm:$0xf]
    %v84 = vld [vmem:[#allocation3 + $0x7c] sm:$0x1]
    %v85 = vld [vmem:[#allocation3 + $0x80] sm:$0xf]
    %v86 = vld [vmem:[#allocation3 + $0x84] sm:$0x1]
    %v87 = vld [vmem:[#allocation3 + $0x88] sm:$0xf]
    %v88 = vld [vmem:[#allocation3 + $0x8c] sm:$0x1]
    %v89 = vld [vmem:[#allocation3 + $0x90] sm:$0xf]
    %v90 = vld [vmem:[#allocation3 + $0x94] sm:$0x1]
    %v91 = vld [vmem:[#allocation3 + $0x98] sm:$0xf]
    %v92 = vld [vmem:[#allocation3 + $0x9c] sm:$0x1]
    %v93 = vld [vmem:[#allocation3 + $0xa0] sm:$0xf]
    %v94 = vld [vmem:[#allocation3 + $0xa4] sm:$0x1]
    %vm95 = vcmask 27648
    %96 = vst.msk [vmem:[#allocation2] sm:$0xf] %vm95, %v55
    %vm97 = vcmask 24576
    %98 = vst.msk [vmem:[#allocation2 + $0x4] sm:$0x1] %vm97, %v56
    %99 = vst.msk [vmem:[#allocation2 + $0x8] sm:$0xf] %vm95, %v57
    %100 = vst.msk [vmem:[#allocation2 + $0xc] sm:$0x1] %vm97, %v58
    %101 = vst.msk [vmem:[#allocation2 + $0x10] sm:$0xf] %vm95, %v59
    %102 = vst.msk [vmem:[#allocation2 + $0x14] sm:$0x1] %vm97, %v60
    %103 = vst.msk [vmem:[#allocation2 + $0x18] sm:$0xf] %vm95, %v61
    %104 = vst.msk [vmem:[#allocation2 + $0x1c] sm:$0x1] %vm97, %v62
    %105 = vst.msk [vmem:[#allocation2 + $0x20] sm:$0xf] %vm95, %v63
    %106 = vst.msk [vmem:[#allocation2 + $0x24] sm:$0x1] %vm97, %v64
    %107 = vst.msk [vmem:[#allocation2 + $0x28] sm:$0xf] %vm95, %v65
    %108 = vst.msk [vmem:[#allocation2 + $0x2c] sm:$0x1] %vm97, %v66
    %109 = vst.msk [vmem:[#allocation2 + $0x30] sm:$0xf] %vm95, %v67
    %110 = vst.msk [vmem:[#allocation2 + $0x34] sm:$0x1] %vm97, %v68
    %111 = vst.msk [vmem:[#allocation2 + $0x38] sm:$0xf] %vm95, %v69
    %112 = vst.msk [vmem:[#allocation2 + $0x3c] sm:$0x1] %vm97, %v70
    %113 = vst.msk [vmem:[#allocation2 + $0x40] sm:$0xf] %vm95, %v71
    %114 = vst.msk [vmem:[#allocation2 + $0x44] sm:$0x1] %vm97, %v72
    %115 = vst.msk [vmem:[#allocation2 + $0x48] sm:$0xf] %vm95, %v73
    %116 = vst.msk [vmem:[#allocation2 + $0x4c] sm:$0x1] %vm97, %v74
    %117 = vst.msk [vmem:[#allocation2 + $0x50] sm:$0xf] %vm95, %v75
    %118 = vst.msk [vmem:[#allocation2 + $0x54] sm:$0x1] %vm97, %v76
    %119 = vst.msk [vmem:[#allocation2 + $0x58] sm:$0xf] %vm95, %v77
    %120 = vst.msk [vmem:[#allocation2 + $0x5c] sm:$0x1] %vm97, %v78
    %121 = vst.msk [vmem:[#allocation2 + $0x60] sm:$0xf] %vm95, %v79
    %122 = vst.msk [vmem:[#allocation2 + $0x64] sm:$0x1] %vm97, %v80
    %123 = vst.msk [vmem:[#allocation2 + $0x68] sm:$0xf] %vm95, %v81
    %124 = vst.msk [vmem:[#allocation2 + $0x6c] sm:$0x1] %vm97, %v82
    %125 = vst.msk [vmem:[#allocation2 + $0x70] sm:$0xf] %vm95, %v83
    %126 = vst.msk [vmem:[#allocation2 + $0x74] sm:$0x1] %vm97, %v84
    %127 = vst.msk [vmem:[#allocation2 + $0x78] sm:$0xf] %vm95, %v85
    %128 = vst.msk [vmem:[#allocation2 + $0x7c] sm:$0x1] %vm97, %v86
    %129 = vst.msk [vmem:[#allocation2 + $0x80] sm:$0xf] %vm95, %v87
    %130 = vst.msk [vmem:[#allocation2 + $0x84] sm:$0x1] %vm97, %v88
    %131 = vst.msk [vmem:[#allocation2 + $0x88] sm:$0xf] %vm95, %v89
    %132 = vst.msk [vmem:[#allocation2 + $0x8c] sm:$0x1] %vm97, %v90
    %133 = vst.msk [vmem:[#allocation2 + $0x90] sm:$0xf] %vm95, %v91
    %134 = vst.msk [vmem:[#allocation2 + $0x94] sm:$0x1] %vm97, %v92
    %135 = vst.msk [vmem:[#allocation2 + $0x98] sm:$0xf] %vm95, %v93
    %136 = vst.msk [vmem:[#allocation2 + $0x9c] sm:$0x1] %vm97, %v94
    %v137 = vld [vmem:[#allocation3] sm:$0xf]
    %v138 = vld [vmem:[#allocation3 + $0x4] sm:$0x3]
    %v139 = vld [vmem:[#allocation3 + $0x8] sm:$0xf]
    %v140 = vld [vmem:[#allocation3 + $0xc] sm:$0x3]
    %v141 = vld [vmem:[#allocation3 + $0x10] sm:$0xf]
    %v142 = vld [vmem:[#allocation3 + $0x14] sm:$0x3]
    %v143 = vld [vmem:[#allocation3 + $0x18] sm:$0xf]
    %v144 = vld [vmem:[#allocation3 + $0x1c] sm:$0x3]
    %v145 = vld [vmem:[#allocation3 + $0x20] sm:$0xf]
    %v146 = vld [vmem:[#allocation3 + $0x24] sm:$0x3]
    %v147 = vld [vmem:[#allocation3 + $0x28] sm:$0xf]
    %v148 = vld [vmem:[#allocation3 + $0x2c] sm:$0x3]
    %v149 = vld [vmem:[#allocation3 + $0x30] sm:$0xf]
    %v150 = vld [vmem:[#allocation3 + $0x34] sm:$0x3]
    %v151 = vld [vmem:[#allocation3 + $0x38] sm:$0xf]
    %v152 = vld [vmem:[#allocation3 + $0x3c] sm:$0x3]
    %v153 = vld [vmem:[#allocation3 + $0x40] sm:$0xf]
    %v154 = vld [vmem:[#allocation3 + $0x44] sm:$0x3]
    %v155 = vld [vmem:[#allocation3 + $0x48] sm:$0xf]
    %v156 = vld [vmem:[#allocation3 + $0x4c] sm:$0x3]
    %v157 = vld [vmem:[#allocation3 + $0x58] sm:$0xf]
    %v158 = vld [vmem:[#allocation3 + $0x5c] sm:$0x3]
    %v159 = vld [vmem:[#allocation3 + $0x60] sm:$0xf]
    %v160 = vld [vmem:[#allocation3 + $0x64] sm:$0x3]
    %v161 = vld [vmem:[#allocation3 + $0x68] sm:$0xf]
    %v162 = vld [vmem:[#allocation3 + $0x6c] sm:$0x3]
    %v163 = vld [vmem:[#allocation3 + $0x70] sm:$0xf]
    %v164 = vld [vmem:[#allocation3 + $0x74] sm:$0x3]
    %v165 = vld [vmem:[#allocation3 + $0x78] sm:$0xf]
    %v166 = vld [vmem:[#allocation3 + $0x7c] sm:$0x3]
    %v167 = vld [vmem:[#allocation3 + $0x80] sm:$0xf]
    %v168 = vld [vmem:[#allocation3 + $0x84] sm:$0x3]
    %v169 = vld [vmem:[#allocation3 + $0x88] sm:$0xf]
    %v170 = vld [vmem:[#allocation3 + $0x8c] sm:$0x3]
    %v171 = vld [vmem:[#allocation3 + $0x90] sm:$0xf]
    %v172 = vld [vmem:[#allocation3 + $0x94] sm:$0x3]
    %v173 = vld [vmem:[#allocation3 + $0x98] sm:$0xf]
    %v174 = vld [vmem:[#allocation3 + $0x9c] sm:$0x3]
    %v175 = vld [vmem:[#allocation3 + $0xa0] sm:$0xf]
    %v176 = vld [vmem:[#allocation3 + $0xa4] sm:$0x3]
    %vm177 = vsmask.f32 3328
    %vm178 = vsmask.f32 7440
    %vm179 = vmor %vm177, %vm178
    %v181 = vshrl.u32 %v137, 16
    %v183 = vrot.slane %v181, 4
    %v184 = vshll.u32 %v137, 16
    %v186 = vrot.slane %v184, 5
    %v187 = vor.u32 %v183, %v186
    %v188 = vrot.slane %v187, 4
    %v190 = vshll.u32 %v138, 16
    %v192 = vrot.slane %v190, 5
    %v193 = vsel %vm179, %v188, %v192
    %v194 = vshrl.u32 %v138, 16
    %v196 = vrot.slane %v194, 4
    %v197 = vor.u32 %v196, %v192
    %v198 = vrot.slane %v197, 4
    %v200 = vshrl.u32 %v139, 16
    %v202 = vrot.slane %v200, 4
    %v203 = vshll.u32 %v139, 16
    %v205 = vrot.slane %v203, 5
    %v206 = vor.u32 %v202, %v205
    %v207 = vrot.slane %v206, 4
    %v209 = vshll.u32 %v140, 16
    %v211 = vrot.slane %v209, 5
    %v212 = vsel %vm179, %v207, %v211
    %v213 = vshrl.u32 %v140, 16
    %v215 = vrot.slane %v213, 4
    %v216 = vor.u32 %v215, %v211
    %v217 = vrot.slane %v216, 4
    %v219 = vshrl.u32 %v141, 16
    %v221 = vrot.slane %v219, 4
    %v222 = vshll.u32 %v141, 16
    %v224 = vrot.slane %v222, 5
    %v225 = vor.u32 %v221, %v224
    %v226 = vrot.slane %v225, 4
    %v228 = vshll.u32 %v142, 16
    %v230 = vrot.slane %v228, 5
    %v231 = vsel %vm179, %v226, %v230
    %v232 = vshrl.u32 %v142, 16
    %v234 = vrot.slane %v232, 4
    %v235 = vor.u32 %v234, %v230
    %v236 = vrot.slane %v235, 4
    %v238 = vshrl.u32 %v143, 16
    %v240 = vrot.slane %v238, 4
    %v241 = vshll.u32 %v143, 16
    %v243 = vrot.slane %v241, 5
    %v244 = vor.u32 %v240, %v243
    %v245 = vrot.slane %v244, 4
    %v247 = vshll.u32 %v144, 16
    %v249 = vrot.slane %v247, 5
    %v250 = vsel %vm179, %v245, %v249
    %v251 = vshrl.u32 %v144, 16
    %v253 = vrot.slane %v251, 4
    %v254 = vor.u32 %v253, %v249
    %v255 = vrot.slane %v254, 4
    %v257 = vshrl.u32 %v145, 16
    %v259 = vrot.slane %v257, 4
    %v260 = vshll.u32 %v145, 16
    %v262 = vrot.slane %v260, 5
    %v263 = vor.u32 %v259, %v262
    %v264 = vrot.slane %v263, 4
    %v266 = vshll.u32 %v146, 16
    %v268 = vrot.slane %v266, 5
    %v269 = vsel %vm179, %v264, %v268
    %v270 = vshrl.u32 %v146, 16
    %v272 = vrot.slane %v270, 4
    %v273 = vor.u32 %v272, %v268
    %v274 = vrot.slane %v273, 4
    %v276 = vshrl.u32 %v147, 16
    %v278 = vrot.slane %v276, 4
    %v279 = vshll.u32 %v147, 16
    %v281 = vrot.slane %v279, 5
    %v282 = vor.u32 %v278, %v281
    %v283 = vrot.slane %v282, 4
    %v285 = vshll.u32 %v148, 16
    %v287 = vrot.slane %v285, 5
    %v288 = vsel %vm179, %v283, %v287
    %v289 = vshrl.u32 %v148, 16
    %v291 = vrot.slane %v289, 4
    %v292 = vor.u32 %v291, %v287
    %v293 = vrot.slane %v292, 4
    %v295 = vshrl.u32 %v149, 16
    %v297 = vrot.slane %v295, 4
    %v298 = vshll.u32 %v149, 16
    %v300 = vrot.slane %v298, 5
    %v301 = vor.u32 %v297, %v300
    %v302 = vrot.slane %v301, 4
    %v304 = vshll.u32 %v150, 16
    %v306 = vrot.slane %v304, 5
    %v307 = vsel %vm179, %v302, %v306
    %v308 = vshrl.u32 %v150, 16
    %v310 = vrot.slane %v308, 4
    %v311 = vor.u32 %v310, %v306
    %v312 = vrot.slane %v311, 4
    %v314 = vshrl.u32 %v151, 16
    %v316 = vrot.slane %v314, 4
    %v317 = vshll.u32 %v151, 16
    %v319 = vrot.slane %v317, 5
    %v320 = vor.u32 %v316, %v319
    %v321 = vrot.slane %v320, 4
    %v323 = vshll.u32 %v152, 16
    %v325 = vrot.slane %v323, 5
    %v326 = vsel %vm179, %v321, %v325
    %v327 = vshrl.u32 %v152, 16
    %v329 = vrot.slane %v327, 4
    %v330 = vor.u32 %v329, %v325
    %v331 = vrot.slane %v330, 4
    %v333 = vshrl.u32 %v153, 16
    %v335 = vrot.slane %v333, 4
    %v336 = vshll.u32 %v153, 16
    %v338 = vrot.slane %v336, 5
    %v339 = vor.u32 %v335, %v338
    %v340 = vrot.slane %v339, 4
    %v342 = vshll.u32 %v154, 16
    %v344 = vrot.slane %v342, 5
    %v345 = vsel %vm179, %v340, %v344
    %v346 = vshrl.u32 %v154, 16
    %v348 = vrot.slane %v346, 4
    %v349 = vor.u32 %v348, %v344
    %v350 = vrot.slane %v349, 4
    %v352 = vshrl.u32 %v155, 16
    %v354 = vrot.slane %v352, 4
    %v355 = vshll.u32 %v155, 16
    %v357 = vrot.slane %v355, 5
    %v358 = vor.u32 %v354, %v357
    %v359 = vrot.slane %v358, 4
    %v361 = vshll.u32 %v156, 16
    %v363 = vrot.slane %v361, 5
    %v364 = vsel %vm179, %v359, %v363
    %v365 = vshrl.u32 %v156, 16
    %v367 = vrot.slane %v365, 4
    %v368 = vor.u32 %v367, %v363
    %v369 = vrot.slane %v368, 4
    %v371 = vshrl.u32 %v157, 16
    %v373 = vrot.slane %v371, 4
    %v374 = vshll.u32 %v157, 16
    %v376 = vrot.slane %v374, 5
    %v377 = vor.u32 %v373, %v376
    %v378 = vrot.slane %v377, 4
    %v380 = vshll.u32 %v158, 16
    %v382 = vrot.slane %v380, 5
    %v383 = vsel %vm179, %v378, %v382
    %v384 = vshrl.u32 %v158, 16
    %v386 = vrot.slane %v384, 4
    %v387 = vor.u32 %v386, %v382
    %v388 = vrot.slane %v387, 4
    %v390 = vshrl.u32 %v159, 16
    %v392 = vrot.slane %v390, 4
    %v393 = vshll.u32 %v159, 16
    %v395 = vrot.slane %v393, 5
    %v396 = vor.u32 %v392, %v395
    %v397 = vrot.slane %v396, 4
    %v399 = vshll.u32 %v160, 16
    %v401 = vrot.slane %v399, 5
    %v402 = vsel %vm179, %v397, %v401
    %v403 = vshrl.u32 %v160, 16
    %v405 = vrot.slane %v403, 4
    %v406 = vor.u32 %v405, %v401
    %v407 = vrot.slane %v406, 4
    %v409 = vshrl.u32 %v161, 16
    %v411 = vrot.slane %v409, 4
    %v412 = vshll.u32 %v161, 16
    %v414 = vrot.slane %v412, 5
    %v415 = vor.u32 %v411, %v414
    %v416 = vrot.slane %v415, 4
    %v418 = vshll.u32 %v162, 16
    %v420 = vrot.slane %v418, 5
    %v421 = vsel %vm179, %v416, %v420
    %v422 = vshrl.u32 %v162, 16
    %v424 = vrot.slane %v422, 4
    %v425 = vor.u32 %v424, %v420
    %v426 = vrot.slane %v425, 4
    %v428 = vshrl.u32 %v163, 16
    %v430 = vrot.slane %v428, 4
    %v431 = vshll.u32 %v163, 16
    %v433 = vrot.slane %v431, 5
    %v434 = vor.u32 %v430, %v433
    %v435 = vrot.slane %v434, 4
    %v437 = vshll.u32 %v164, 16
    %v439 = vrot.slane %v437, 5
    %v440 = vsel %vm179, %v435, %v439
    %v441 = vshrl.u32 %v164, 16
    %v443 = vrot.slane %v441, 4
    %v444 = vor.u32 %v443, %v439
    %v445 = vrot.slane %v444, 4
    %v447 = vshrl.u32 %v165, 16
    %v449 = vrot.slane %v447, 4
    %v450 = vshll.u32 %v165, 16
    %v452 = vrot.slane %v450, 5
    %v453 = vor.u32 %v449, %v452
    %v454 = vrot.slane %v453, 4
    %v456 = vshll.u32 %v166, 16
    %v458 = vrot.slane %v456, 5
    %v459 = vsel %vm179, %v454, %v458
    %v460 = vshrl.u32 %v166, 16
    %v462 = vrot.slane %v460, 4
    %v463 = vor.u32 %v462, %v458
    %v464 = vrot.slane %v463, 4
    %v466 = vshrl.u32 %v167, 16
    %v468 = vrot.slane %v466, 4
    %v469 = vshll.u32 %v167, 16
    %v471 = vrot.slane %v469, 5
    %v472 = vor.u32 %v468, %v471
    %v473 = vrot.slane %v472, 4
    %v475 = vshll.u32 %v168, 16
    %v477 = vrot.slane %v475, 5
    %v478 = vsel %vm179, %v473, %v477
    %v479 = vshrl.u32 %v168, 16
    %v481 = vrot.slane %v479, 4
    %v482 = vor.u32 %v481, %v477
    %v483 = vrot.slane %v482, 4
    %v485 = vshrl.u32 %v169, 16
    %v487 = vrot.slane %v485, 4
    %v488 = vshll.u32 %v169, 16
    %v490 = vrot.slane %v488, 5
    %v491 = vor.u32 %v487, %v490
    %v492 = vrot.slane %v491, 4
    %v494 = vshll.u32 %v170, 16
    %v496 = vrot.slane %v494, 5
    %v497 = vsel %vm179, %v492, %v496
    %v498 = vshrl.u32 %v170, 16
    %v500 = vrot.slane %v498, 4
    %v501 = vor.u32 %v500, %v496
    %v502 = vrot.slane %v501, 4
    %v504 = vshrl.u32 %v171, 16
    %v506 = vrot.slane %v504, 4
    %v507 = vshll.u32 %v171, 16
    %v509 = vrot.slane %v507, 5
    %v510 = vor.u32 %v506, %v509
    %v511 = vrot.slane %v510, 4
    %v513 = vshll.u32 %v172, 16
    %v515 = vrot.slane %v513, 5
    %v516 = vsel %vm179, %v511, %v515
    %v517 = vshrl.u32 %v172, 16
    %v519 = vrot.slane %v517, 4
    %v520 = vor.u32 %v519, %v515
    %v521 = vrot.slane %v520, 4
    %v523 = vshrl.u32 %v173, 16
    %v525 = vrot.slane %v523, 4
    %v526 = vshll.u32 %v173, 16
    %v528 = vrot.slane %v526, 5
    %v529 = vor.u32 %v525, %v528
    %v530 = vrot.slane %v529, 4
    %v532 = vshll.u32 %v174, 16
    %v534 = vrot.slane %v532, 5
    %v535 = vsel %vm179, %v530, %v534
    %v536 = vshrl.u32 %v174, 16
    %v538 = vrot.slane %v536, 4
    %v539 = vor.u32 %v538, %v534
    %v540 = vrot.slane %v539, 4
    %v542 = vshrl.u32 %v175, 16
    %v544 = vrot.slane %v542, 4
    %v545 = vshll.u32 %v175, 16
    %v547 = vrot.slane %v545, 5
    %v548 = vor.u32 %v544, %v547
    %v549 = vrot.slane %v548, 4
    %v551 = vshll.u32 %v176, 16
    %v553 = vrot.slane %v551, 5
    %v554 = vsel %vm179, %v549, %v553
    %v555 = vshrl.u32 %v176, 16
    %v557 = vrot.slane %v555, 4
    %v558 = vor.u32 %v557, %v553
    %v559 = vrot.slane %v558, 4
    %560 = vrot.lane.b32.xlu0 %v193, 4
    %v561 = vpop.permute.xlu0 %560
    %562 = vrot.lane.b32.xlu0 %v198, 4
    %v563 = vpop.permute.xlu0 %562
    %564 = vrot.lane.b32.xlu0 %v212, 4
    %v565 = vpop.permute.xlu0 %564
    %566 = vrot.lane.b32.xlu0 %v217, 4
    %v567 = vpop.permute.xlu0 %566
    %568 = vrot.lane.b32.xlu0 %v231, 4
    %v569 = vpop.permute.xlu0 %568
    %570 = vrot.lane.b32.xlu0 %v236, 4
    %v571 = vpop.permute.xlu0 %570
    %572 = vrot.lane.b32.xlu0 %v250, 4
    %v573 = vpop.permute.xlu0 %572
    %574 = vrot.lane.b32.xlu0 %v255, 4
    %v575 = vpop.permute.xlu0 %574
    %576 = vrot.lane.b32.xlu0 %v269, 4
    %v577 = vpop.permute.xlu0 %576
    %578 = vrot.lane.b32.xlu0 %v274, 4
    %v579 = vpop.permute.xlu0 %578
    %580 = vrot.lane.b32.xlu0 %v288, 4
    %v581 = vpop.permute.xlu0 %580
    %582 = vrot.lane.b32.xlu0 %v293, 4
    %v583 = vpop.permute.xlu0 %582
    %584 = vrot.lane.b32.xlu0 %v307, 4
    %v585 = vpop.permute.xlu0 %584
    %586 = vrot.lane.b32.xlu0 %v312, 4
    %v587 = vpop.permute.xlu0 %586
    %588 = vrot.lane.b32.xlu0 %v326, 4
    %v589 = vpop.permute.xlu0 %588
    %590 = vrot.lane.b32.xlu0 %v331, 4
    %v591 = vpop.permute.xlu0 %590
    %592 = vrot.lane.b32.xlu0 %v345, 4
    %v593 = vpop.permute.xlu0 %592
    %594 = vrot.lane.b32.xlu0 %v350, 4
    %v595 = vpop.permute.xlu0 %594
    %596 = vrot.lane.b32.xlu0 %v364, 4
    %v597 = vpop.permute.xlu0 %596
    %598 = vrot.lane.b32.xlu0 %v369, 4
    %v599 = vpop.permute.xlu0 %598
    %600 = vrot.lane.b32.xlu0 %v383, 4
    %v601 = vpop.permute.xlu0 %600
    %602 = vrot.lane.b32.xlu0 %v388, 4
    %v603 = vpop.permute.xlu0 %602
    %604 = vrot.lane.b32.xlu0 %v402, 4
    %v605 = vpop.permute.xlu0 %604
    %606 = vrot.lane.b32.xlu0 %v407, 4
    %v607 = vpop.permute.xlu0 %606
    %608 = vrot.lane.b32.xlu0 %v421, 4
    %v609 = vpop.permute.xlu0 %608
    %610 = vrot.lane.b32.xlu0 %v426, 4
    %v611 = vpop.permute.xlu0 %610
    %612 = vrot.lane.b32.xlu0 %v440, 4
    %v613 = vpop.permute.xlu0 %612
    %614 = vrot.lane.b32.xlu0 %v445, 4
    %v615 = vpop.permute.xlu0 %614
    %616 = vrot.lane.b32.xlu0 %v459, 4
    %v617 = vpop.permute.xlu0 %616
    %618 = vrot.lane.b32.xlu0 %v464, 4
    %v619 = vpop.permute.xlu0 %618
    %620 = vrot.lane.b32.xlu0 %v478, 4
    %v621 = vpop.permute.xlu0 %620
    %622 = vrot.lane.b32.xlu0 %v483, 4
    %v623 = vpop.permute.xlu0 %622
    %624 = vrot.lane.b32.xlu0 %v497, 4
    %v625 = vpop.permute.xlu0 %624
    %626 = vrot.lane.b32.xlu0 %v502, 4
    %v627 = vpop.permute.xlu0 %626
    %628 = vrot.lane.b32.xlu0 %v516, 4
    %v629 = vpop.permute.xlu0 %628
    %630 = vrot.lane.b32.xlu0 %v521, 4
    %v631 = vpop.permute.xlu0 %630
    %632 = vrot.lane.b32.xlu0 %v535, 4
    %v633 = vpop.permute.xlu0 %632
    %634 = vrot.lane.b32.xlu0 %v540, 4
    %v635 = vpop.permute.xlu0 %634
    %636 = vrot.lane.b32.xlu0 %v554, 4
    %v637 = vpop.permute.xlu0 %636
    %638 = vrot.lane.b32.xlu0 %v559, 4
    %v639 = vpop.permute.xlu0 %638
    %vm680 = vcmask 60448
    %681 = vst.msk [vmem:[#allocation2] sm:$0xf] %vm680, %v561
    %vm682 = vcmask 57376
    %683 = vst.msk [vmem:[#allocation2 + $0x4] sm:$0x1] %vm682, %v563
    %684 = vst.msk [vmem:[#allocation2 + $0x8] sm:$0xf] %vm680, %v565
    %685 = vst.msk [vmem:[#allocation2 + $0xc] sm:$0x1] %vm682, %v567
    %686 = vst.msk [vmem:[#allocation2 + $0x10] sm:$0xf] %vm680, %v569
    %687 = vst.msk [vmem:[#allocation2 + $0x14] sm:$0x1] %vm682, %v571
    %688 = vst.msk [vmem:[#allocation2 + $0x18] sm:$0xf] %vm680, %v573
    %689 = vst.msk [vmem:[#allocation2 + $0x1c] sm:$0x1] %vm682, %v575
    %690 = vst.msk [vmem:[#allocation2 + $0x20] sm:$0xf] %vm680, %v577
    %691 = vst.msk [vmem:[#allocation2 + $0x24] sm:$0x1] %vm682, %v579
    %692 = vst.msk [vmem:[#allocation2 + $0x28] sm:$0xf] %vm680, %v581
    %693 = vst.msk [vmem:[#allocation2 + $0x2c] sm:$0x1] %vm682, %v583
    %694 = vst.msk [vmem:[#allocation2 + $0x30] sm:$0xf] %vm680, %v585
    %695 = vst.msk [vmem:[#allocation2 + $0x34] sm:$0x1] %vm682, %v587
    %696 = vst.msk [vmem:[#allocation2 + $0x38] sm:$0xf] %vm680, %v589
    %697 = vst.msk [vmem:[#allocation2 + $0x3c] sm:$0x1] %vm682, %v591
    %698 = vst.msk [vmem:[#allocation2 + $0x40] sm:$0xf] %vm680, %v593
    %699 = vst.msk [vmem:[#allocation2 + $0x44] sm:$0x1] %vm682, %v595
    %700 = vst.msk [vmem:[#allocation2 + $0x48] sm:$0xf] %vm680, %v597
    %701 = vst.msk [vmem:[#allocation2 + $0x4c] sm:$0x1] %vm682, %v599
    %702 = vst.msk [vmem:[#allocation2 + $0x50] sm:$0xf] %vm680, %v601
    %703 = vst.msk [vmem:[#allocation2 + $0x54] sm:$0x1] %vm682, %v603
    %704 = vst.msk [vmem:[#allocation2 + $0x58] sm:$0xf] %vm680, %v605
    %705 = vst.msk [vmem:[#allocation2 + $0x5c] sm:$0x1] %vm682, %v607
    %706 = vst.msk [vmem:[#allocation2 + $0x60] sm:$0xf] %vm680, %v609
    %707 = vst.msk [vmem:[#allocation2 + $0x64] sm:$0x1] %vm682, %v611
    %708 = vst.msk [vmem:[#allocation2 + $0x68] sm:$0xf] %vm680, %v613
    %709 = vst.msk [vmem:[#allocation2 + $0x6c] sm:$0x1] %vm682, %v615
    %710 = vst.msk [vmem:[#allocation2 + $0x70] sm:$0xf] %vm680, %v617
    %711 = vst.msk [vmem:[#allocation2 + $0x74] sm:$0x1] %vm682, %v619
    %712 = vst.msk [vmem:[#allocation2 + $0x78] sm:$0xf] %vm680, %v621
    %713 = vst.msk [vmem:[#allocation2 + $0x7c] sm:$0x1] %vm682, %v623
    %714 = vst.msk [vmem:[#allocation2 + $0x80] sm:$0xf] %vm680, %v625
    %715 = vst.msk [vmem:[#allocation2 + $0x84] sm:$0x1] %vm682, %v627
    %716 = vst.msk [vmem:[#allocation2 + $0x88] sm:$0xf] %vm680, %v629
    %717 = vst.msk [vmem:[#allocation2 + $0x8c] sm:$0x1] %vm682, %v631
    %718 = vst.msk [vmem:[#allocation2 + $0x90] sm:$0xf] %vm680, %v633
    %719 = vst.msk [vmem:[#allocation2 + $0x94] sm:$0x1] %vm682, %v635
    %720 = vst.msk [vmem:[#allocation2 + $0x98] sm:$0xf] %vm680, %v637
    %721 = vst.msk [vmem:[#allocation2 + $0x9c] sm:$0x1] %vm682, %v639
    %s722 = scalar_lea.vmem [#allocation3], 8
    %v723 = vld [vmem:[%s722] sm:$0xf]
    %v724 = vld [vmem:[%s722 + $0x4] sm:$0x1]
    %v725 = vld [vmem:[%s722 + $0x8] sm:$0xf]
    %v726 = vld [vmem:[%s722 + $0xc] sm:$0x1]
    %v727 = vld [vmem:[%s722 + $0x10] sm:$0xf]
    %v728 = vld [vmem:[%s722 + $0x14] sm:$0x1]
    %v729 = vld [vmem:[%s722 + $0x18] sm:$0xf]
    %v730 = vld [vmem:[%s722 + $0x1c] sm:$0x1]
    %v731 = vld [vmem:[%s722 + $0x20] sm:$0xf]
    %v732 = vld [vmem:[%s722 + $0x24] sm:$0x1]
    %v733 = vld [vmem:[%s722 + $0x28] sm:$0xf]
    %v734 = vld [vmem:[%s722 + $0x2c] sm:$0x1]
    %v735 = vld [vmem:[%s722 + $0x30] sm:$0xf]
    %v736 = vld [vmem:[%s722 + $0x34] sm:$0x1]
    %v737 = vld [vmem:[%s722 + $0x38] sm:$0xf]
    %v738 = vld [vmem:[%s722 + $0x3c] sm:$0x1]
    %v739 = vld [vmem:[%s722 + $0x40] sm:$0xf]
    %v740 = vld [vmem:[%s722 + $0x44] sm:$0x1]
    %v741 = vld [vmem:[%s722 + $0x48] sm:$0xf]
    %v742 = vld [vmem:[%s722 + $0x4c] sm:$0x1]
    %v743 = vld [vmem:[%s722 + $0x58] sm:$0xf]
    %v744 = vld [vmem:[%s722 + $0x5c] sm:$0x1]
    %v745 = vld [vmem:[%s722 + $0x60] sm:$0xf]
    %v746 = vld [vmem:[%s722 + $0x64] sm:$0x1]
    %v747 = vld [vmem:[%s722 + $0x68] sm:$0xf]
    %v748 = vld [vmem:[%s722 + $0x6c] sm:$0x1]
    %v749 = vld [vmem:[%s722 + $0x70] sm:$0xf]
    %v750 = vld [vmem:[%s722 + $0x74] sm:$0x1]
    %v751 = vld [vmem:[%s722 + $0x78] sm:$0xf]
    %v752 = vld [vmem:[%s722 + $0x7c] sm:$0x1]
    %v753 = vld [vmem:[%s722 + $0x80] sm:$0xf]
    %v754 = vld [vmem:[%s722 + $0x84] sm:$0x1]
    %v755 = vld [vmem:[%s722 + $0x88] sm:$0xf]
    %v756 = vld [vmem:[%s722 + $0x8c] sm:$0x1]
    %v757 = vld [vmem:[%s722 + $0x90] sm:$0xf]
    %v758 = vld [vmem:[%s722 + $0x94] sm:$0x1]
    %v759 = vld [vmem:[%s722 + $0x98] sm:$0xf]
    %v760 = vld [vmem:[%s722 + $0x9c] sm:$0x1]
    %v761 = vld [vmem:[%s722 + $0xa0] sm:$0xf]
    %v762 = vld [vmem:[%s722 + $0xa4] sm:$0x1]
    %803 = vrot.lane.b32.xlu0 %v723, 8
    %v804 = vpop.permute.xlu0 %803
    %805 = vrot.lane.b32.xlu0 %v724, 8
    %v806 = vpop.permute.xlu0 %805
    %807 = vrot.lane.b32.xlu0 %v725, 8
    %v808 = vpop.permute.xlu0 %807
    %809 = vrot.lane.b32.xlu0 %v726, 8
    %v810 = vpop.permute.xlu0 %809
    %811 = vrot.lane.b32.xlu0 %v727, 8
    %v812 = vpop.permute.xlu0 %811
    %813 = vrot.lane.b32.xlu0 %v728, 8
    %v814 = vpop.permute.xlu0 %813
    %815 = vrot.lane.b32.xlu0 %v729, 8
    %v816 = vpop.permute.xlu0 %815
    %817 = vrot.lane.b32.xlu0 %v730, 8
    %v818 = vpop.permute.xlu0 %817
    %819 = vrot.lane.b32.xlu0 %v731, 8
    %v820 = vpop.permute.xlu0 %819
    %821 = vrot.lane.b32.xlu0 %v732, 8
    %v822 = vpop.permute.xlu0 %821
    %823 = vrot.lane.b32.xlu0 %v733, 8
    %v824 = vpop.permute.xlu0 %823
    %825 = vrot.lane.b32.xlu0 %v734, 8
    %v826 = vpop.permute.xlu0 %825
    %827 = vrot.lane.b32.xlu0 %v735, 8
    %v828 = vpop.permute.xlu0 %827
    %829 = vrot.lane.b32.xlu0 %v736, 8
    %v830 = vpop.permute.xlu0 %829
    %831 = vrot.lane.b32.xlu0 %v737, 8
    %v832 = vpop.permute.xlu0 %831
    %833 = vrot.lane.b32.xlu0 %v738, 8
    %v834 = vpop.permute.xlu0 %833
    %835 = vrot.lane.b32.xlu0 %v739, 8
    %v836 = vpop.permute.xlu0 %835
    %837 = vrot.lane.b32.xlu0 %v740, 8
    %v838 = vpop.permute.xlu0 %837
    %839 = vrot.lane.b32.xlu0 %v741, 8
    %v840 = vpop.permute.xlu0 %839
    %841 = vrot.lane.b32.xlu0 %v742, 8
    %v842 = vpop.permute.xlu0 %841
    %843 = vrot.lane.b32.xlu0 %v743, 8
    %v844 = vpop.permute.xlu0 %843
    %845 = vrot.lane.b32.xlu0 %v744, 8
    %v846 = vpop.permute.xlu0 %845
    %847 = vrot.lane.b32.xlu0 %v745, 8
    %v848 = vpop.permute.xlu0 %847
    %849 = vrot.lane.b32.xlu0 %v746, 8
    %v850 = vpop.permute.xlu0 %849
    %851 = vrot.lane.b32.xlu0 %v747, 8
    %v852 = vpop.permute.xlu0 %851
    %853 = vrot.lane.b32.xlu0 %v748, 8
    %v854 = vpop.permute.xlu0 %853
    %855 = vrot.lane.b32.xlu0 %v749, 8
    %v856 = vpop.permute.xlu0 %855
    %857 = vrot.lane.b32.xlu0 %v750, 8
    %v858 = vpop.permute.xlu0 %857
    %859 = vrot.lane.b32.xlu0 %v751, 8
    %v860 = vpop.permute.xlu0 %859
    %861 = vrot.lane.b32.xlu0 %v752, 8
    %v862 = vpop.permute.xlu0 %861
    %863 = vrot.lane.b32.xlu0 %v753, 8
    %v864 = vpop.permute.xlu0 %863
    %865 = vrot.lane.b32.xlu0 %v754, 8
    %v866 = vpop.permute.xlu0 %865
    %867 = vrot.lane.b32.xlu0 %v755, 8
    %v868 = vpop.permute.xlu0 %867
    %869 = vrot.lane.b32.xlu0 %v756, 8
    %v870 = vpop.permute.xlu0 %869
    %871 = vrot.lane.b32.xlu0 %v757, 8
    %v872 = vpop.permute.xlu0 %871
    %873 = vrot.lane.b32.xlu0 %v758, 8
    %v874 = vpop.permute.xlu0 %873
    %875 = vrot.lane.b32.xlu0 %v759, 8
    %v876 = vpop.permute.xlu0 %875
    %877 = vrot.lane.b32.xlu0 %v760, 8
    %v878 = vpop.permute.xlu0 %877
    %879 = vrot.lane.b32.xlu0 %v761, 8
    %v880 = vpop.permute.xlu0 %879
    %881 = vrot.lane.b32.xlu0 %v762, 8
    %v882 = vpop.permute.xlu0 %881
    %vm923 = vcmask 93248
    %924 = vst.msk [vmem:[#allocation2] sm:$0xf] %vm923, %v804
    %vm925 = vcmask 90176
    %926 = vst.msk [vmem:[#allocation2 + $0x4] sm:$0x1] %vm925, %v806
    %927 = vst.msk [vmem:[#allocation2 + $0x8] sm:$0xf] %vm923, %v808
    %928 = vst.msk [vmem:[#allocation2 + $0xc] sm:$0x1] %vm925, %v810
    %929 = vst.msk [vmem:[#allocation2 + $0x10] sm:$0xf] %vm923, %v812
    %930 = vst.msk [vmem:[#allocation2 + $0x14] sm:$0x1] %vm925, %v814
    %931 = vst.msk [vmem:[#allocation2 + $0x18] sm:$0xf] %vm923, %v816
    %932 = vst.msk [vmem:[#allocation2 + $0x1c] sm:$0x1] %vm925, %v818
    %933 = vst.msk [vmem:[#allocation2 + $0x20] sm:$0xf] %vm923, %v820
    %934 = vst.msk [vmem:[#allocation2 + $0x24] sm:$0x1] %vm925, %v822
    %935 = vst.msk [vmem:[#allocation2 + $0x28] sm:$0xf] %vm923, %v824
    %936 = vst.msk [vmem:[#allocation2 + $0x2c] sm:$0x1] %vm925, %v826
    %937 = vst.msk [vmem:[#allocation2 + $0x30] sm:$0xf] %vm923, %v828
    %938 = vst.msk [vmem:[#allocation2 + $0x34] sm:$0x1] %vm925, %v830
    %939 = vst.msk [vmem:[#allocation2 + $0x38] sm:$0xf] %vm923, %v832
    %940 = vst.msk [vmem:[#allocation2 + $0x3c] sm:$0x1] %vm925, %v834
    %941 = vst.msk [vmem:[#allocation2 + $0x40] sm:$0xf] %vm923, %v836
    %942 = vst.msk [vmem:[#allocation2 + $0x44] sm:$0x1] %vm925, %v838
    %943 = vst.msk [vmem:[#allocation2 + $0x48] sm:$0xf] %vm923, %v840
    %944 = vst.msk [vmem:[#allocation2 + $0x4c] sm:$0x1] %vm925, %v842
    %945 = vst.msk [vmem:[#allocation2 + $0x50] sm:$0xf] %vm923, %v844
    %946 = vst.msk [vmem:[#allocation2 + $0x54] sm:$0x1] %vm925, %v846
    %947 = vst.msk [vmem:[#allocation2 + $0x58] sm:$0xf] %vm923, %v848
    %948 = vst.msk [vmem:[#allocation2 + $0x5c] sm:$0x1] %vm925, %v850
    %949 = vst.msk [vmem:[#allocation2 + $0x60] sm:$0xf] %vm923, %v852
    %950 = vst.msk [vmem:[#allocation2 + $0x64] sm:$0x1] %vm925, %v854
    %951 = vst.msk [vmem:[#allocation2 + $0x68] sm:$0xf] %vm923, %v856
    %952 = vst.msk [vmem:[#allocation2 + $0x6c] sm:$0x1] %vm925, %v858
    %953 = vst.msk [vmem:[#allocation2 + $0x70] sm:$0xf] %vm923, %v860
    %954 = vst.msk [vmem:[#allocation2 + $0x74] sm:$0x1] %vm925, %v862
    %955 = vst.msk [vmem:[#allocation2 + $0x78] sm:$0xf] %vm923, %v864
    %956 = vst.msk [vmem:[#allocation2 + $0x7c] sm:$0x1] %vm925, %v866
    %957 = vst.msk [vmem:[#allocation2 + $0x80] sm:$0xf] %vm923, %v868
    %958 = vst.msk [vmem:[#allocation2 + $0x84] sm:$0x1] %vm925, %v870
    %959 = vst.msk [vmem:[#allocation2 + $0x88] sm:$0xf] %vm923, %v872
    %960 = vst.msk [vmem:[#allocation2 + $0x8c] sm:$0x1] %vm925, %v874
    %961 = vst.msk [vmem:[#allocation2 + $0x90] sm:$0xf] %vm923, %v876
    %962 = vst.msk [vmem:[#allocation2 + $0x94] sm:$0x1] %vm925, %v878
    %963 = vst.msk [vmem:[#allocation2 + $0x98] sm:$0xf] %vm923, %v880
    %964 = vst.msk [vmem:[#allocation2 + $0x9c] sm:$0x1] %vm925, %v882
    %v965 = vld [vmem:[%s722] sm:$0xf]
    %v966 = vld [vmem:[%s722 + $0x4] sm:$0x3]
    %v967 = vld [vmem:[%s722 + $0x8] sm:$0xf]
    %v968 = vld [vmem:[%s722 + $0xc] sm:$0x3]
    %v969 = vld [vmem:[%s722 + $0x10] sm:$0xf]
    %v970 = vld [vmem:[%s722 + $0x14] sm:$0x3]
    %v971 = vld [vmem:[%s722 + $0x18] sm:$0xf]
    %v972 = vld [vmem:[%s722 + $0x1c] sm:$0x3]
    %v973 = vld [vmem:[%s722 + $0x20] sm:$0xf]
    %v974 = vld [vmem:[%s722 + $0x24] sm:$0x3]
    %v975 = vld [vmem:[%s722 + $0x28] sm:$0xf]
    %v976 = vld [vmem:[%s722 + $0x2c] sm:$0x3]
    %v977 = vld [vmem:[%s722 + $0x30] sm:$0xf]
    %v978 = vld [vmem:[%s722 + $0x34] sm:$0x3]
    %v979 = vld [vmem:[%s722 + $0x38] sm:$0xf]
    %v980 = vld [vmem:[%s722 + $0x3c] sm:$0x3]
    %v981 = vld [vmem:[%s722 + $0x40] sm:$0xf]
    %v982 = vld [vmem:[%s722 + $0x44] sm:$0x3]
    %v983 = vld [vmem:[%s722 + $0x48] sm:$0xf]
    %v984 = vld [vmem:[%s722 + $0x4c] sm:$0x3]
    %v985 = vld [vmem:[%s722 + $0x58] sm:$0xf]
    %v986 = vld [vmem:[%s722 + $0x5c] sm:$0x3]
    %v987 = vld [vmem:[%s722 + $0x60] sm:$0xf]
    %v988 = vld [vmem:[%s722 + $0x64] sm:$0x3]
    %v989 = vld [vmem:[%s722 + $0x68] sm:$0xf]
    %v990 = vld [vmem:[%s722 + $0x6c] sm:$0x3]
    %v991 = vld [vmem:[%s722 + $0x70] sm:$0xf]
    %v992 = vld [vmem:[%s722 + $0x74] sm:$0x3]
    %v993 = vld [vmem:[%s722 + $0x78] sm:$0xf]
    %v994 = vld [vmem:[%s722 + $0x7c] sm:$0x3]
    %v995 = vld [vmem:[%s722 + $0x80] sm:$0xf]
    %v996 = vld [vmem:[%s722 + $0x84] sm:$0x3]
    %v997 = vld [vmem:[%s722 + $0x88] sm:$0xf]
    %v998 = vld [vmem:[%s722 + $0x8c] sm:$0x3]
    %v999 = vld [vmem:[%s722 + $0x90] sm:$0xf]
    %v1000 = vld [vmem:[%s722 + $0x94] sm:$0x3]
    %v1001 = vld [vmem:[%s722 + $0x98] sm:$0xf]
    %v1002 = vld [vmem:[%s722 + $0x9c] sm:$0x3]
    %v1003 = vld [vmem:[%s722 + $0xa0] sm:$0xf]
    %v1004 = vld [vmem:[%s722 + $0xa4] sm:$0x3]
    %v1006 = vshrl.u32 %v965, 16
    %v1008 = vrot.slane %v1006, 4
    %v1009 = vshll.u32 %v965, 16
    %v1011 = vrot.slane %v1009, 5
    %v1012 = vor.u32 %v1008, %v1011
    %v1013 = vrot.slane %v1012, 4
    %v1015 = vshll.u32 %v966, 16
    %v1017 = vrot.slane %v1015, 5
    %v1018 = vsel %vm179, %v1013, %v1017
    %v1019 = vshrl.u32 %v966, 16
    %v1021 = vrot.slane %v1019, 4
    %v1022 = vor.u32 %v1021, %v1017
    %v1023 = vrot.slane %v1022, 4
    %v1025 = vshrl.u32 %v967, 16
    %v1027 = vrot.slane %v1025, 4
    %v1028 = vshll.u32 %v967, 16
    %v1030 = vrot.slane %v1028, 5
    %v1031 = vor.u32 %v1027, %v1030
    %v1032 = vrot.slane %v1031, 4
    %v1034 = vshll.u32 %v968, 16
    %v1036 = vrot.slane %v1034, 5
    %v1037 = vsel %vm179, %v1032, %v1036
    %v1038 = vshrl.u32 %v968, 16
    %v1040 = vrot.slane %v1038, 4
    %v1041 = vor.u32 %v1040, %v1036
    %v1042 = vrot.slane %v1041, 4
    %v1044 = vshrl.u32 %v969, 16
    %v1046 = vrot.slane %v1044, 4
    %v1047 = vshll.u32 %v969, 16
    %v1049 = vrot.slane %v1047, 5
    %v1050 = vor.u32 %v1046, %v1049
    %v1051 = vrot.slane %v1050, 4
    %v1053 = vshll.u32 %v970, 16
    %v1055 = vrot.slane %v1053, 5
    %v1056 = vsel %vm179, %v1051, %v1055
    %v1057 = vshrl.u32 %v970, 16
    %v1059 = vrot.slane %v1057, 4
    %v1060 = vor.u32 %v1059, %v1055
    %v1061 = vrot.slane %v1060, 4
    %v1063 = vshrl.u32 %v971, 16
    %v1065 = vrot.slane %v1063, 4
    %v1066 = vshll.u32 %v971, 16
    %v1068 = vrot.slane %v1066, 5
    %v1069 = vor.u32 %v1065, %v1068
    %v1070 = vrot.slane %v1069, 4
    %v1072 = vshll.u32 %v972, 16
    %v1074 = vrot.slane %v1072, 5
    %v1075 = vsel %vm179, %v1070, %v1074
    %v1076 = vshrl.u32 %v972, 16
    %v1078 = vrot.slane %v1076, 4
    %v1079 = vor.u32 %v1078, %v1074
    %v1080 = vrot.slane %v1079, 4
    %v1082 = vshrl.u32 %v973, 16
    %v1084 = vrot.slane %v1082, 4
    %v1085 = vshll.u32 %v973, 16
    %v1087 = vrot.slane %v1085, 5
    %v1088 = vor.u32 %v1084, %v1087
    %v1089 = vrot.slane %v1088, 4
    %v1091 = vshll.u32 %v974, 16
    %v1093 = vrot.slane %v1091, 5
    %v1094 = vsel %vm179, %v1089, %v1093
    %v1095 = vshrl.u32 %v974, 16
    %v1097 = vrot.slane %v1095, 4
    %v1098 = vor.u32 %v1097, %v1093
    %v1099 = vrot.slane %v1098, 4
    %v1101 = vshrl.u32 %v975, 16
    %v1103 = vrot.slane %v1101, 4
    %v1104 = vshll.u32 %v975, 16
    %v1106 = vrot.slane %v1104, 5
    %v1107 = vor.u32 %v1103, %v1106
    %v1108 = vrot.slane %v1107, 4
    %v1110 = vshll.u32 %v976, 16
    %v1112 = vrot.slane %v1110, 5
    %v1113 = vsel %vm179, %v1108, %v1112
    %v1114 = vshrl.u32 %v976, 16
    %v1116 = vrot.slane %v1114, 4
    %v1117 = vor.u32 %v1116, %v1112
    %v1118 = vrot.slane %v1117, 4
    %v1120 = vshrl.u32 %v977, 16
    %v1122 = vrot.slane %v1120, 4
    %v1123 = vshll.u32 %v977, 16
    %v1125 = vrot.slane %v1123, 5
    %v1126 = vor.u32 %v1122, %v1125
    %v1127 = vrot.slane %v1126, 4
    %v1129 = vshll.u32 %v978, 16
    %v1131 = vrot.slane %v1129, 5
    %v1132 = vsel %vm179, %v1127, %v1131
    %v1133 = vshrl.u32 %v978, 16
    %v1135 = vrot.slane %v1133, 4
    %v1136 = vor.u32 %v1135, %v1131
    %v1137 = vrot.slane %v1136, 4
    %v1139 = vshrl.u32 %v979, 16
    %v1141 = vrot.slane %v1139, 4
    %v1142 = vshll.u32 %v979, 16
    %v1144 = vrot.slane %v1142, 5
    %v1145 = vor.u32 %v1141, %v1144
    %v1146 = vrot.slane %v1145, 4
    %v1148 = vshll.u32 %v980, 16
    %v1150 = vrot.slane %v1148, 5
    %v1151 = vsel %vm179, %v1146, %v1150
    %v1152 = vshrl.u32 %v980, 16
    %v1154 = vrot.slane %v1152, 4
    %v1155 = vor.u32 %v1154, %v1150
    %v1156 = vrot.slane %v1155, 4
    %v1158 = vshrl.u32 %v981, 16
    %v1160 = vrot.slane %v1158, 4
    %v1161 = vshll.u32 %v981, 16
    %v1163 = vrot.slane %v1161, 5
    %v1164 = vor.u32 %v1160, %v1163
    %v1165 = vrot.slane %v1164, 4
    %v1167 = vshll.u32 %v982, 16
    %v1169 = vrot.slane %v1167, 5
    %v1170 = vsel %vm179, %v1165, %v1169
    %v1171 = vshrl.u32 %v982, 16
    %v1173 = vrot.slane %v1171, 4
    %v1174 = vor.u32 %v1173, %v1169
    %v1175 = vrot.slane %v1174, 4
    %v1177 = vshrl.u32 %v983, 16
    %v1179 = vrot.slane %v1177, 4
    %v1180 = vshll.u32 %v983, 16
    %v1182 = vrot.slane %v1180, 5
    %v1183 = vor.u32 %v1179, %v1182
    %v1184 = vrot.slane %v1183, 4
    %v1186 = vshll.u32 %v984, 16
    %v1188 = vrot.slane %v1186, 5
    %v1189 = vsel %vm179, %v1184, %v1188
    %v1190 = vshrl.u32 %v984, 16
    %v1192 = vrot.slane %v1190, 4
    %v1193 = vor.u32 %v1192, %v1188
    %v1194 = vrot.slane %v1193, 4
    %v1196 = vshrl.u32 %v985, 16
    %v1198 = vrot.slane %v1196, 4
    %v1199 = vshll.u32 %v985, 16
    %v1201 = vrot.slane %v1199, 5
    %v1202 = vor.u32 %v1198, %v1201
    %v1203 = vrot.slane %v1202, 4
    %v1205 = vshll.u32 %v986, 16
    %v1207 = vrot.slane %v1205, 5
    %v1208 = vsel %vm179, %v1203, %v1207
    %v1209 = vshrl.u32 %v986, 16
    %v1211 = vrot.slane %v1209, 4
    %v1212 = vor.u32 %v1211, %v1207
    %v1213 = vrot.slane %v1212, 4
    %v1215 = vshrl.u32 %v987, 16
    %v1217 = vrot.slane %v1215, 4
    %v1218 = vshll.u32 %v987, 16
    %v1220 = vrot.slane %v1218, 5
    %v1221 = vor.u32 %v1217, %v1220
    %v1222 = vrot.slane %v1221, 4
    %v1224 = vshll.u32 %v988, 16
    %v1226 = vrot.slane %v1224, 5
    %v1227 = vsel %vm179, %v1222, %v1226
    %v1228 = vshrl.u32 %v988, 16
    %v1230 = vrot.slane %v1228, 4
    %v1231 = vor.u32 %v1230, %v1226
    %v1232 = vrot.slane %v1231, 4
    %v1234 = vshrl.u32 %v989, 16
    %v1236 = vrot.slane %v1234, 4
    %v1237 = vshll.u32 %v989, 16
    %v1239 = vrot.slane %v1237, 5
    %v1240 = vor.u32 %v1236, %v1239
    %v1241 = vrot.slane %v1240, 4
    %v1243 = vshll.u32 %v990, 16
    %v1245 = vrot.slane %v1243, 5
    %v1246 = vsel %vm179, %v1241, %v1245
    %v1247 = vshrl.u32 %v990, 16
    %v1249 = vrot.slane %v1247, 4
    %v1250 = vor.u32 %v1249, %v1245
    %v1251 = vrot.slane %v1250, 4
    %v1253 = vshrl.u32 %v991, 16
    %v1255 = vrot.slane %v1253, 4
    %v1256 = vshll.u32 %v991, 16
    %v1258 = vrot.slane %v1256, 5
    %v1259 = vor.u32 %v1255, %v1258
    %v1260 = vrot.slane %v1259, 4
    %v1262 = vshll.u32 %v992, 16
    %v1264 = vrot.slane %v1262, 5
    %v1265 = vsel %vm179, %v1260, %v1264
    %v1266 = vshrl.u32 %v992, 16
    %v1268 = vrot.slane %v1266, 4
    %v1269 = vor.u32 %v1268, %v1264
    %v1270 = vrot.slane %v1269, 4
    %v1272 = vshrl.u32 %v993, 16
    %v1274 = vrot.slane %v1272, 4
    %v1275 = vshll.u32 %v993, 16
    %v1277 = vrot.slane %v1275, 5
    %v1278 = vor.u32 %v1274, %v1277
    %v1279 = vrot.slane %v1278, 4
    %v1281 = vshll.u32 %v994, 16
    %v1283 = vrot.slane %v1281, 5
    %v1284 = vsel %vm179, %v1279, %v1283
    %v1285 = vshrl.u32 %v994, 16
    %v1287 = vrot.slane %v1285, 4
    %v1288 = vor.u32 %v1287, %v1283
    %v1289 = vrot.slane %v1288, 4
    %v1291 = vshrl.u32 %v995, 16
    %v1293 = vrot.slane %v1291, 4
    %v1294 = vshll.u32 %v995, 16
    %v1296 = vrot.slane %v1294, 5
    %v1297 = vor.u32 %v1293, %v1296
    %v1298 = vrot.slane %v1297, 4
    %v1300 = vshll.u32 %v996, 16
    %v1302 = vrot.slane %v1300, 5
    %v1303 = vsel %vm179, %v1298, %v1302
    %v1304 = vshrl.u32 %v996, 16
    %v1306 = vrot.slane %v1304, 4
    %v1307 = vor.u32 %v1306, %v1302
    %v1308 = vrot.slane %v1307, 4
    %v1310 = vshrl.u32 %v997, 16
    %v1312 = vrot.slane %v1310, 4
    %v1313 = vshll.u32 %v997, 16
    %v1315 = vrot.slane %v1313, 5
    %v1316 = vor.u32 %v1312, %v1315
    %v1317 = vrot.slane %v1316, 4
    %v1319 = vshll.u32 %v998, 16
    %v1321 = vrot.slane %v1319, 5
    %v1322 = vsel %vm179, %v1317, %v1321
    %v1323 = vshrl.u32 %v998, 16
    %v1325 = vrot.slane %v1323, 4
    %v1326 = vor.u32 %v1325, %v1321
    %v1327 = vrot.slane %v1326, 4
    %v1329 = vshrl.u32 %v999, 16
    %v1331 = vrot.slane %v1329, 4
    %v1332 = vshll.u32 %v999, 16
    %v1334 = vrot.slane %v1332, 5
    %v1335 = vor.u32 %v1331, %v1334
    %v1336 = vrot.slane %v1335, 4
    %v1338 = vshll.u32 %v1000, 16
    %v1340 = vrot.slane %v1338, 5
    %v1341 = vsel %vm179, %v1336, %v1340
    %v1342 = vshrl.u32 %v1000, 16
    %v1344 = vrot.slane %v1342, 4
    %v1345 = vor.u32 %v1344, %v1340
    %v1346 = vrot.slane %v1345, 4
    %v1348 = vshrl.u32 %v1001, 16
    %v1350 = vrot.slane %v1348, 4
    %v1351 = vshll.u32 %v1001, 16
    %v1353 = vrot.slane %v1351, 5
    %v1354 = vor.u32 %v1350, %v1353
    %v1355 = vrot.slane %v1354, 4
    %v1357 = vshll.u32 %v1002, 16
    %v1359 = vrot.slane %v1357, 5
    %v1360 = vsel %vm179, %v1355, %v1359
    %v1361 = vshrl.u32 %v1002, 16
    %v1363 = vrot.slane %v1361, 4
    %v1364 = vor.u32 %v1363, %v1359
    %v1365 = vrot.slane %v1364, 4
    %v1367 = vshrl.u32 %v1003, 16
    %v1369 = vrot.slane %v1367, 4
    %v1370 = vshll.u32 %v1003, 16
    %v1372 = vrot.slane %v1370, 5
    %v1373 = vor.u32 %v1369, %v1372
    %v1374 = vrot.slane %v1373, 4
    %v1376 = vshll.u32 %v1004, 16
    %v1378 = vrot.slane %v1376, 5
    %v1379 = vsel %vm179, %v1374, %v1378
    %v1380 = vshrl.u32 %v1004, 16
    %v1382 = vrot.slane %v1380, 4
    %v1383 = vor.u32 %v1382, %v1378
    %v1384 = vrot.slane %v1383, 4
    %1385 = vrot.lane.b32.xlu0 %v1018, 12
    %v1386 = vpop.permute.xlu0 %1385
    %1387 = vrot.lane.b32.xlu0 %v1023, 12
    %v1388 = vpop.permute.xlu0 %1387
    %1389 = vrot.lane.b32.xlu0 %v1037, 12
    %v1390 = vpop.permute.xlu0 %1389
    %1391 = vrot.lane.b32.xlu0 %v1042, 12
    %v1392 = vpop.permute.xlu0 %1391
    %1393 = vrot.lane.b32.xlu0 %v1056, 12
    %v1394 = vpop.permute.xlu0 %1393
    %1395 = vrot.lane.b32.xlu0 %v1061, 12
    %v1396 = vpop.permute.xlu0 %1395
    %1397 = vrot.lane.b32.xlu0 %v1075, 12
    %v1398 = vpop.permute.xlu0 %1397
    %1399 = vrot.lane.b32.xlu0 %v1080, 12
    %v1400 = vpop.permute.xlu0 %1399
    %1401 = vrot.lane.b32.xlu0 %v1094, 12
    %v1402 = vpop.permute.xlu0 %1401
    %1403 = vrot.lane.b32.xlu0 %v1099, 12
    %v1404 = vpop.permute.xlu0 %1403
    %1405 = vrot.lane.b32.xlu0 %v1113, 12
    %v1406 = vpop.permute.xlu0 %1405
    %1407 = vrot.lane.b32.xlu0 %v1118, 12
    %v1408 = vpop.permute.xlu0 %1407
    %1409 = vrot.lane.b32.xlu0 %v1132, 12
    %v1410 = vpop.permute.xlu0 %1409
    %1411 = vrot.lane.b32.xlu0 %v1137, 12
    %v1412 = vpop.permute.xlu0 %1411
    %1413 = vrot.lane.b32.xlu0 %v1151, 12
    %v1414 = vpop.permute.xlu0 %1413
    %1415 = vrot.lane.b32.xlu0 %v1156, 12
    %v1416 = vpop.permute.xlu0 %1415
    %1417 = vrot.lane.b32.xlu0 %v1170, 12
    %v1418 = vpop.permute.xlu0 %1417
    %1419 = vrot.lane.b32.xlu0 %v1175, 12
    %v1420 = vpop.permute.xlu0 %1419
    %1421 = vrot.lane.b32.xlu0 %v1189, 12
    %v1422 = vpop.permute.xlu0 %1421
    %1423 = vrot.lane.b32.xlu0 %v1194, 12
    %v1424 = vpop.permute.xlu0 %1423
    %1425 = vrot.lane.b32.xlu0 %v1208, 12
    %v1426 = vpop.permute.xlu0 %1425
    %1427 = vrot.lane.b32.xlu0 %v1213, 12
    %v1428 = vpop.permute.xlu0 %1427
    %1429 = vrot.lane.b32.xlu0 %v1227, 12
    %v1430 = vpop.permute.xlu0 %1429
    %1431 = vrot.lane.b32.xlu0 %v1232, 12
    %v1432 = vpop.permute.xlu0 %1431
    %1433 = vrot.lane.b32.xlu0 %v1246, 12
    %v1434 = vpop.permute.xlu0 %1433
    %1435 = vrot.lane.b32.xlu0 %v1251, 12
    %v1436 = vpop.permute.xlu0 %1435
    %1437 = vrot.lane.b32.xlu0 %v1265, 12
    %v1438 = vpop.permute.xlu0 %1437
    %1439 = vrot.lane.b32.xlu0 %v1270, 12
    %v1440 = vpop.permute.xlu0 %1439
    %1441 = vrot.lane.b32.xlu0 %v1284, 12
    %v1442 = vpop.permute.xlu0 %1441
    %1443 = vrot.lane.b32.xlu0 %v1289, 12
    %v1444 = vpop.permute.xlu0 %1443
    %1445 = vrot.lane.b32.xlu0 %v1303, 12
    %v1446 = vpop.permute.xlu0 %1445
    %1447 = vrot.lane.b32.xlu0 %v1308, 12
    %v1448 = vpop.permute.xlu0 %1447
    %1449 = vrot.lane.b32.xlu0 %v1322, 12
    %v1450 = vpop.permute.xlu0 %1449
    %1451 = vrot.lane.b32.xlu0 %v1327, 12
    %v1452 = vpop.permute.xlu0 %1451
    %1453 = vrot.lane.b32.xlu0 %v1341, 12
    %v1454 = vpop.permute.xlu0 %1453
    %1455 = vrot.lane.b32.xlu0 %v1346, 12
    %v1456 = vpop.permute.xlu0 %1455
    %1457 = vrot.lane.b32.xlu0 %v1360, 12
    %v1458 = vpop.permute.xlu0 %1457
    %1459 = vrot.lane.b32.xlu0 %v1365, 12
    %v1460 = vpop.permute.xlu0 %1459
    %1461 = vrot.lane.b32.xlu0 %v1379, 12
    %v1462 = vpop.permute.xlu0 %1461
    %1463 = vrot.lane.b32.xlu0 %v1384, 12
    %v1464 = vpop.permute.xlu0 %1463
    %vm1505 = vcmask 126048
    %1506 = vst.msk [vmem:[#allocation2] sm:$0xf] %vm1505, %v1386
    %vm1507 = vcmask 122976
    %1508 = vst.msk [vmem:[#allocation2 + $0x4] sm:$0x1] %vm1507, %v1388
    %1509 = vst.msk [vmem:[#allocation2 + $0x8] sm:$0xf] %vm1505, %v1390
    %1510 = vst.msk [vmem:[#allocation2 + $0xc] sm:$0x1] %vm1507, %v1392
    %1511 = vst.msk [vmem:[#allocation2 + $0x10] sm:$0xf] %vm1505, %v1394
    %1512 = vst.msk [vmem:[#allocation2 + $0x14] sm:$0x1] %vm1507, %v1396
    %1513 = vst.msk [vmem:[#allocation2 + $0x18] sm:$0xf] %vm1505, %v1398
    %1514 = vst.msk [vmem:[#allocation2 + $0x1c] sm:$0x1] %vm1507, %v1400
    %1515 = vst.msk [vmem:[#allocation2 + $0x20] sm:$0xf] %vm1505, %v1402
    %1516 = vst.msk [vmem:[#allocation2 + $0x24] sm:$0x1] %vm1507, %v1404
    %1517 = vst.msk [vmem:[#allocation2 + $0x28] sm:$0xf] %vm1505, %v1406
    %1518 = vst.msk [vmem:[#allocation2 + $0x2c] sm:$0x1] %vm1507, %v1408
    %1519 = vst.msk [vmem:[#allocation2 + $0x30] sm:$0xf] %vm1505, %v1410
    %1520 = vst.msk [vmem:[#allocation2 + $0x34] sm:$0x1] %vm1507, %v1412
    %1521 = vst.msk [vmem:[#allocation2 + $0x38] sm:$0xf] %vm1505, %v1414
    %1522 = vst.msk [vmem:[#allocation2 + $0x3c] sm:$0x1] %vm1507, %v1416
    %1523 = vst.msk [vmem:[#allocation2 + $0x40] sm:$0xf] %vm1505, %v1418
    %1524 = vst.msk [vmem:[#allocation2 + $0x44] sm:$0x1] %vm1507, %v1420
    %1525 = vst.msk [vmem:[#allocation2 + $0x48] sm:$0xf] %vm1505, %v1422
    %1526 = vst.msk [vmem:[#allocation2 + $0x4c] sm:$0x1] %vm1507, %v1424
    %1527 = vst.msk [vmem:[#allocation2 + $0x50] sm:$0xf] %vm1505, %v1426
    %1528 = vst.msk [vmem:[#allocation2 + $0x54] sm:$0x1] %vm1507, %v1428
    %1529 = vst.msk [vmem:[#allocation2 + $0x58] sm:$0xf] %vm1505, %v1430
    %1530 = vst.msk [vmem:[#allocation2 + $0x5c] sm:$0x1] %vm1507, %v1432
    %1531 = vst.msk [vmem:[#allocation2 + $0x60] sm:$0xf] %vm1505, %v1434
    %1532 = vst.msk [vmem:[#allocation2 + $0x64] sm:$0x1] %vm1507, %v1436
    %1533 = vst.msk [vmem:[#allocation2 + $0x68] sm:$0xf] %vm1505, %v1438
    %1534 = vst.msk [vmem:[#allocation2 + $0x6c] sm:$0x1] %vm1507, %v1440
    %1535 = vst.msk [vmem:[#allocation2 + $0x70] sm:$0xf] %vm1505, %v1442
    %1536 = vst.msk [vmem:[#allocation2 + $0x74] sm:$0x1] %vm1507, %v1444
    %1537 = vst.msk [vmem:[#allocation2 + $0x78] sm:$0xf] %vm1505, %v1446
    %1538 = vst.msk [vmem:[#allocation2 + $0x7c] sm:$0x1] %vm1507, %v1448
    %1539 = vst.msk [vmem:[#allocation2 + $0x80] sm:$0xf] %vm1505, %v1450
    %1540 = vst.msk [vmem:[#allocation2 + $0x84] sm:$0x1] %vm1507, %v1452
    %1541 = vst.msk [vmem:[#allocation2 + $0x88] sm:$0xf] %vm1505, %v1454
    %1542 = vst.msk [vmem:[#allocation2 + $0x8c] sm:$0x1] %vm1507, %v1456
    %1543 = vst.msk [vmem:[#allocation2 + $0x90] sm:$0xf] %vm1505, %v1458
    %1544 = vst.msk [vmem:[#allocation2 + $0x94] sm:$0x1] %vm1507, %v1460
    %1545 = vst.msk [vmem:[#allocation2 + $0x98] sm:$0xf] %vm1505, %v1462
    %1546 = vst.msk [vmem:[#allocation2 + $0x9c] sm:$0x1] %vm1507, %v1464
    %v1547 = vld [vmem:[#allocation2] sm:$0xf]
    %v1548 = vld [vmem:[#allocation2 + $0x4] sm:$0x1]
    %v1549 = vld [vmem:[#allocation2 + $0x8] sm:$0xf]
    %v1550 = vld [vmem:[#allocation2 + $0xc] sm:$0x1]
    %v1551 = vld [vmem:[#allocation2 + $0x10] sm:$0xf]
    %v1552 = vld [vmem:[#allocation2 + $0x14] sm:$0x1]
    %v1553 = vld [vmem:[#allocation2 + $0x18] sm:$0xf]
    %v1554 = vld [vmem:[#allocation2 + $0x1c] sm:$0x1]
    %v1555 = vld [vmem:[#allocation2 + $0x20] sm:$0xf]
    %v1556 = vld [vmem:[#allocation2 + $0x24] sm:$0x1]
    %v1557 = vld [vmem:[#allocation2 + $0x28] sm:$0xf]
    %v1558 = vld [vmem:[#allocation2 + $0x2c] sm:$0x1]
    %v1559 = vld [vmem:[#allocation2 + $0x30] sm:$0xf]
    %v1560 = vld [vmem:[#allocation2 + $0x34] sm:$0x1]
    %v1561 = vld [vmem:[#allocation2 + $0x38] sm:$0xf]
    %v1562 = vld [vmem:[#allocation2 + $0x3c] sm:$0x1]
    %v1563 = vld [vmem:[#allocation2 + $0x40] sm:$0xf]
    %v1564 = vld [vmem:[#allocation2 + $0x44] sm:$0x1]
    %v1565 = vld [vmem:[#allocation2 + $0x48] sm:$0xf]
    %v1566 = vld [vmem:[#allocation2 + $0x4c] sm:$0x1]
    %v1567 = vld [vmem:[#allocation2 + $0x50] sm:$0xf]
    %v1568 = vld [vmem:[#allocation2 + $0x54] sm:$0x1]
    %v1569 = vld [vmem:[#allocation2 + $0x58] sm:$0xf]
    %v1570 = vld [vmem:[#allocation2 + $0x5c] sm:$0x1]
    %v1571 = vld [vmem:[#allocation2 + $0x60] sm:$0xf]
    %v1572 = vld [vmem:[#allocation2 + $0x64] sm:$0x1]
    %v1573 = vld [vmem:[#allocation2 + $0x68] sm:$0xf]
    %v1574 = vld [vmem:[#allocation2 + $0x6c] sm:$0x1]
    %v1575 = vld [vmem:[#allocation2 + $0x70] sm:$0xf]
    %v1576 = vld [vmem:[#allocation2 + $0x74] sm:$0x1]
    %v1577 = vld [vmem:[#allocation2 + $0x78] sm:$0xf]
    %v1578 = vld [vmem:[#allocation2 + $0x7c] sm:$0x1]
    %v1579 = vld [vmem:[#allocation2 + $0x80] sm:$0xf]
    %v1580 = vld [vmem:[#allocation2 + $0x84] sm:$0x1]
    %v1581 = vld [vmem:[#allocation2 + $0x88] sm:$0xf]
    %v1582 = vld [vmem:[#allocation2 + $0x8c] sm:$0x1]
    %v1583 = vld [vmem:[#allocation2 + $0x90] sm:$0xf]
    %v1584 = vld [vmem:[#allocation2 + $0x94] sm:$0x1]
    %v1585 = vld [vmem:[#allocation2 + $0x98] sm:$0xf]
    %v1586 = vld [vmem:[#allocation2 + $0x9c] sm:$0x1]
    %v1628 = vunpack.c.l.s4 1966171168
    %v1629 = vunpack.c.0.s8 %v1628
    %v1630 = vlaneseq
    %v1631 = vshrl.u32 %v1630, 7
    %v1632 = vsub.s32 %v1629, %v1631
    %v1633 = vrot.slane %v1547, %v1632
    %v1634 = vcombine.high %v1633, %v1633
    %v1636 = vunpack.c.l.s4 1966171168
    %v1637 = vunpack.c.0.s8 %v1636
    %v1638 = vlaneseq
    %v1639 = vshrl.u32 %v1638, 7
    %v1640 = vsub.s32 %v1637, %v1639
    %v1641 = vrot.slane %v1633, %v1640
    %v1643 = vunpack.c.l.s4 1966171168
    %v1644 = vunpack.c.0.s8 %v1643
    %v1645 = vlaneseq
    %v1646 = vshrl.u32 %v1645, 7
    %v1647 = vsub.s32 %v1644, %v1646
    %v1648 = vrot.slane %v1634, %v1647
    %v1649 = vcombine.high %v1641, %v1641
    %v1650 = vcombine.high %v1648, %v1648
    %v1652 = vunpack.c.l.s4 1966171168
    %v1653 = vunpack.c.0.s8 %v1652
    %v1654 = vlaneseq
    %v1655 = vshrl.u32 %v1654, 7
    %v1656 = vsub.s32 %v1653, %v1655
    %v1657 = vrot.slane %v1548, %v1656
    %v1659 = vunpack.c.l.s4 1966171168
    %v1660 = vunpack.c.0.s8 %v1659
    %v1661 = vlaneseq
    %v1662 = vshrl.u32 %v1661, 7
    %v1663 = vsub.s32 %v1660, %v1662
    %v1664 = vrot.slane %v1657, %v1663
    %v1666 = vunpack.c.l.s4 1966171168
    %v1667 = vunpack.c.0.s8 %v1666
    %v1668 = vlaneseq
    %v1669 = vshrl.u32 %v1668, 7
    %v1670 = vsub.s32 %v1667, %v1669
    %v1671 = vrot.slane %v1549, %v1670
    %v1672 = vcombine.high %v1671, %v1671
    %v1674 = vunpack.c.l.s4 1966171168
    %v1675 = vunpack.c.0.s8 %v1674
    %v1676 = vlaneseq
    %v1677 = vshrl.u32 %v1676, 7
    %v1678 = vsub.s32 %v1675, %v1677
    %v1679 = vrot.slane %v1671, %v1678
    %v1681 = vunpack.c.l.s4 1966171168
    %v1682 = vunpack.c.0.s8 %v1681
    %v1683 = vlaneseq
    %v1684 = vshrl.u32 %v1683, 7
    %v1685 = vsub.s32 %v1682, %v1684
    %v1686 = vrot.slane %v1672, %v1685
    %v1687 = vcombine.high %v1679, %v1679
    %v1688 = vcombine.high %v1686, %v1686
    %v1690 = vunpack.c.l.s4 1966171168
    %v1691 = vunpack.c.0.s8 %v1690
    %v1692 = vlaneseq
    %v1693 = vshrl.u32 %v1692, 7
    %v1694 = vsub.s32 %v1691, %v1693
    %v1695 = vrot.slane %v1550, %v1694
    %v1697 = vunpack.c.l.s4 1966171168
    %v1698 = vunpack.c.0.s8 %v1697
    %v1699 = vlaneseq
    %v1700 = vshrl.u32 %v1699, 7
    %v1701 = vsub.s32 %v1698, %v1700
    %v1702 = vrot.slane %v1695, %v1701
    %v1704 = vunpack.c.l.s4 1966171168
    %v1705 = vunpack.c.0.s8 %v1704
    %v1706 = vlaneseq
    %v1707 = vshrl.u32 %v1706, 7
    %v1708 = vsub.s32 %v1705, %v1707
    %v1709 = vrot.slane %v1551, %v1708
    %v1710 = vcombine.high %v1709, %v1709
    %v1712 = vunpack.c.l.s4 1966171168
    %v1713 = vunpack.c.0.s8 %v1712
    %v1714 = vlaneseq
    %v1715 = vshrl.u32 %v1714, 7
    %v1716 = vsub.s32 %v1713, %v1715
    %v1717 = vrot.slane %v1709, %v1716
    %v1719 = vunpack.c.l.s4 1966171168
    %v1720 = vunpack.c.0.s8 %v1719
    %v1721 = vlaneseq
    %v1722 = vshrl.u32 %v1721, 7
    %v1723 = vsub.s32 %v1720, %v1722
    %v1724 = vrot.slane %v1710, %v1723
    %v1725 = vcombine.high %v1717, %v1717
    %v1726 = vcombine.high %v1724, %v1724
    %v1728 = vunpack.c.l.s4 1966171168
    %v1729 = vunpack.c.0.s8 %v1728
    %v1730 = vlaneseq
    %v1731 = vshrl.u32 %v1730, 7
    %v1732 = vsub.s32 %v1729, %v1731
    %v1733 = vrot.slane %v1552, %v1732
    %v1735 = vunpack.c.l.s4 1966171168
    %v1736 = vunpack.c.0.s8 %v1735
    %v1737 = vlaneseq
    %v1738 = vshrl.u32 %v1737, 7
    %v1739 = vsub.s32 %v1736, %v1738
    %v1740 = vrot.slane %v1733, %v1739
    %v1742 = vunpack.c.l.s4 1966171168
    %v1743 = vunpack.c.0.s8 %v1742
    %v1744 = vlaneseq
    %v1745 = vshrl.u32 %v1744, 7
    %v1746 = vsub.s32 %v1743, %v1745
    %v1747 = vrot.slane %v1553, %v1746
    %v1748 = vcombine.high %v1747, %v1747
    %v1750 = vunpack.c.l.s4 1966171168
    %v1751 = vunpack.c.0.s8 %v1750
    %v1752 = vlaneseq
    %v1753 = vshrl.u32 %v1752, 7
    %v1754 = vsub.s32 %v1751, %v1753
    %v1755 = vrot.slane %v1747, %v1754
    %v1757 = vunpack.c.l.s4 1966171168
    %v1758 = vunpack.c.0.s8 %v1757
    %v1759 = vlaneseq
    %v1760 = vshrl.u32 %v1759, 7
    %v1761 = vsub.s32 %v1758, %v1760
    %v1762 = vrot.slane %v1748, %v1761
    %v1763 = vcombine.high %v1755, %v1755
    %v1764 = vcombine.high %v1762, %v1762
    %v1766 = vunpack.c.l.s4 1966171168
    %v1767 = vunpack.c.0.s8 %v1766
    %v1768 = vlaneseq
    %v1769 = vshrl.u32 %v1768, 7
    %v1770 = vsub.s32 %v1767, %v1769
    %v1771 = vrot.slane %v1554, %v1770
    %v1773 = vunpack.c.l.s4 1966171168
    %v1774 = vunpack.c.0.s8 %v1773
    %v1775 = vlaneseq
    %v1776 = vshrl.u32 %v1775, 7
    %v1777 = vsub.s32 %v1774, %v1776
    %v1778 = vrot.slane %v1771, %v1777
    %v1780 = vunpack.c.l.s4 1966171168
    %v1781 = vunpack.c.0.s8 %v1780
    %v1782 = vlaneseq
    %v1783 = vshrl.u32 %v1782, 7
    %v1784 = vsub.s32 %v1781, %v1783
    %v1785 = vrot.slane %v1555, %v1784
    %v1786 = vcombine.high %v1785, %v1785
    %v1788 = vunpack.c.l.s4 1966171168
    %v1789 = vunpack.c.0.s8 %v1788
    %v1790 = vlaneseq
    %v1791 = vshrl.u32 %v1790, 7
    %v1792 = vsub.s32 %v1789, %v1791
    %v1793 = vrot.slane %v1785, %v1792
    %v1795 = vunpack.c.l.s4 1966171168
    %v1796 = vunpack.c.0.s8 %v1795
    %v1797 = vlaneseq
    %v1798 = vshrl.u32 %v1797, 7
    %v1799 = vsub.s32 %v1796, %v1798
    %v1800 = vrot.slane %v1786, %v1799
    %v1801 = vcombine.high %v1793, %v1793
    %v1802 = vcombine.high %v1800, %v1800
    %v1804 = vunpack.c.l.s4 1966171168
    %v1805 = vunpack.c.0.s8 %v1804
    %v1806 = vlaneseq
    %v1807 = vshrl.u32 %v1806, 7
    %v1808 = vsub.s32 %v1805, %v1807
    %v1809 = vrot.slane %v1556, %v1808
    %v1811 = vunpack.c.l.s4 1966171168
    %v1812 = vunpack.c.0.s8 %v1811
    %v1813 = vlaneseq
    %v1814 = vshrl.u32 %v1813, 7
    %v1815 = vsub.s32 %v1812, %v1814
    %v1816 = vrot.slane %v1809, %v1815
    %v1818 = vunpack.c.l.s4 1966171168
    %v1819 = vunpack.c.0.s8 %v1818
    %v1820 = vlaneseq
    %v1821 = vshrl.u32 %v1820, 7
    %v1822 = vsub.s32 %v1819, %v1821
    %v1823 = vrot.slane %v1557, %v1822
    %v1824 = vcombine.high %v1823, %v1823
    %v1826 = vunpack.c.l.s4 1966171168
    %v1827 = vunpack.c.0.s8 %v1826
    %v1828 = vlaneseq
    %v1829 = vshrl.u32 %v1828, 7
    %v1830 = vsub.s32 %v1827, %v1829
    %v1831 = vrot.slane %v1823, %v1830
    %v1833 = vunpack.c.l.s4 1966171168
    %v1834 = vunpack.c.0.s8 %v1833
    %v1835 = vlaneseq
    %v1836 = vshrl.u32 %v1835, 7
    %v1837 = vsub.s32 %v1834, %v1836
    %v1838 = vrot.slane %v1824, %v1837
    %v1839 = vcombine.high %v1831, %v1831
    %v1840 = vcombine.high %v1838, %v1838
    %v1842 = vunpack.c.l.s4 1966171168
    %v1843 = vunpack.c.0.s8 %v1842
    %v1844 = vlaneseq
    %v1845 = vshrl.u32 %v1844, 7
    %v1846 = vsub.s32 %v1843, %v1845
    %v1847 = vrot.slane %v1558, %v1846
    %v1849 = vunpack.c.l.s4 1966171168
    %v1850 = vunpack.c.0.s8 %v1849
    %v1851 = vlaneseq
    %v1852 = vshrl.u32 %v1851, 7
    %v1853 = vsub.s32 %v1850, %v1852
    %v1854 = vrot.slane %v1847, %v1853
    %v1856 = vunpack.c.l.s4 1966171168
    %v1857 = vunpack.c.0.s8 %v1856
    %v1858 = vlaneseq
    %v1859 = vshrl.u32 %v1858, 7
    %v1860 = vsub.s32 %v1857, %v1859
    %v1861 = vrot.slane %v1559, %v1860
    %v1862 = vcombine.high %v1861, %v1861
    %v1864 = vunpack.c.l.s4 1966171168
    %v1865 = vunpack.c.0.s8 %v1864
    %v1866 = vlaneseq
    %v1867 = vshrl.u32 %v1866, 7
    %v1868 = vsub.s32 %v1865, %v1867
    %v1869 = vrot.slane %v1861, %v1868
    %v1871 = vunpack.c.l.s4 1966171168
    %v1872 = vunpack.c.0.s8 %v1871
    %v1873 = vlaneseq
    %v1874 = vshrl.u32 %v1873, 7
    %v1875 = vsub.s32 %v1872, %v1874
    %v1876 = vrot.slane %v1862, %v1875
    %v1877 = vcombine.high %v1869, %v1869
    %v1878 = vcombine.high %v1876, %v1876
    %v1880 = vunpack.c.l.s4 1966171168
    %v1881 = vunpack.c.0.s8 %v1880
    %v1882 = vlaneseq
    %v1883 = vshrl.u32 %v1882, 7
    %v1884 = vsub.s32 %v1881, %v1883
    %v1885 = vrot.slane %v1560, %v1884
    %v1887 = vunpack.c.l.s4 1966171168
    %v1888 = vunpack.c.0.s8 %v1887
    %v1889 = vlaneseq
    %v1890 = vshrl.u32 %v1889, 7
    %v1891 = vsub.s32 %v1888, %v1890
    %v1892 = vrot.slane %v1885, %v1891
    %v1894 = vunpack.c.l.s4 1966171168
    %v1895 = vunpack.c.0.s8 %v1894
    %v1896 = vlaneseq
    %v1897 = vshrl.u32 %v1896, 7
    %v1898 = vsub.s32 %v1895, %v1897
    %v1899 = vrot.slane %v1561, %v1898
    %v1900 = vcombine.high %v1899, %v1899
    %v1902 = vunpack.c.l.s4 1966171168
    %v1903 = vunpack.c.0.s8 %v1902
    %v1904 = vlaneseq
    %v1905 = vshrl.u32 %v1904, 7
    %v1906 = vsub.s32 %v1903, %v1905
    %v1907 = vrot.slane %v1899, %v1906
    %v1909 = vunpack.c.l.s4 1966171168
    %v1910 = vunpack.c.0.s8 %v1909
    %v1911 = vlaneseq
    %v1912 = vshrl.u32 %v1911, 7
    %v1913 = vsub.s32 %v1910, %v1912
    %v1914 = vrot.slane %v1900, %v1913
    %v1915 = vcombine.high %v1907, %v1907
    %v1916 = vcombine.high %v1914, %v1914
    %v1918 = vunpack.c.l.s4 1966171168
    %v1919 = vunpack.c.0.s8 %v1918
    %v1920 = vlaneseq
    %v1921 = vshrl.u32 %v1920, 7
    %v1922 = vsub.s32 %v1919, %v1921
    %v1923 = vrot.slane %v1562, %v1922
    %v1925 = vunpack.c.l.s4 1966171168
    %v1926 = vunpack.c.0.s8 %v1925
    %v1927 = vlaneseq
    %v1928 = vshrl.u32 %v1927, 7
    %v1929 = vsub.s32 %v1926, %v1928
    %v1930 = vrot.slane %v1923, %v1929
    %v1932 = vunpack.c.l.s4 1966171168
    %v1933 = vunpack.c.0.s8 %v1932
    %v1934 = vlaneseq
    %v1935 = vshrl.u32 %v1934, 7
    %v1936 = vsub.s32 %v1933, %v1935
    %v1937 = vrot.slane %v1563, %v1936
    %v1938 = vcombine.high %v1937, %v1937
    %v1940 = vunpack.c.l.s4 1966171168
    %v1941 = vunpack.c.0.s8 %v1940
    %v1942 = vlaneseq
    %v1943 = vshrl.u32 %v1942, 7
    %v1944 = vsub.s32 %v1941, %v1943
    %v1945 = vrot.slane %v1937, %v1944
    %v1947 = vunpack.c.l.s4 1966171168
    %v1948 = vunpack.c.0.s8 %v1947
    %v1949 = vlaneseq
    %v1950 = vshrl.u32 %v1949, 7
    %v1951 = vsub.s32 %v1948, %v1950
    %v1952 = vrot.slane %v1938, %v1951
    %v1953 = vcombine.high %v1945, %v1945
    %v1954 = vcombine.high %v1952, %v1952
    %v1956 = vunpack.c.l.s4 1966171168
    %v1957 = vunpack.c.0.s8 %v1956
    %v1958 = vlaneseq
    %v1959 = vshrl.u32 %v1958, 7
    %v1960 = vsub.s32 %v1957, %v1959
    %v1961 = vrot.slane %v1564, %v1960
    %v1963 = vunpack.c.l.s4 1966171168
    %v1964 = vunpack.c.0.s8 %v1963
    %v1965 = vlaneseq
    %v1966 = vshrl.u32 %v1965, 7
    %v1967 = vsub.s32 %v1964, %v1966
    %v1968 = vrot.slane %v1961, %v1967
    %v1970 = vunpack.c.l.s4 1966171168
    %v1971 = vunpack.c.0.s8 %v1970
    %v1972 = vlaneseq
    %v1973 = vshrl.u32 %v1972, 7
    %v1974 = vsub.s32 %v1971, %v1973
    %v1975 = vrot.slane %v1565, %v1974
    %v1976 = vcombine.high %v1975, %v1975
    %v1978 = vunpack.c.l.s4 1966171168
    %v1979 = vunpack.c.0.s8 %v1978
    %v1980 = vlaneseq
    %v1981 = vshrl.u32 %v1980, 7
    %v1982 = vsub.s32 %v1979, %v1981
    %v1983 = vrot.slane %v1975, %v1982
    %v1985 = vunpack.c.l.s4 1966171168
    %v1986 = vunpack.c.0.s8 %v1985
    %v1987 = vlaneseq
    %v1988 = vshrl.u32 %v1987, 7
    %v1989 = vsub.s32 %v1986, %v1988
    %v1990 = vrot.slane %v1976, %v1989
    %v1991 = vcombine.high %v1983, %v1983
    %v1992 = vcombine.high %v1990, %v1990
    %v1994 = vunpack.c.l.s4 1966171168
    %v1995 = vunpack.c.0.s8 %v1994
    %v1996 = vlaneseq
    %v1997 = vshrl.u32 %v1996, 7
    %v1998 = vsub.s32 %v1995, %v1997
    %v1999 = vrot.slane %v1566, %v1998
    %v2001 = vunpack.c.l.s4 1966171168
    %v2002 = vunpack.c.0.s8 %v2001
    %v2003 = vlaneseq
    %v2004 = vshrl.u32 %v2003, 7
    %v2005 = vsub.s32 %v2002, %v2004
    %v2006 = vrot.slane %v1999, %v2005
    %v2008 = vunpack.c.l.s4 1966171168
    %v2009 = vunpack.c.0.s8 %v2008
    %v2010 = vlaneseq
    %v2011 = vshrl.u32 %v2010, 7
    %v2012 = vsub.s32 %v2009, %v2011
    %v2013 = vrot.slane %v1567, %v2012
    %v2014 = vcombine.high %v2013, %v2013
    %v2016 = vunpack.c.l.s4 1966171168
    %v2017 = vunpack.c.0.s8 %v2016
    %v2018 = vlaneseq
    %v2019 = vshrl.u32 %v2018, 7
    %v2020 = vsub.s32 %v2017, %v2019
    %v2021 = vrot.slane %v2013, %v2020
    %v2023 = vunpack.c.l.s4 1966171168
    %v2024 = vunpack.c.0.s8 %v2023
    %v2025 = vlaneseq
    %v2026 = vshrl.u32 %v2025, 7
    %v2027 = vsub.s32 %v2024, %v2026
    %v2028 = vrot.slane %v2014, %v2027
    %v2029 = vcombine.high %v2021, %v2021
    %v2030 = vcombine.high %v2028, %v2028
    %v2032 = vunpack.c.l.s4 1966171168
    %v2033 = vunpack.c.0.s8 %v2032
    %v2034 = vlaneseq
    %v2035 = vshrl.u32 %v2034, 7
    %v2036 = vsub.s32 %v2033, %v2035
    %v2037 = vrot.slane %v1568, %v2036
    %v2039 = vunpack.c.l.s4 1966171168
    %v2040 = vunpack.c.0.s8 %v2039
    %v2041 = vlaneseq
    %v2042 = vshrl.u32 %v2041, 7
    %v2043 = vsub.s32 %v2040, %v2042
    %v2044 = vrot.slane %v2037, %v2043
    %v2046 = vunpack.c.l.s4 1966171168
    %v2047 = vunpack.c.0.s8 %v2046
    %v2048 = vlaneseq
    %v2049 = vshrl.u32 %v2048, 7
    %v2050 = vsub.s32 %v2047, %v2049
    %v2051 = vrot.slane %v1569, %v2050
    %v2052 = vcombine.high %v2051, %v2051
    %v2054 = vunpack.c.l.s4 1966171168
    %v2055 = vunpack.c.0.s8 %v2054
    %v2056 = vlaneseq
    %v2057 = vshrl.u32 %v2056, 7
    %v2058 = vsub.s32 %v2055, %v2057
    %v2059 = vrot.slane %v2051, %v2058
    %v2061 = vunpack.c.l.s4 1966171168
    %v2062 = vunpack.c.0.s8 %v2061
    %v2063 = vlaneseq
    %v2064 = vshrl.u32 %v2063, 7
    %v2065 = vsub.s32 %v2062, %v2064
    %v2066 = vrot.slane %v2052, %v2065
    %v2067 = vcombine.high %v2059, %v2059
    %v2068 = vcombine.high %v2066, %v2066
    %v2070 = vunpack.c.l.s4 1966171168
    %v2071 = vunpack.c.0.s8 %v2070
    %v2072 = vlaneseq
    %v2073 = vshrl.u32 %v2072, 7
    %v2074 = vsub.s32 %v2071, %v2073
    %v2075 = vrot.slane %v1570, %v2074
    %v2077 = vunpack.c.l.s4 1966171168
    %v2078 = vunpack.c.0.s8 %v2077
    %v2079 = vlaneseq
    %v2080 = vshrl.u32 %v2079, 7
    %v2081 = vsub.s32 %v2078, %v2080
    %v2082 = vrot.slane %v2075, %v2081
    %v2084 = vunpack.c.l.s4 1966171168
    %v2085 = vunpack.c.0.s8 %v2084
    %v2086 = vlaneseq
    %v2087 = vshrl.u32 %v2086, 7
    %v2088 = vsub.s32 %v2085, %v2087
    %v2089 = vrot.slane %v1571, %v2088
    %v2090 = vcombine.high %v2089, %v2089
    %v2092 = vunpack.c.l.s4 1966171168
    %v2093 = vunpack.c.0.s8 %v2092
    %v2094 = vlaneseq
    %v2095 = vshrl.u32 %v2094, 7
    %v2096 = vsub.s32 %v2093, %v2095
    %v2097 = vrot.slane %v2089, %v2096
    %v2099 = vunpack.c.l.s4 1966171168
    %v2100 = vunpack.c.0.s8 %v2099
    %v2101 = vlaneseq
    %v2102 = vshrl.u32 %v2101, 7
    %v2103 = vsub.s32 %v2100, %v2102
    %v2104 = vrot.slane %v2090, %v2103
    %v2105 = vcombine.high %v2097, %v2097
    %v2106 = vcombine.high %v2104, %v2104
    %v2108 = vunpack.c.l.s4 1966171168
    %v2109 = vunpack.c.0.s8 %v2108
    %v2110 = vlaneseq
    %v2111 = vshrl.u32 %v2110, 7
    %v2112 = vsub.s32 %v2109, %v2111
    %v2113 = vrot.slane %v1572, %v2112
    %v2115 = vunpack.c.l.s4 1966171168
    %v2116 = vunpack.c.0.s8 %v2115
    %v2117 = vlaneseq
    %v2118 = vshrl.u32 %v2117, 7
    %v2119 = vsub.s32 %v2116, %v2118
    %v2120 = vrot.slane %v2113, %v2119
    %v2122 = vunpack.c.l.s4 1966171168
    %v2123 = vunpack.c.0.s8 %v2122
    %v2124 = vlaneseq
    %v2125 = vshrl.u32 %v2124, 7
    %v2126 = vsub.s32 %v2123, %v2125
    %v2127 = vrot.slane %v1573, %v2126
    %v2128 = vcombine.high %v2127, %v2127
    %v2130 = vunpack.c.l.s4 1966171168
    %v2131 = vunpack.c.0.s8 %v2130
    %v2132 = vlaneseq
    %v2133 = vshrl.u32 %v2132, 7
    %v2134 = vsub.s32 %v2131, %v2133
    %v2135 = vrot.slane %v2127, %v2134
    %v2137 = vunpack.c.l.s4 1966171168
    %v2138 = vunpack.c.0.s8 %v2137
    %v2139 = vlaneseq
    %v2140 = vshrl.u32 %v2139, 7
    %v2141 = vsub.s32 %v2138, %v2140
    %v2142 = vrot.slane %v2128, %v2141
    %v2143 = vcombine.high %v2135, %v2135
    %v2144 = vcombine.high %v2142, %v2142
    %v2146 = vunpack.c.l.s4 1966171168
    %v2147 = vunpack.c.0.s8 %v2146
    %v2148 = vlaneseq
    %v2149 = vshrl.u32 %v2148, 7
    %v2150 = vsub.s32 %v2147, %v2149
    %v2151 = vrot.slane %v1574, %v2150
    %v2153 = vunpack.c.l.s4 1966171168
    %v2154 = vunpack.c.0.s8 %v2153
    %v2155 = vlaneseq
    %v2156 = vshrl.u32 %v2155, 7
    %v2157 = vsub.s32 %v2154, %v2156
    %v2158 = vrot.slane %v2151, %v2157
    %v2160 = vunpack.c.l.s4 1966171168
    %v2161 = vunpack.c.0.s8 %v2160
    %v2162 = vlaneseq
    %v2163 = vshrl.u32 %v2162, 7
    %v2164 = vsub.s32 %v2161, %v2163
    %v2165 = vrot.slane %v1575, %v2164
    %v2166 = vcombine.high %v2165, %v2165
    %v2168 = vunpack.c.l.s4 1966171168
    %v2169 = vunpack.c.0.s8 %v2168
    %v2170 = vlaneseq
    %v2171 = vshrl.u32 %v2170, 7
    %v2172 = vsub.s32 %v2169, %v2171
    %v2173 = vrot.slane %v2165, %v2172
    %v2175 = vunpack.c.l.s4 1966171168
    %v2176 = vunpack.c.0.s8 %v2175
    %v2177 = vlaneseq
    %v2178 = vshrl.u32 %v2177, 7
    %v2179 = vsub.s32 %v2176, %v2178
    %v2180 = vrot.slane %v2166, %v2179
    %v2181 = vcombine.high %v2173, %v2173
    %v2182 = vcombine.high %v2180, %v2180
    %v2184 = vunpack.c.l.s4 1966171168
    %v2185 = vunpack.c.0.s8 %v2184
    %v2186 = vlaneseq
    %v2187 = vshrl.u32 %v2186, 7
    %v2188 = vsub.s32 %v2185, %v2187
    %v2189 = vrot.slane %v1576, %v2188
    %v2191 = vunpack.c.l.s4 1966171168
    %v2192 = vunpack.c.0.s8 %v2191
    %v2193 = vlaneseq
    %v2194 = vshrl.u32 %v2193, 7
    %v2195 = vsub.s32 %v2192, %v2194
    %v2196 = vrot.slane %v2189, %v2195
    %v2198 = vunpack.c.l.s4 1966171168
    %v2199 = vunpack.c.0.s8 %v2198
    %v2200 = vlaneseq
    %v2201 = vshrl.u32 %v2200, 7
    %v2202 = vsub.s32 %v2199, %v2201
    %v2203 = vrot.slane %v1577, %v2202
    %v2204 = vcombine.high %v2203, %v2203
    %v2206 = vunpack.c.l.s4 1966171168
    %v2207 = vunpack.c.0.s8 %v2206
    %v2208 = vlaneseq
    %v2209 = vshrl.u32 %v2208, 7
    %v2210 = vsub.s32 %v2207, %v2209
    %v2211 = vrot.slane %v2203, %v2210
    %v2213 = vunpack.c.l.s4 1966171168
    %v2214 = vunpack.c.0.s8 %v2213
    %v2215 = vlaneseq
    %v2216 = vshrl.u32 %v2215, 7
    %v2217 = vsub.s32 %v2214, %v2216
    %v2218 = vrot.slane %v2204, %v2217
    %v2219 = vcombine.high %v2211, %v2211
    %v2220 = vcombine.high %v2218, %v2218
    %v2222 = vunpack.c.l.s4 1966171168
    %v2223 = vunpack.c.0.s8 %v2222
    %v2224 = vlaneseq
    %v2225 = vshrl.u32 %v2224, 7
    %v2226 = vsub.s32 %v2223, %v2225
    %v2227 = vrot.slane %v1578, %v2226
    %v2229 = vunpack.c.l.s4 1966171168
    %v2230 = vunpack.c.0.s8 %v2229
    %v2231 = vlaneseq
    %v2232 = vshrl.u32 %v2231, 7
    %v2233 = vsub.s32 %v2230, %v2232
    %v2234 = vrot.slane %v2227, %v2233
    %v2236 = vunpack.c.l.s4 1966171168
    %v2237 = vunpack.c.0.s8 %v2236
    %v2238 = vlaneseq
    %v2239 = vshrl.u32 %v2238, 7
    %v2240 = vsub.s32 %v2237, %v2239
    %v2241 = vrot.slane %v1579, %v2240
    %v2242 = vcombine.high %v2241, %v2241
    %v2244 = vunpack.c.l.s4 1966171168
    %v2245 = vunpack.c.0.s8 %v2244
    %v2246 = vlaneseq
    %v2247 = vshrl.u32 %v2246, 7
    %v2248 = vsub.s32 %v2245, %v2247
    %v2249 = vrot.slane %v2241, %v2248
    %v2251 = vunpack.c.l.s4 1966171168
    %v2252 = vunpack.c.0.s8 %v2251
    %v2253 = vlaneseq
    %v2254 = vshrl.u32 %v2253, 7
    %v2255 = vsub.s32 %v2252, %v2254
    %v2256 = vrot.slane %v2242, %v2255
    %v2257 = vcombine.high %v2249, %v2249
    %v2258 = vcombine.high %v2256, %v2256
    %v2260 = vunpack.c.l.s4 1966171168
    %v2261 = vunpack.c.0.s8 %v2260
    %v2262 = vlaneseq
    %v2263 = vshrl.u32 %v2262, 7
    %v2264 = vsub.s32 %v2261, %v2263
    %v2265 = vrot.slane %v1580, %v2264
    %v2267 = vunpack.c.l.s4 1966171168
    %v2268 = vunpack.c.0.s8 %v2267
    %v2269 = vlaneseq
    %v2270 = vshrl.u32 %v2269, 7
    %v2271 = vsub.s32 %v2268, %v2270
    %v2272 = vrot.slane %v2265, %v2271
    %v2274 = vunpack.c.l.s4 1966171168
    %v2275 = vunpack.c.0.s8 %v2274
    %v2276 = vlaneseq
    %v2277 = vshrl.u32 %v2276, 7
    %v2278 = vsub.s32 %v2275, %v2277
    %v2279 = vrot.slane %v1581, %v2278
    %v2280 = vcombine.high %v2279, %v2279
    %v2282 = vunpack.c.l.s4 1966171168
    %v2283 = vunpack.c.0.s8 %v2282
    %v2284 = vlaneseq
    %v2285 = vshrl.u32 %v2284, 7
    %v2286 = vsub.s32 %v2283, %v2285
    %v2287 = vrot.slane %v2279, %v2286
    %v2289 = vunpack.c.l.s4 1966171168
    %v2290 = vunpack.c.0.s8 %v2289
    %v2291 = vlaneseq
    %v2292 = vshrl.u32 %v2291, 7
    %v2293 = vsub.s32 %v2290, %v2292
    %v2294 = vrot.slane %v2280, %v2293
    %v2295 = vcombine.high %v2287, %v2287
    %v2296 = vcombine.high %v2294, %v2294
    %v2298 = vunpack.c.l.s4 1966171168
    %v2299 = vunpack.c.0.s8 %v2298
    %v2300 = vlaneseq
    %v2301 = vshrl.u32 %v2300, 7
    %v2302 = vsub.s32 %v2299, %v2301
    %v2303 = vrot.slane %v1582, %v2302
    %v2305 = vunpack.c.l.s4 1966171168
    %v2306 = vunpack.c.0.s8 %v2305
    %v2307 = vlaneseq
    %v2308 = vshrl.u32 %v2307, 7
    %v2309 = vsub.s32 %v2306, %v2308
    %v2310 = vrot.slane %v2303, %v2309
    %v2312 = vunpack.c.l.s4 1966171168
    %v2313 = vunpack.c.0.s8 %v2312
    %v2314 = vlaneseq
    %v2315 = vshrl.u32 %v2314, 7
    %v2316 = vsub.s32 %v2313, %v2315
    %v2317 = vrot.slane %v1583, %v2316
    %v2318 = vcombine.high %v2317, %v2317
    %v2320 = vunpack.c.l.s4 1966171168
    %v2321 = vunpack.c.0.s8 %v2320
    %v2322 = vlaneseq
    %v2323 = vshrl.u32 %v2322, 7
    %v2324 = vsub.s32 %v2321, %v2323
    %v2325 = vrot.slane %v2317, %v2324
    %v2327 = vunpack.c.l.s4 1966171168
    %v2328 = vunpack.c.0.s8 %v2327
    %v2329 = vlaneseq
    %v2330 = vshrl.u32 %v2329, 7
    %v2331 = vsub.s32 %v2328, %v2330
    %v2332 = vrot.slane %v2318, %v2331
    %v2333 = vcombine.high %v2325, %v2325
    %v2334 = vcombine.high %v2332, %v2332
    %v2336 = vunpack.c.l.s4 1966171168
    %v2337 = vunpack.c.0.s8 %v2336
    %v2338 = vlaneseq
    %v2339 = vshrl.u32 %v2338, 7
    %v2340 = vsub.s32 %v2337, %v2339
    %v2341 = vrot.slane %v1584, %v2340
    %v2343 = vunpack.c.l.s4 1966171168
    %v2344 = vunpack.c.0.s8 %v2343
    %v2345 = vlaneseq
    %v2346 = vshrl.u32 %v2345, 7
    %v2347 = vsub.s32 %v2344, %v2346
    %v2348 = vrot.slane %v2341, %v2347
    %v2350 = vunpack.c.l.s4 1966171168
    %v2351 = vunpack.c.0.s8 %v2350
    %v2352 = vlaneseq
    %v2353 = vshrl.u32 %v2352, 7
    %v2354 = vsub.s32 %v2351, %v2353
    %v2355 = vrot.slane %v1585, %v2354
    %v2356 = vcombine.high %v2355, %v2355
    %v2358 = vunpack.c.l.s4 1966171168
    %v2359 = vunpack.c.0.s8 %v2358
    %v2360 = vlaneseq
    %v2361 = vshrl.u32 %v2360, 7
    %v2362 = vsub.s32 %v2359, %v2361
    %v2363 = vrot.slane %v2355, %v2362
    %v2365 = vunpack.c.l.s4 1966171168
    %v2366 = vunpack.c.0.s8 %v2365
    %v2367 = vlaneseq
    %v2368 = vshrl.u32 %v2367, 7
    %v2369 = vsub.s32 %v2366, %v2368
    %v2370 = vrot.slane %v2356, %v2369
    %v2371 = vcombine.high %v2363, %v2363
    %v2372 = vcombine.high %v2370, %v2370
    %v2374 = vunpack.c.l.s4 1966171168
    %v2375 = vunpack.c.0.s8 %v2374
    %v2376 = vlaneseq
    %v2377 = vshrl.u32 %v2376, 7
    %v2378 = vsub.s32 %v2375, %v2377
    %v2379 = vrot.slane %v1586, %v2378
    %v2381 = vunpack.c.l.s4 1966171168
    %v2382 = vunpack.c.0.s8 %v2381
    %v2383 = vlaneseq
    %v2384 = vshrl.u32 %v2383, 7
    %v2385 = vsub.s32 %v2382, %v2384
    %v2386 = vrot.slane %v2379, %v2385
    %v2387 = vld [vmem:[#allocation6] sm:$0xf]
    %v2388 = vld [vmem:[#allocation6 + $0x4] sm:$0xf]
    %v2389 = vld [vmem:[#allocation8] sm:$0x1]
    %v2391 = vlaneseq
    %v2392 = vshrl.u32 %v2391, 7
    %v2393 = vsub.s32 0, %v2392
    %v2394 = vrot.slane %v2389, %v2393
    %v2396 = vcombine.low %v1641, %v1648
    %v2397 = vcombine.low %v1649, %v1650
    %v2398 = vcombine.low %v1664, %v1679
    %v2399 = vcombine.low %v1686, %v1687
    %v2401 = vunpack.c.l.s4 1966171168
    %v2402 = vunpack.c.0.s8 %v2401
    %v2403 = vlaneseq
    %v2404 = vshrl.u32 %v2403, 7
    %v2405 = vsub.s32 %v2402, %v2404
    %v2406 = vrot.slane %v2396, %v2405
    %v2408 = vunpack.c.l.s4 1966171168
    %v2409 = vunpack.c.0.s8 %v2408
    %v2410 = vlaneseq
    %v2411 = vshrl.u32 %v2410, 7
    %v2412 = vsub.s32 %v2409, %v2411
    %v2413 = vrot.slane %v2397, %v2412
    %v2415 = vunpack.c.l.s4 1966171168
    %v2416 = vunpack.c.0.s8 %v2415
    %v2417 = vlaneseq
    %v2418 = vshrl.u32 %v2417, 7
    %v2419 = vsub.s32 %v2416, %v2418
    %v2420 = vrot.slane %v2398, %v2419
    %v2422 = vunpack.c.l.s4 1966171168
    %v2423 = vunpack.c.0.s8 %v2422
    %v2424 = vlaneseq
    %v2425 = vshrl.u32 %v2424, 7
    %v2426 = vsub.s32 %v2423, %v2425
    %v2427 = vrot.slane %v2399, %v2426
    %v2428 = vcombine.low %v2406, %v2413
    %v2429 = vcombine.low %v2420, %v2427
    %v2431 = vunpack.c.l.s4 1966171168
    %v2432 = vunpack.c.0.s8 %v2431
    %v2433 = vlaneseq
    %v2434 = vshrl.u32 %v2433, 7
    %v2435 = vsub.s32 %v2432, %v2434
    %v2436 = vrot.slane %v2428, %v2435
    %v2438 = vunpack.c.l.s4 1966171168
    %v2439 = vunpack.c.0.s8 %v2438
    %v2440 = vlaneseq
    %v2441 = vshrl.u32 %v2440, 7
    %v2442 = vsub.s32 %v2439, %v2441
    %v2443 = vrot.slane %v2429, %v2442
    %v2444 = vcombine.low %v2436, %v2443
    %v2445 = vcombine.low %v1688, %v1702
    %v2446 = vcombine.low %v1717, %v1724
    %v2447 = vcombine.low %v1725, %v1726
    %v2448 = vcombine.low %v1740, %v1755
    %v2450 = vunpack.c.l.s4 1966171168
    %v2451 = vunpack.c.0.s8 %v2450
    %v2452 = vlaneseq
    %v2453 = vshrl.u32 %v2452, 7
    %v2454 = vsub.s32 %v2451, %v2453
    %v2455 = vrot.slane %v2445, %v2454
    %v2457 = vunpack.c.l.s4 1966171168
    %v2458 = vunpack.c.0.s8 %v2457
    %v2459 = vlaneseq
    %v2460 = vshrl.u32 %v2459, 7
    %v2461 = vsub.s32 %v2458, %v2460
    %v2462 = vrot.slane %v2446, %v2461
    %v2464 = vunpack.c.l.s4 1966171168
    %v2465 = vunpack.c.0.s8 %v2464
    %v2466 = vlaneseq
    %v2467 = vshrl.u32 %v2466, 7
    %v2468 = vsub.s32 %v2465, %v2467
    %v2469 = vrot.slane %v2447, %v2468
    %v2471 = vunpack.c.l.s4 1966171168
    %v2472 = vunpack.c.0.s8 %v2471
    %v2473 = vlaneseq
    %v2474 = vshrl.u32 %v2473, 7
    %v2475 = vsub.s32 %v2472, %v2474
    %v2476 = vrot.slane %v2448, %v2475
    %v2477 = vcombine.low %v2455, %v2462
    %v2478 = vcombine.low %v2469, %v2476
    %v2480 = vunpack.c.l.s4 1966171168
    %v2481 = vunpack.c.0.s8 %v2480
    %v2482 = vlaneseq
    %v2483 = vshrl.u32 %v2482, 7
    %v2484 = vsub.s32 %v2481, %v2483
    %v2485 = vrot.slane %v2477, %v2484
    %v2487 = vunpack.c.l.s4 1966171168
    %v2488 = vunpack.c.0.s8 %v2487
    %v2489 = vlaneseq
    %v2490 = vshrl.u32 %v2489, 7
    %v2491 = vsub.s32 %v2488, %v2490
    %v2492 = vrot.slane %v2478, %v2491
    %v2493 = vcombine.low %v2485, %v2492
    %v2494 = vcombine.low %v1762, %v1763
    %v2495 = vcombine.low %v1764, %v1778
    %v2496 = vcombine.low %v1793, %v1800
    %v2497 = vcombine.low %v1801, %v1802
    %v2499 = vunpack.c.l.s4 1966171168
    %v2500 = vunpack.c.0.s8 %v2499
    %v2501 = vlaneseq
    %v2502 = vshrl.u32 %v2501, 7
    %v2503 = vsub.s32 %v2500, %v2502
    %v2504 = vrot.slane %v2494, %v2503
    %v2506 = vunpack.c.l.s4 1966171168
    %v2507 = vunpack.c.0.s8 %v2506
    %v2508 = vlaneseq
    %v2509 = vshrl.u32 %v2508, 7
    %v2510 = vsub.s32 %v2507, %v2509
    %v2511 = vrot.slane %v2495, %v2510
    %v2513 = vunpack.c.l.s4 1966171168
    %v2514 = vunpack.c.0.s8 %v2513
    %v2515 = vlaneseq
    %v2516 = vshrl.u32 %v2515, 7
    %v2517 = vsub.s32 %v2514, %v2516
    %v2518 = vrot.slane %v2496, %v2517
    %v2520 = vunpack.c.l.s4 1966171168
    %v2521 = vunpack.c.0.s8 %v2520
    %v2522 = vlaneseq
    %v2523 = vshrl.u32 %v2522, 7
    %v2524 = vsub.s32 %v2521, %v2523
    %v2525 = vrot.slane %v2497, %v2524
    %v2526 = vcombine.low %v2504, %v2511
    %v2527 = vcombine.low %v2518, %v2525
    %v2529 = vunpack.c.l.s4 1966171168
    %v2530 = vunpack.c.0.s8 %v2529
    %v2531 = vlaneseq
    %v2532 = vshrl.u32 %v2531, 7
    %v2533 = vsub.s32 %v2530, %v2532
    %v2534 = vrot.slane %v2526, %v2533
    %v2536 = vunpack.c.l.s4 1966171168
    %v2537 = vunpack.c.0.s8 %v2536
    %v2538 = vlaneseq
    %v2539 = vshrl.u32 %v2538, 7
    %v2540 = vsub.s32 %v2537, %v2539
    %v2541 = vrot.slane %v2527, %v2540
    %v2542 = vcombine.low %v2534, %v2541
    %v2543 = vcombine.low %v1816, %v1831
    %v2544 = vcombine.low %v1838, %v1839
    %v2545 = vcombine.low %v1840, %v1854
    %v2546 = vcombine.low %v1869, %v1876
    %v2548 = vunpack.c.l.s4 1966171168
    %v2549 = vunpack.c.0.s8 %v2548
    %v2550 = vlaneseq
    %v2551 = vshrl.u32 %v2550, 7
    %v2552 = vsub.s32 %v2549, %v2551
    %v2553 = vrot.slane %v2543, %v2552
    %v2555 = vunpack.c.l.s4 1966171168
    %v2556 = vunpack.c.0.s8 %v2555
    %v2557 = vlaneseq
    %v2558 = vshrl.u32 %v2557, 7
    %v2559 = vsub.s32 %v2556, %v2558
    %v2560 = vrot.slane %v2544, %v2559
    %v2562 = vunpack.c.l.s4 1966171168
    %v2563 = vunpack.c.0.s8 %v2562
    %v2564 = vlaneseq
    %v2565 = vshrl.u32 %v2564, 7
    %v2566 = vsub.s32 %v2563, %v2565
    %v2567 = vrot.slane %v2545, %v2566
    %v2569 = vunpack.c.l.s4 1966171168
    %v2570 = vunpack.c.0.s8 %v2569
    %v2571 = vlaneseq
    %v2572 = vshrl.u32 %v2571, 7
    %v2573 = vsub.s32 %v2570, %v2572
    %v2574 = vrot.slane %v2546, %v2573
    %v2575 = vcombine.low %v2553, %v2560
    %v2576 = vcombine.low %v2567, %v2574
    %v2578 = vunpack.c.l.s4 1966171168
    %v2579 = vunpack.c.0.s8 %v2578
    %v2580 = vlaneseq
    %v2581 = vshrl.u32 %v2580, 7
    %v2582 = vsub.s32 %v2579, %v2581
    %v2583 = vrot.slane %v2575, %v2582
    %v2585 = vunpack.c.l.s4 1966171168
    %v2586 = vunpack.c.0.s8 %v2585
    %v2587 = vlaneseq
    %v2588 = vshrl.u32 %v2587, 7
    %v2589 = vsub.s32 %v2586, %v2588
    %v2590 = vrot.slane %v2576, %v2589
    %v2591 = vcombine.low %v2583, %v2590
    %v2592 = vcombine.low %v1877, %v1878
    %v2593 = vcombine.low %v1892, %v1907
    %v2594 = vcombine.low %v1914, %v1915
    %v2595 = vcombine.low %v1916, %v1930
    %v2597 = vunpack.c.l.s4 1966171168
    %v2598 = vunpack.c.0.s8 %v2597
    %v2599 = vlaneseq
    %v2600 = vshrl.u32 %v2599, 7
    %v2601 = vsub.s32 %v2598, %v2600
    %v2602 = vrot.slane %v2592, %v2601
    %v2604 = vunpack.c.l.s4 1966171168
    %v2605 = vunpack.c.0.s8 %v2604
    %v2606 = vlaneseq
    %v2607 = vshrl.u32 %v2606, 7
    %v2608 = vsub.s32 %v2605, %v2607
    %v2609 = vrot.slane %v2593, %v2608
    %v2611 = vunpack.c.l.s4 1966171168
    %v2612 = vunpack.c.0.s8 %v2611
    %v2613 = vlaneseq
    %v2614 = vshrl.u32 %v2613, 7
    %v2615 = vsub.s32 %v2612, %v2614
    %v2616 = vrot.slane %v2594, %v2615
    %v2618 = vunpack.c.l.s4 1966171168
    %v2619 = vunpack.c.0.s8 %v2618
    %v2620 = vlaneseq
    %v2621 = vshrl.u32 %v2620, 7
    %v2622 = vsub.s32 %v2619, %v2621
    %v2623 = vrot.slane %v2595, %v2622
    %v2624 = vcombine.low %v2602, %v2609
    %v2625 = vcombine.low %v2616, %v2623
    %v2627 = vunpack.c.l.s4 1966171168
    %v2628 = vunpack.c.0.s8 %v2627
    %v2629 = vlaneseq
    %v2630 = vshrl.u32 %v2629, 7
    %v2631 = vsub.s32 %v2628, %v2630
    %v2632 = vrot.slane %v2624, %v2631
    %v2634 = vunpack.c.l.s4 1966171168
    %v2635 = vunpack.c.0.s8 %v2634
    %v2636 = vlaneseq
    %v2637 = vshrl.u32 %v2636, 7
    %v2638 = vsub.s32 %v2635, %v2637
    %v2639 = vrot.slane %v2625, %v2638
    %v2640 = vcombine.low %v2632, %v2639
    %v2641 = vcombine.low %v1945, %v1952
    %v2642 = vcombine.low %v1953, %v1954
    %v2643 = vcombine.low %v1968, %v1983
    %v2644 = vcombine.low %v1990, %v1991
    %v2646 = vunpack.c.l.s4 1966171168
    %v2647 = vunpack.c.0.s8 %v2646
    %v2648 = vlaneseq
    %v2649 = vshrl.u32 %v2648, 7
    %v2650 = vsub.s32 %v2647, %v2649
    %v2651 = vrot.slane %v2641, %v2650
    %v2653 = vunpack.c.l.s4 1966171168
    %v2654 = vunpack.c.0.s8 %v2653
    %v2655 = vlaneseq
    %v2656 = vshrl.u32 %v2655, 7
    %v2657 = vsub.s32 %v2654, %v2656
    %v2658 = vrot.slane %v2642, %v2657
    %v2660 = vunpack.c.l.s4 1966171168
    %v2661 = vunpack.c.0.s8 %v2660
    %v2662 = vlaneseq
    %v2663 = vshrl.u32 %v2662, 7
    %v2664 = vsub.s32 %v2661, %v2663
    %v2665 = vrot.slane %v2643, %v2664
    %v2667 = vunpack.c.l.s4 1966171168
    %v2668 = vunpack.c.0.s8 %v2667
    %v2669 = vlaneseq
    %v2670 = vshrl.u32 %v2669, 7
    %v2671 = vsub.s32 %v2668, %v2670
    %v2672 = vrot.slane %v2644, %v2671
    %v2673 = vcombine.low %v2651, %v2658
    %v2674 = vcombine.low %v2665, %v2672
    %v2676 = vunpack.c.l.s4 1966171168
    %v2677 = vunpack.c.0.s8 %v2676
    %v2678 = vlaneseq
    %v2679 = vshrl.u32 %v2678, 7
    %v2680 = vsub.s32 %v2677, %v2679
    %v2681 = vrot.slane %v2673, %v2680
    %v2683 = vunpack.c.l.s4 1966171168
    %v2684 = vunpack.c.0.s8 %v2683
    %v2685 = vlaneseq
    %v2686 = vshrl.u32 %v2685, 7
    %v2687 = vsub.s32 %v2684, %v2686
    %v2688 = vrot.slane %v2674, %v2687
    %v2689 = vcombine.low %v2681, %v2688
    %v2690 = vcombine.low %v1992, %v2006
    %v2691 = vcombine.low %v2021, %v2028
    %v2692 = vcombine.low %v2029, %v2030
    %v2693 = vcombine.low %v2044, %v2059
    %v2695 = vunpack.c.l.s4 1966171168
    %v2696 = vunpack.c.0.s8 %v2695
    %v2697 = vlaneseq
    %v2698 = vshrl.u32 %v2697, 7
    %v2699 = vsub.s32 %v2696, %v2698
    %v2700 = vrot.slane %v2690, %v2699
    %v2702 = vunpack.c.l.s4 1966171168
    %v2703 = vunpack.c.0.s8 %v2702
    %v2704 = vlaneseq
    %v2705 = vshrl.u32 %v2704, 7
    %v2706 = vsub.s32 %v2703, %v2705
    %v2707 = vrot.slane %v2691, %v2706
    %v2709 = vunpack.c.l.s4 1966171168
    %v2710 = vunpack.c.0.s8 %v2709
    %v2711 = vlaneseq
    %v2712 = vshrl.u32 %v2711, 7
    %v2713 = vsub.s32 %v2710, %v2712
    %v2714 = vrot.slane %v2692, %v2713
    %v2716 = vunpack.c.l.s4 1966171168
    %v2717 = vunpack.c.0.s8 %v2716
    %v2718 = vlaneseq
    %v2719 = vshrl.u32 %v2718, 7
    %v2720 = vsub.s32 %v2717, %v2719
    %v2721 = vrot.slane %v2693, %v2720
    %v2722 = vcombine.low %v2700, %v2707
    %v2723 = vcombine.low %v2714, %v2721
    %v2725 = vunpack.c.l.s4 1966171168
    %v2726 = vunpack.c.0.s8 %v2725
    %v2727 = vlaneseq
    %v2728 = vshrl.u32 %v2727, 7
    %v2729 = vsub.s32 %v2726, %v2728
    %v2730 = vrot.slane %v2722, %v2729
    %v2732 = vunpack.c.l.s4 1966171168
    %v2733 = vunpack.c.0.s8 %v2732
    %v2734 = vlaneseq
    %v2735 = vshrl.u32 %v2734, 7
    %v2736 = vsub.s32 %v2733, %v2735
    %v2737 = vrot.slane %v2723, %v2736
    %v2738 = vcombine.low %v2730, %v2737
    %v2739 = vcombine.low %v2066, %v2067
    %v2740 = vcombine.low %v2068, %v2082
    %v2741 = vcombine.low %v2097, %v2104
    %v2742 = vcombine.low %v2105, %v2106
    %v2744 = vunpack.c.l.s4 1966171168
    %v2745 = vunpack.c.0.s8 %v2744
    %v2746 = vlaneseq
    %v2747 = vshrl.u32 %v2746, 7
    %v2748 = vsub.s32 %v2745, %v2747
    %v2749 = vrot.slane %v2739, %v2748
    %v2751 = vunpack.c.l.s4 1966171168
    %v2752 = vunpack.c.0.s8 %v2751
    %v2753 = vlaneseq
    %v2754 = vshrl.u32 %v2753, 7
    %v2755 = vsub.s32 %v2752, %v2754
    %v2756 = vrot.slane %v2740, %v2755
    %v2758 = vunpack.c.l.s4 1966171168
    %v2759 = vunpack.c.0.s8 %v2758
    %v2760 = vlaneseq
    %v2761 = vshrl.u32 %v2760, 7
    %v2762 = vsub.s32 %v2759, %v2761
    %v2763 = vrot.slane %v2741, %v2762
    %v2765 = vunpack.c.l.s4 1966171168
    %v2766 = vunpack.c.0.s8 %v2765
    %v2767 = vlaneseq
    %v2768 = vshrl.u32 %v2767, 7
    %v2769 = vsub.s32 %v2766, %v2768
    %v2770 = vrot.slane %v2742, %v2769
    %v2771 = vcombine.low %v2749, %v2756
    %v2772 = vcombine.low %v2763, %v2770
    %v2774 = vunpack.c.l.s4 1966171168
    %v2775 = vunpack.c.0.s8 %v2774
    %v2776 = vlaneseq
    %v2777 = vshrl.u32 %v2776, 7
    %v2778 = vsub.s32 %v2775, %v2777
    %v2779 = vrot.slane %v2771, %v2778
    %v2781 = vunpack.c.l.s4 1966171168
    %v2782 = vunpack.c.0.s8 %v2781
    %v2783 = vlaneseq
    %v2784 = vshrl.u32 %v2783, 7
    %v2785 = vsub.s32 %v2782, %v2784
    %v2786 = vrot.slane %v2772, %v2785
    %v2787 = vcombine.low %v2779, %v2786
    %v2788 = vcombine.low %v2120, %v2135
    %v2789 = vcombine.low %v2142, %v2143
    %v2790 = vcombine.low %v2144, %v2158
    %v2791 = vcombine.low %v2173, %v2180
    %v2793 = vunpack.c.l.s4 1966171168
    %v2794 = vunpack.c.0.s8 %v2793
    %v2795 = vlaneseq
    %v2796 = vshrl.u32 %v2795, 7
    %v2797 = vsub.s32 %v2794, %v2796
    %v2798 = vrot.slane %v2788, %v2797
    %v2800 = vunpack.c.l.s4 1966171168
    %v2801 = vunpack.c.0.s8 %v2800
    %v2802 = vlaneseq
    %v2803 = vshrl.u32 %v2802, 7
    %v2804 = vsub.s32 %v2801, %v2803
    %v2805 = vrot.slane %v2789, %v2804
    %v2807 = vunpack.c.l.s4 1966171168
    %v2808 = vunpack.c.0.s8 %v2807
    %v2809 = vlaneseq
    %v2810 = vshrl.u32 %v2809, 7
    %v2811 = vsub.s32 %v2808, %v2810
    %v2812 = vrot.slane %v2790, %v2811
    %v2814 = vunpack.c.l.s4 1966171168
    %v2815 = vunpack.c.0.s8 %v2814
    %v2816 = vlaneseq
    %v2817 = vshrl.u32 %v2816, 7
    %v2818 = vsub.s32 %v2815, %v2817
    %v2819 = vrot.slane %v2791, %v2818
    %v2820 = vcombine.low %v2798, %v2805
    %v2821 = vcombine.low %v2812, %v2819
    %v2823 = vunpack.c.l.s4 1966171168
    %v2824 = vunpack.c.0.s8 %v2823
    %v2825 = vlaneseq
    %v2826 = vshrl.u32 %v2825, 7
    %v2827 = vsub.s32 %v2824, %v2826
    %v2828 = vrot.slane %v2820, %v2827
    %v2830 = vunpack.c.l.s4 1966171168
    %v2831 = vunpack.c.0.s8 %v2830
    %v2832 = vlaneseq
    %v2833 = vshrl.u32 %v2832, 7
    %v2834 = vsub.s32 %v2831, %v2833
    %v2835 = vrot.slane %v2821, %v2834
    %v2836 = vcombine.low %v2828, %v2835
    %v2837 = vcombine.low %v2181, %v2182
    %v2838 = vcombine.low %v2196, %v2211
    %v2839 = vcombine.low %v2218, %v2219
    %v2840 = vcombine.low %v2220, %v2234
    %v2842 = vunpack.c.l.s4 1966171168
    %v2843 = vunpack.c.0.s8 %v2842
    %v2844 = vlaneseq
    %v2845 = vshrl.u32 %v2844, 7
    %v2846 = vsub.s32 %v2843, %v2845
    %v2847 = vrot.slane %v2837, %v2846
    %v2849 = vunpack.c.l.s4 1966171168
    %v2850 = vunpack.c.0.s8 %v2849
    %v2851 = vlaneseq
    %v2852 = vshrl.u32 %v2851, 7
    %v2853 = vsub.s32 %v2850, %v2852
    %v2854 = vrot.slane %v2838, %v2853
    %v2856 = vunpack.c.l.s4 1966171168
    %v2857 = vunpack.c.0.s8 %v2856
    %v2858 = vlaneseq
    %v2859 = vshrl.u32 %v2858, 7
    %v2860 = vsub.s32 %v2857, %v2859
    %v2861 = vrot.slane %v2839, %v2860
    %v2863 = vunpack.c.l.s4 1966171168
    %v2864 = vunpack.c.0.s8 %v2863
    %v2865 = vlaneseq
    %v2866 = vshrl.u32 %v2865, 7
    %v2867 = vsub.s32 %v2864, %v2866
    %v2868 = vrot.slane %v2840, %v2867
    %v2869 = vcombine.low %v2847, %v2854
    %v2870 = vcombine.low %v2861, %v2868
    %v2872 = vunpack.c.l.s4 1966171168
    %v2873 = vunpack.c.0.s8 %v2872
    %v2874 = vlaneseq
    %v2875 = vshrl.u32 %v2874, 7
    %v2876 = vsub.s32 %v2873, %v2875
    %v2877 = vrot.slane %v2869, %v2876
    %v2879 = vunpack.c.l.s4 1966171168
    %v2880 = vunpack.c.0.s8 %v2879
    %v2881 = vlaneseq
    %v2882 = vshrl.u32 %v2881, 7
    %v2883 = vsub.s32 %v2880, %v2882
    %v2884 = vrot.slane %v2870, %v2883
    %v2885 = vcombine.low %v2877, %v2884
    %v2886 = vcombine.low %v2249, %v2256
    %v2887 = vcombine.low %v2257, %v2258
    %v2888 = vcombine.low %v2272, %v2287
    %v2889 = vcombine.low %v2294, %v2295
    %v2891 = vunpack.c.l.s4 1966171168
    %v2892 = vunpack.c.0.s8 %v2891
    %v2893 = vlaneseq
    %v2894 = vshrl.u32 %v2893, 7
    %v2895 = vsub.s32 %v2892, %v2894
    %v2896 = vrot.slane %v2886, %v2895
    %v2898 = vunpack.c.l.s4 1966171168
    %v2899 = vunpack.c.0.s8 %v2898
    %v2900 = vlaneseq
    %v2901 = vshrl.u32 %v2900, 7
    %v2902 = vsub.s32 %v2899, %v2901
    %v2903 = vrot.slane %v2887, %v2902
    %v2905 = vunpack.c.l.s4 1966171168
    %v2906 = vunpack.c.0.s8 %v2905
    %v2907 = vlaneseq
    %v2908 = vshrl.u32 %v2907, 7
    %v2909 = vsub.s32 %v2906, %v2908
    %v2910 = vrot.slane %v2888, %v2909
    %v2912 = vunpack.c.l.s4 1966171168
    %v2913 = vunpack.c.0.s8 %v2912
    %v2914 = vlaneseq
    %v2915 = vshrl.u32 %v2914, 7
    %v2916 = vsub.s32 %v2913, %v2915
    %v2917 = vrot.slane %v2889, %v2916
    %v2918 = vcombine.low %v2896, %v2903
    %v2919 = vcombine.low %v2910, %v2917
    %v2921 = vunpack.c.l.s4 1966171168
    %v2922 = vunpack.c.0.s8 %v2921
    %v2923 = vlaneseq
    %v2924 = vshrl.u32 %v2923, 7
    %v2925 = vsub.s32 %v2922, %v2924
    %v2926 = vrot.slane %v2918, %v2925
    %v2928 = vunpack.c.l.s4 1966171168
    %v2929 = vunpack.c.0.s8 %v2928
    %v2930 = vlaneseq
    %v2931 = vshrl.u32 %v2930, 7
    %v2932 = vsub.s32 %v2929, %v2931
    %v2933 = vrot.slane %v2919, %v2932
    %v2934 = vcombine.low %v2926, %v2933
    %v2935 = vcombine.low %v2296, %v2310
    %v2936 = vcombine.low %v2325, %v2332
    %v2937 = vcombine.low %v2333, %v2334
    %v2938 = vcombine.low %v2348, %v2363
    %v2940 = vunpack.c.l.s4 1966171168
    %v2941 = vunpack.c.0.s8 %v2940
    %v2942 = vlaneseq
    %v2943 = vshrl.u32 %v2942, 7
    %v2944 = vsub.s32 %v2941, %v2943
    %v2945 = vrot.slane %v2935, %v2944
    %v2947 = vunpack.c.l.s4 1966171168
    %v2948 = vunpack.c.0.s8 %v2947
    %v2949 = vlaneseq
    %v2950 = vshrl.u32 %v2949, 7
    %v2951 = vsub.s32 %v2948, %v2950
    %v2952 = vrot.slane %v2936, %v2951
    %v2954 = vunpack.c.l.s4 1966171168
    %v2955 = vunpack.c.0.s8 %v2954
    %v2956 = vlaneseq
    %v2957 = vshrl.u32 %v2956, 7
    %v2958 = vsub.s32 %v2955, %v2957
    %v2959 = vrot.slane %v2937, %v2958
    %v2961 = vunpack.c.l.s4 1966171168
    %v2962 = vunpack.c.0.s8 %v2961
    %v2963 = vlaneseq
    %v2964 = vshrl.u32 %v2963, 7
    %v2965 = vsub.s32 %v2962, %v2964
    %v2966 = vrot.slane %v2938, %v2965
    %v2967 = vcombine.low %v2945, %v2952
    %v2968 = vcombine.low %v2959, %v2966
    %v2970 = vunpack.c.l.s4 1966171168
    %v2971 = vunpack.c.0.s8 %v2970
    %v2972 = vlaneseq
    %v2973 = vshrl.u32 %v2972, 7
    %v2974 = vsub.s32 %v2971, %v2973
    %v2975 = vrot.slane %v2967, %v2974
    %v2977 = vunpack.c.l.s4 1966171168
    %v2978 = vunpack.c.0.s8 %v2977
    %v2979 = vlaneseq
    %v2980 = vshrl.u32 %v2979, 7
    %v2981 = vsub.s32 %v2978, %v2980
    %v2982 = vrot.slane %v2968, %v2981
    %v2983 = vcombine.low %v2975, %v2982
    %v2984 = vcombine.low %v2370, %v2371
    %v2985 = vcombine.low %v2372, %v2386
    %v2987 = vunpack.c.l.s4 1966171168
    %v2988 = vunpack.c.0.s8 %v2987
    %v2989 = vlaneseq
    %v2990 = vshrl.u32 %v2989, 7
    %v2991 = vsub.s32 %v2988, %v2990
    %v2992 = vrot.slane %v2984, %v2991
    %v2994 = vunpack.c.l.s4 1966171168
    %v2995 = vunpack.c.0.s8 %v2994
    %v2996 = vlaneseq
    %v2997 = vshrl.u32 %v2996, 7
    %v2998 = vsub.s32 %v2995, %v2997
    %v2999 = vrot.slane %v2985, %v2998
    %v3000 = vcombine.low %v2992, %v2999
    %v3002 = vunpack.c.l.s4 1966171168
    %v3003 = vunpack.c.0.s8 %v3002
    %v3004 = vlaneseq
    %v3005 = vshrl.u32 %v3004, 7
    %v3006 = vsub.s32 %v3003, %v3005
    %v3007 = vrot.slane %v3000, %v3006
    %v3010 = vunpack.c.l.b16 %v2387
    %v3011 = vunpack.c.l.b16 %v2388
    %v3012 = vpack.c.b16 %v3011, %v3010
    %vm3014 = vcmask 130048
    %v3016 = vsel %vm3014, %v2444, 0
    %v3019 = vsel %vm3014, %v2493, 0
    %v3022 = vsel %vm3014, %v2542, 0
    %v3025 = vsel %vm3014, %v2591, 0
    %v3028 = vsel %vm3014, %v2640, 0
    %v3031 = vsel %vm3014, %v2689, 0
    %v3034 = vsel %vm3014, %v2738, 0
    %v3037 = vsel %vm3014, %v2787, 0
    %v3040 = vsel %vm3014, %v2836, 0
    %v3043 = vsel %vm3014, %v2885, 0
    %v3046 = vsel %vm3014, %v2934, 0
    %v3049 = vsel %vm3014, %v2983, 0
    %v3052 = vsel %vm3014, %v3007, 0
    %3054 = vmatprep.subr.bf16.mxu0 0
    %3055 = vmatpush1.bf16.msra.mxu0 %v3012
    %3056 = vmatprep.subr.bf16.mxu0 0
    %3057 = vmatpush1.bf16.msra.mxu0 0
    %3058 = vmatprep.subr.bf16.mxu0 0
    %3059 = vmatpush1.bf16.msra.mxu0 0
    %3060 = vmatprep.subr.bf16.mxu0 0
    %3061 = vmatpush1.bf16.msra.mxu0 0
    %3062 = vmatprep.subr.bf16.mxu0 0
    %3063 = vmatpush1.bf16.msra.mxu0 0
    %3064 = vmatprep.subr.bf16.mxu0 0
    %3065 = vmatpush1.bf16.msra.mxu0 0
    %3066 = vmatprep.subr.bf16.mxu0 0
    %3067 = vmatpush1.bf16.msra.mxu0 0
    %3068 = vmatprep.subr.bf16.mxu0 0
    %3069 = vmatpush1.bf16.msra.mxu0 0
    %3070 = vmatprep.subr.bf16.mxu0 0
    %3071 = vmatpush1.bf16.msra.mxu0 0
    %3072 = vmatprep.subr.bf16.mxu0 0
    %3073 = vmatpush1.bf16.msra.mxu0 0
    %3074 = vmatprep.subr.bf16.mxu0 0
    %3075 = vmatpush1.bf16.msra.mxu0 0
    %3076 = vmatprep.subr.bf16.mxu0 0
    %3077 = vmatpush1.bf16.msra.mxu0 0
    %3078 = vmatprep.subr.bf16.mxu0 0
    %3079 = vmatpush1.bf16.msra.mxu0 0
    %3080 = vmatprep.subr.bf16.mxu0 0
    %3081 = vmatpush1.bf16.msra.mxu0 0
    %3082 = vmatprep.subr.bf16.mxu0 0
    %3083 = vmatpush1.bf16.msra.mxu0 0
    %3084 = vmatprep.subr.bf16.mxu0 0
    %3085 = vmatpush1.bf16.msra.mxu0 0
    %3086 = vmatprep.mubr.bf16.mxu0 0
    %3087 = vmatmul.mubr.bf16.gmra.mrb[0].mxu0 %v3016
    %v3088 = vpop.f32.mrb[0].mxu0
    %v3089 = vadd.f32 %v2394, %v3088
    %v3090 = vpop.f32.mrb[0].mxu0
    %v3091 = vpop.f32.mrb[0].mxu0
    %v3092 = vadd.f32 %v2394, %v3091
    %v3093 = vpop.f32.mrb[0].mxu0
    %3094 = vmatprep.mubr.bf16.mxu0 0
    %3095 = vmatmul.mubr.bf16.gmra.mrb[0].mxu0 %v3019
    %v3096 = vpop.f32.mrb[0].mxu0
    %v3097 = vadd.f32 %v2394, %v3096
    %v3098 = vpop.f32.mrb[0].mxu0
    %v3099 = vpop.f32.mrb[0].mxu0
    %v3100 = vadd.f32 %v2394, %v3099
    %v3101 = vpop.f32.mrb[0].mxu0
    %3102 = vmatprep.mubr.bf16.mxu0 0
    %3103 = vmatmul.mubr.bf16.gmra.mrb[0].mxu0 %v3022
    %v3104 = vpop.f32.mrb[0].mxu0
    %v3105 = vadd.f32 %v2394, %v3104
    %v3106 = vpop.f32.mrb[0].mxu0
    %v3107 = vpop.f32.mrb[0].mxu0
    %v3108 = vadd.f32 %v2394, %v3107
    %v3109 = vpop.f32.mrb[0].mxu0
    %3110 = vmatprep.mubr.bf16.mxu0 0
    %3111 = vmatmul.mubr.bf16.gmra.mrb[0].mxu0 %v3025
    %v3112 = vpop.f32.mrb[0].mxu0
    %v3113 = vadd.f32 %v2394, %v3112
    %v3114 = vpop.f32.mrb[0].mxu0
    %v3115 = vpop.f32.mrb[0].mxu0
    %v3116 = vadd.f32 %v2394, %v3115
    %v3117 = vpop.f32.mrb[0].mxu0
    %3118 = vmatprep.mubr.bf16.mxu0 0
    %3119 = vmatmul.mubr.bf16.gmra.mrb[0].mxu0 %v3028
    %v3120 = vpop.f32.mrb[0].mxu0
    %v3121 = vadd.f32 %v2394, %v3120
    %v3122 = vpop.f32.mrb[0].mxu0
    %v3123 = vpop.f32.mrb[0].mxu0
    %v3124 = vadd.f32 %v2394, %v3123
    %v3125 = vpop.f32.mrb[0].mxu0
    %3126 = vmatprep.mubr.bf16.mxu0 0
    %3127 = vmatmul.mubr.bf16.gmra.mrb[0].mxu0 %v3031
    %v3128 = vpop.f32.mrb[0].mxu0
    %v3129 = vadd.f32 %v2394, %v3128
    %v3130 = vpop.f32.mrb[0].mxu0
    %v3131 = vpop.f32.mrb[0].mxu0
    %v3132 = vadd.f32 %v2394, %v3131
    %v3133 = vpop.f32.mrb[0].mxu0
    %3134 = vmatprep.mubr.bf16.mxu0 0
    %3135 = vmatmul.mubr.bf16.gmra.mrb[0].mxu0 %v3034
    %v3136 = vpop.f32.mrb[0].mxu0
    %v3137 = vadd.f32 %v2394, %v3136
    %v3138 = vpop.f32.mrb[0].mxu0
    %v3139 = vpop.f32.mrb[0].mxu0
    %v3140 = vadd.f32 %v2394, %v3139
    %v3141 = vpop.f32.mrb[0].mxu0
    %3142 = vmatprep.mubr.bf16.mxu0 0
    %3143 = vmatmul.mubr.bf16.gmra.mrb[0].mxu0 %v3037
    %v3144 = vpop.f32.mrb[0].mxu0
    %v3145 = vadd.f32 %v2394, %v3144
    %v3146 = vpop.f32.mrb[0].mxu0
    %v3147 = vpop.f32.mrb[0].mxu0
    %v3148 = vadd.f32 %v2394, %v3147
    %v3149 = vpop.f32.mrb[0].mxu0
    %3150 = vmatprep.mubr.bf16.mxu0 0
    %3151 = vmatmul.mubr.bf16.gmra.mrb[0].mxu0 %v3040
    %v3152 = vpop.f32.mrb[0].mxu0
    %v3153 = vadd.f32 %v2394, %v3152
    %v3154 = vpop.f32.mrb[0].mxu0
    %v3155 = vpop.f32.mrb[0].mxu0
    %v3156 = vadd.f32 %v2394, %v3155
    %v3157 = vpop.f32.mrb[0].mxu0
    %3158 = vmatprep.mubr.bf16.mxu0 0
    %3159 = vmatmul.mubr.bf16.gmra.mrb[0].mxu0 %v3043
    %v3160 = vpop.f32.mrb[0].mxu0
    %v3161 = vadd.f32 %v2394, %v3160
    %v3162 = vpop.f32.mrb[0].mxu0
    %v3163 = vpop.f32.mrb[0].mxu0
    %v3164 = vadd.f32 %v2394, %v3163
    %v3165 = vpop.f32.mrb[0].mxu0
    %3166 = vmatprep.mubr.bf16.mxu0 0
    %3167 = vmatmul.mubr.bf16.gmra.mrb[0].mxu0 %v3046
    %v3168 = vpop.f32.mrb[0].mxu0
    %v3169 = vadd.f32 %v2394, %v3168
    %v3170 = vpop.f32.mrb[0].mxu0
    %v3171 = vpop.f32.mrb[0].mxu0
    %v3172 = vadd.f32 %v2394, %v3171
    %v3173 = vpop.f32.mrb[0].mxu0
    %3174 = vmatprep.mubr.bf16.mxu0 0
    %3175 = vmatmul.mubr.bf16.gmra.mrb[0].mxu0 %v3049
    %v3176 = vpop.f32.mrb[0].mxu0
    %v3177 = vadd.f32 %v2394, %v3176
    %v3178 = vpop.f32.mrb[0].mxu0
    %v3179 = vpop.f32.mrb[0].mxu0
    %v3180 = vadd.f32 %v2394, %v3179
    %v3181 = vpop.f32.mrb[0].mxu0
    %3182 = vmatprep.mubr.bf16.mxu0 0
    %3183 = vmatmul.mubr.bf16.gmra.mrb[0].mxu0 %v3052
    %v3184 = vpop.f32.mrb[0].mxu0
    %v3185 = vadd.f32 %v2394, %v3184
    %v3186 = vpop.f32.mrb[0].mxu0
    %v3187 = vpop.f32.mrb[0].mxu0
    %v3188 = vpop.f32.mrb[0].mxu0
    %3189 = vdwg.mxu0
    %v3190 = vmax.f32 %v3089, 0.0
    %v3191 = vmax.f32 %v3092, 0.0
    %v3192 = vmax.f32 %v3097, 0.0
    %v3193 = vmax.f32 %v3100, 0.0
    %v3194 = vmax.f32 %v3105, 0.0
    %v3195 = vmax.f32 %v3108, 0.0
    %v3196 = vmax.f32 %v3113, 0.0
    %v3197 = vmax.f32 %v3116, 0.0
    %v3198 = vmax.f32 %v3121, 0.0
    %v3199 = vmax.f32 %v3124, 0.0
    %v3200 = vmax.f32 %v3129, 0.0
    %v3201 = vmax.f32 %v3132, 0.0
    %v3202 = vmax.f32 %v3137, 0.0
    %v3203 = vmax.f32 %v3140, 0.0
    %v3204 = vmax.f32 %v3145, 0.0
    %v3205 = vmax.f32 %v3148, 0.0
    %v3206 = vmax.f32 %v3153, 0.0
    %v3207 = vmax.f32 %v3156, 0.0
    %v3208 = vmax.f32 %v3161, 0.0
    %v3209 = vmax.f32 %v3164, 0.0
    %v3210 = vmax.f32 %v3169, 0.0
    %v3211 = vmax.f32 %v3172, 0.0
    %v3212 = vmax.f32 %v3177, 0.0
    %v3213 = vmax.f32 %v3180, 0.0
    %v3214 = vmax.f32 %v3185, 0.0
    %v3215 = vpack.c.bf16 %v3191, %v3190
    %v3216 = vpack.c.bf16 %v3193, %v3192
    %v3217 = vpack.c.bf16 %v3195, %v3194
    %v3218 = vpack.c.bf16 %v3197, %v3196
    %v3219 = vpack.c.bf16 %v3199, %v3198
    %v3220 = vpack.c.bf16 %v3201, %v3200
    %v3221 = vpack.c.bf16 %v3203, %v3202
    %v3222 = vpack.c.bf16 %v3205, %v3204
    %v3223 = vpack.c.bf16 %v3207, %v3206
    %v3224 = vpack.c.bf16 %v3209, %v3208
    %v3225 = vpack.c.bf16 %v3211, %v3210
    %v3226 = vpack.c.bf16 %v3213, %v3212
    %v3227 = vpack.c.bf16 %v3214, %v3214
    %v3241 = vunpack.c.l.b16 %v3215
    %v3242 = vunpack.c.h.b16 %v3215
    %v3243 = vunpack.c.l.b16 %v3216
    %v3244 = vunpack.c.h.b16 %v3216
    %v3245 = vunpack.c.l.b16 %v3217
    %v3246 = vunpack.c.h.b16 %v3217
    %v3247 = vunpack.c.l.b16 %v3218
    %v3248 = vunpack.c.h.b16 %v3218
    %v3249 = vunpack.c.l.b16 %v3219
    %v3250 = vunpack.c.h.b16 %v3219
    %v3251 = vunpack.c.l.b16 %v3220
    %v3252 = vunpack.c.h.b16 %v3220
    %v3253 = vunpack.c.l.b16 %v3221
    %v3254 = vunpack.c.h.b16 %v3221
    %v3255 = vunpack.c.l.b16 %v3222
    %v3256 = vunpack.c.h.b16 %v3222
    %v3257 = vunpack.c.l.b16 %v3223
    %v3258 = vunpack.c.h.b16 %v3223
    %v3259 = vunpack.c.l.b16 %v3224
    %v3260 = vunpack.c.h.b16 %v3224
    %v3261 = vunpack.c.l.b16 %v3225
    %v3262 = vunpack.c.h.b16 %v3225
    %v3263 = vunpack.c.l.b16 %v3226
    %v3264 = vunpack.c.h.b16 %v3226
    %v3265 = vunpack.c.l.b16 %v3227
    %v3266 = vpack.c.b16 %v3241, %v3241
    %v3267 = vpack.c.b16 %v3242, %v3242
    %v3268 = vpack.c.b16 %v3243, %v3243
    %v3269 = vpack.c.b16 %v3244, %v3244
    %v3270 = vpack.c.b16 %v3245, %v3245
    %v3271 = vpack.c.b16 %v3246, %v3246
    %v3272 = vpack.c.b16 %v3247, %v3247
    %v3273 = vpack.c.b16 %v3248, %v3248
    %v3274 = vpack.c.b16 %v3249, %v3249
    %v3275 = vpack.c.b16 %v3250, %v3250
    %v3276 = vpack.c.b16 %v3251, %v3251
    %v3277 = vpack.c.b16 %v3252, %v3252
    %v3278 = vpack.c.b16 %v3253, %v3253
    %v3279 = vpack.c.b16 %v3254, %v3254
    %v3280 = vpack.c.b16 %v3255, %v3255
    %v3281 = vpack.c.b16 %v3256, %v3256
    %v3282 = vpack.c.b16 %v3257, %v3257
    %v3283 = vpack.c.b16 %v3258, %v3258
    %v3284 = vpack.c.b16 %v3259, %v3259
    %v3285 = vpack.c.b16 %v3260, %v3260
    %v3286 = vpack.c.b16 %v3261, %v3261
    %v3287 = vpack.c.b16 %v3262, %v3262
    %v3288 = vpack.c.b16 %v3263, %v3263
    %v3289 = vpack.c.b16 %v3264, %v3264
    %v3290 = vpack.c.b16 %v3265, %v3265
    %3316 = vst [vmem:[#allocation9] sm:$0xf] %v3266
    %3317 = vst [vmem:[#allocation9 + $0x4] sm:$0xf] %v3267
    %3318 = vst [vmem:[#allocation9 + $0x8] sm:$0xf] %v3268
    %3319 = vst [vmem:[#allocation9 + $0xc] sm:$0xf] %v3269
    %3320 = vst [vmem:[#allocation9 + $0x10] sm:$0xf] %v3270
    %3321 = vst [vmem:[#allocation9 + $0x14] sm:$0xf] %v3271
    %3322 = vst [vmem:[#allocation9 + $0x18] sm:$0xf] %v3272
    %3323 = vst [vmem:[#allocation9 + $0x1c] sm:$0xf] %v3273
    %3324 = vst [vmem:[#allocation9 + $0x20] sm:$0xf] %v3274
    %3325 = vst [vmem:[#allocation9 + $0x24] sm:$0xf] %v3275
    %3326 = vst [vmem:[#allocation9 + $0x28] sm:$0xf] %v3276
    %3327 = vst [vmem:[#allocation9 + $0x2c] sm:$0xf] %v3277
    %3328 = vst [vmem:[#allocation9 + $0x30] sm:$0xf] %v3278
    %3329 = vst [vmem:[#allocation9 + $0x34] sm:$0xf] %v3279
    %3330 = vst [vmem:[#allocation9 + $0x38] sm:$0xf] %v3280
    %3331 = vst [vmem:[#allocation9 + $0x3c] sm:$0xf] %v3281
    %3332 = vst [vmem:[#allocation9 + $0x40] sm:$0xf] %v3282
    %3333 = vst [vmem:[#allocation9 + $0x44] sm:$0xf] %v3283
    %3334 = vst [vmem:[#allocation9 + $0x48] sm:$0xf] %v3284
    %3335 = vst [vmem:[#allocation9 + $0x4c] sm:$0xf] %v3285
    %3336 = vst [vmem:[#allocation9 + $0x50] sm:$0xf] %v3286
    %3337 = vst [vmem:[#allocation9 + $0x54] sm:$0xf] %v3287
    %3338 = vst [vmem:[#allocation9 + $0x58] sm:$0xf] %v3288
    %3339 = vst [vmem:[#allocation9 + $0x5c] sm:$0xf] %v3289
    %3340 = vst [vmem:[#allocation9 + $0x60] sm:$0xf] %v3290
    // Predicated region
    $region26: #{_lambda_.7} parent=1 // pred_check
      _
    $region27: #{_lambda_.7} parent=1 // pred_check_branch
      %3342 = sbr.rel (0) target = $region29
    $region28: #{_lambda_.7} parent=1 // pred_region
      %s3344 = ssub.s32 1600, 1600
      %3345 = vsyncadd [#allocation5], %s3344
      %s3346 = sshll.u32 [#allocation9], 4
      %s3347 = int_to_ptr.vmem [resolvable:$true] %s3346
      %3352 = dma.vmem_to_hbm [thread:$0]  %s3347, 1600, %s3, [#allocation5], 64, 64, 4
    $region29: #{_lambda_.7} parent=1 // pred_fallthru
      _
    // Predicated region
    $region30: #{_lambda_.7} parent=1 // pred_check
      _
    $region31: #{_lambda_.7} parent=1 // pred_check_branch
      %3354 = sbr.rel (0) target = $region33
    $region32: #{_lambda_.7} parent=1 // pred_region
      %3355 = dma.done [#allocation5], 1600
    $region33: #{_lambda_.7} parent=1 // pred_fallthru
      _
    %3356 = vsyncpa [#allocation4], 1
    %3357 = vsyncpa [#allocation7], 1
    %3358 = vsyncpa [#allocation5], 1

</llo_original>
